<compile_context>
chip_gen: v5e
topology: v5e:2x2
jax: 0.10.0
libtpu: 0.0.40
codegen_flags: <defaults>
</compile_context>

<pallas_src>
import math

import jax
import jax.numpy as jnp
from jax.experimental import pallas as pl
from jax.experimental.pallas import tpu as pltpu

_LANES = 128
# Below this element count, XLA's fused |a-b| beats the pallas_call fixed cost.
_PALLAS_MIN_ELEMS = 512 * 1024


def _chip_kind() -> str:
    try:
        return jax.devices()[0].device_kind.lower()
    except Exception:
        return ""


_KIND = _chip_kind()
# v6e / v7x: 32 MiB default scoped VMEM -> 4 MiB tiles (2 in + 1 out, double
# buffered => 24 MiB live).  v5e / older / unknown: 16 MiB default scoped VMEM
# -> keep 2 MiB tiles (12 MiB live).  No vmem_limit_bytes override needed.
_IS_V6_OR_V7 = ("v6" in _KIND) or ("v7" in _KIND) or ("7x" in _KIND)
_TARGET_TILE_BYTES = (4 if _IS_V6_OR_V7 else 2) * 1024 * 1024
# v7x has 2 TensorCores with per-TC HBM bandwidth; CORE_PARALLEL shards the grid
# across both.  Only requested when a v7 part is positively detected (best-effort,
# with a fallback to "parallel" if it fails to lower).
_TRY_CORE_PARALLEL = ("v7" in _KIND) or ("7x" in _KIND)


def _mae_kernel(pred_ref, target_ref, out_ref):
    # Elementwise L1 (no reduction): |pred - target|
    out_ref[...] = jnp.abs(pred_ref[...] - target_ref[...])


def _row_alignment(dtype) -> int:
    # Sublane packing: 8 rows per (8,128) tile for 4-byte dtypes, 16 for bf16,
    # 32 for int8/fp8 — keeps loads/stores unmasked for packed dtypes.
    itemsize = jnp.dtype(dtype).itemsize
    return max(8, 32 // max(itemsize, 1))


def _mae_2d(pred2d: jax.Array, target2d: jax.Array) -> jax.Array:
    rows, cols = pred2d.shape
    dtype = pred2d.dtype
    itemsize = jnp.dtype(dtype).itemsize
    align = _row_alignment(dtype)

    # VMEM footprint of a (tile_rows, cols) block pads the lane dim to 128.
    vmem_cols = pl.cdiv(cols, _LANES) * _LANES
    tile_rows = max(align, _TARGET_TILE_BYTES // (vmem_cols * itemsize))
    tile_rows = max(align, (tile_rows // align) * align)
    if tile_rows >= rows:
        tile_rows = rows  # a single block covering the full row dim is always legal

    # Ragged last tile is fine: Pallas pads reads and masks out-of-bounds writes.
    grid = (pl.cdiv(rows, tile_rows),)
    spec = pl.BlockSpec((tile_rows, cols), lambda i: (i, 0))

    total = rows * cols
    cost = pl.CostEstimate(
        flops=2 * total,                       # sub + abs per element
        transcendentals=0,
        bytes_accessed=3 * total * itemsize,   # 2 streamed reads + 1 write
    )

    def _run(semantics):
        return pl.pallas_call(
            _mae_kernel,
            out_shape=jax.ShapeDtypeStruct((rows, cols), dtype),
            grid_spec=pltpu.PrefetchScalarGridSpec(
                num_scalar_prefetch=0,
                grid=grid,
                in_specs=[spec, spec],
                out_specs=spec,
            ),
            compiler_params=pltpu.CompilerParams(
                dimension_semantics=(semantics,),
            ),
            cost_estimate=cost,
        )(pred2d, target2d)

    if _TRY_CORE_PARALLEL:
        try:
            # Shard the (independent) grid steps across both v7x TensorCores.
            return _run(pltpu.CORE_PARALLEL)
        except Exception:
            pass  # best-effort: fall back to single-core-safe semantics
    return _run("parallel")


def mae_loss(pred: jax.Array, target: jax.Array, natoms: jax.Array | None = None) -> jax.Array:
    """Equivalent of MAELoss.forward: elementwise |pred - target|, same shape/dtype
    as pred.  `natoms` is accepted but unused (as in the PyTorch module)."""
    assert pred.shape == target.shape, "pred and target must have the same shape"
    total = math.prod(pred.shape) if pred.shape else 1

    # Tiny inputs: pallas_call launch/DMA-setup cost dwarfs the work.
    if pred.ndim == 0 or total < _PALLAS_MIN_ELEMS:
        return jnp.abs(pred - target)

    # Preferred path: lane-dense flat 2D view. No padding, no extra HBM passes —
    # reshape of a contiguous array is a free bitcast in XLA.
    for width in (1024, 512, 256, _LANES):
        if total % width == 0:
            rows = total // width
            out = _mae_2d(pred.reshape(rows, width), target.reshape(rows, width))
            return out.reshape(pred.shape)

    # total not a multiple of 128 (e.g. (N, 3) with awkward N): any Pallas block
    # would be lane-sparse (masked vst.msk stores, ~40x wasted HBM/VMEM traffic).
    # XLA's fused elementwise treats the buffer as flat and stays at HBM roofline,
    # so it is strictly faster here.
    return jnp.abs(pred - target)


if __name__ == "__main__":
    key = jax.random.PRNGKey(0)
    k1, k2, k3, k4 = jax.random.split(key, 4)

    natoms = jnp.array([12, 8], dtype=jnp.int32)  # unused, matching PyTorch

    # 1) Small shape consistent with the module (per-atom forces (num_atoms, 3));
    #    exercises the tiny-input fallback.
    pred_s = jax.random.normal(k1, (20, 3), dtype=jnp.float32)
    target_s = jax.random.normal(k2, (20, 3), dtype=jnp.float32)
    out_s = mae_loss(pred_s, target_s, natoms)
    jax.block_until_ready(out_s)
    assert out_s.shape == pred_s.shape and out_s.dtype == pred_s.dtype
    assert jnp.array_equal(out_s, jnp.abs(pred_s - target_s)), "small-path mismatch"

    # 2) Larger per-atom tensor exercising the Pallas path (lane-dense flat view,
    #    generation-aware tile size, parallel/core-parallel grid).
    pred_l = jax.random.normal(k3, (8192, 128), dtype=jnp.float32)
    target_l = jax.random.normal(k4, (8192, 128), dtype=jnp.float32)
    out_l = mae_loss(pred_l, target_l, natoms)
    jax.block_until_ready(out_l)
    assert out_l.shape == pred_l.shape and out_l.dtype == pred_l.dtype
    assert jnp.array_equal(out_l, jnp.abs(pred_l - target_l)), "pallas-path mismatch"

    # 3) bf16 exercises the dtype-aware sublane alignment (16-row packing).
    pred_b = pred_l.astype(jnp.bfloat16)
    target_b = target_l.astype(jnp.bfloat16)
    out_b = mae_loss(pred_b, target_b, natoms)
    jax.block_until_ready(out_b)
    assert out_b.dtype == jnp.bfloat16
    assert jnp.array_equal(out_b, jnp.abs(pred_b - target_b)), "bf16-path mismatch"

    # 4) Large ragged shape (total % 128 != 0): must take the XLA fallback and
    #    stay exact.
    pred_r = jax.random.normal(k1, (300001, 3), dtype=jnp.float32)
    target_r = jax.random.normal(k2, (300001, 3), dtype=jnp.float32)
    out_r = mae_loss(pred_r, target_r, natoms)
    jax.block_until_ready(out_r)
    assert jnp.array_equal(out_r, jnp.abs(pred_r - target_r)), "ragged-path mismatch"

    print("KERNEL_OK")
</pallas_src>

<mosaic_0001>
module attributes {stable_mosaic.version = 11 : i64} {
  func.func @_mae_kernel(%arg0: i32, %arg1: memref<512x1024xf32, #tpu.memory_space<vmem>>, %arg2: memref<512x1024xf32, #tpu.memory_space<vmem>>, %arg3: memref<512x1024xf32, #tpu.memory_space<vmem>>) attributes {dimension_semantics = [#tpu.dimension_semantics<parallel>], iteration_bounds = array<i64: 2>, scalar_prefetch = 0 : i64, scratch_operands = 0 : i64, tpu.core_type = #tpu.core_type<tc>, window_params = [{transform_indices = @transform_0, window_bounds = array<i64: 512, 1024>}, {transform_indices = @transform_1, window_bounds = array<i64: 512, 1024>}, {transform_indices = @transform_2, window_bounds = array<i64: 512, 1024>}]} {
    %c0 = arith.constant 0 : index
    %c0_0 = arith.constant 0 : index
    %0 = vector.load %arg1[%c0, %c0_0] : memref<512x1024xf32, #tpu.memory_space<vmem>>, vector<512x1024xf32>
    %c0_1 = arith.constant 0 : index
    %c0_2 = arith.constant 0 : index
    %1 = vector.load %arg2[%c0_1, %c0_2] : memref<512x1024xf32, #tpu.memory_space<vmem>>, vector<512x1024xf32>
    %2 = arith.subf %0, %1 : vector<512x1024xf32>
    %3 = math.absf %2 : vector<512x1024xf32>
    %c0_3 = arith.constant 0 : index
    %c0_4 = arith.constant 0 : index
    %4 = vector.load %arg3[%c0_3, %c0_4] : memref<512x1024xf32, #tpu.memory_space<vmem>>, vector<512x1024xf32>
    tpu.vector_store %arg3[%c0_3, %c0_4], %3 {strides = array<i32>} : memref<512x1024xf32, #tpu.memory_space<vmem>>, vector<512x1024xf32>,
    return
  }
  func.func @transform_0(%arg0: i32) -> (i32, i32) {
    %c0_i32 = arith.constant 0 : i32
    %c0_i32_0 = arith.constant 0 : i32
    return %arg0, %c0_i32 : i32, i32
  }
  func.func @transform_1(%arg0: i32) -> (i32, i32) {
    %c0_i32 = arith.constant 0 : i32
    %c0_i32_0 = arith.constant 0 : i32
    return %arg0, %c0_i32 : i32, i32
  }
  func.func @transform_2(%arg0: i32) -> (i32, i32) {
    %c0_i32 = arith.constant 0 : i32
    %c0_i32_0 = arith.constant 0 : i32
    return %arg0, %c0_i32 : i32, i32
  }
}

</mosaic_0001>

<llo_original>
// kernel: tpu_custom_call.1
$region0: #{tpu_custom_call.1}
  #allocation0 [shape = 'u32[]', space=smem, size = 0x4, offset = 0x4, fixed_abs, tag = 'smem constant byte address 0x4 - core index']
  #allocation1 [shape = 'u32[72,128]{1,0:T(1,128)}', space=vmem, size = 0x9000, scoped, tag = 'internal scratch']
  %s0 = inlined_call_operand.hbm [shape: f32[1024,1024], index: 0, kind: input, shape index: {}]
  %s1 = inlined_call_operand.hbm [shape: f32[1024,1024], index: 1, kind: input, shape index: {}]
  %s2 = inlined_call_operand.hbm [shape: f32[1024,1024], index: 2, kind: output, shape index: {}]
  %s3 = sld [smem:[#allocation0]]
  $region49: #{tpu_custom_call.1} parent=0
    _
  %s5 = ssub.s32 1, %s3
  %s6 = scalar_select 0, %s5, %s3
  $region1: #{tpu_custom_call.1} parent=0
    #allocation2 [shape = 'u8[4194304]{0}', space=vmem, size = 0x400000, scoped, tag = 'input window, operand 0']
    #allocation3 [shape = 's32[2]{0}', space=sflag, size = 0x8, scoped, tag = 'scoped memory for tpu_custom_call.1']
    #allocation4 [shape = 's32[2]{0}', space=sflag, size = 0x8, scoped, tag = 'scoped memory for tpu_custom_call.1']
    #allocation5 [shape = 'u8[4194304]{0}', space=vmem, size = 0x400000, scoped, tag = 'input window, operand 1']
    #allocation6 [shape = 's32[2]{0}', space=sflag, size = 0x8, scoped, tag = 'scoped memory for tpu_custom_call.1']
    #allocation7 [shape = 'u8[4194304]{0}', space=vmem, size = 0x400000, scoped, tag = 'output window, operand 0']
    %7 = vsyncpa [#allocation3], 0
    %s8 = scalar_lea.sflag [#allocation3], 1
    %9 = vsyncpa %s8, 0
    %10 = vsyncpa [#allocation6], 0
    %s11 = scalar_lea.sflag [#allocation6], 1
    %12 = vsyncpa %s11, 0
    %13 = vsyncpa [#allocation4], 0
    %s14 = scalar_lea.sflag [#allocation4], 1
    %15 = vsyncpa %s14, 0
    loop: start=0, step=1, limit=4
    $region2: #{tpu_custom_call.1} parent=1 // loop_pre_header
      _
    $region3: #{tpu_custom_call.1} parent=1 // loop_header
      %s17 = sphi 0, %s21
      %p18 = scmp.ge.s32.totalorder %s17, 4
      %s27 = sphi 0, %s29
      %s30 = sphi 0, %s27
      %s31 = sphi 0, %s30
      %s47 = sphi 0, %s31
      %s53 = sphi 0, %s55
      %s56 = sphi 0, %s53
      %s57 = sphi 0, %s56
      %s73 = sphi 0, %s57
      %s79 = sphi 0, %s81
      %s82 = sphi 0, %s79
      %s83 = sphi 0, %s82
      %s99 = sphi 0, %s83
    $region4: #{tpu_custom_call.1} parent=1 // loop_header_branch
      %20 = sbr.rel (%p18) target = $region8
    $region5: #{tpu_custom_call.1} parent=1 // loop_body
      %s22 = ssub.s32 %s17, 1
      %s23 = ssub.s32 %s17, 2
      %s24 = sadd.s32 %s17, 1
      %s25 = ssub.s32 %s17, %s24
      %p26 = scmp.eq.s32.totalorder %s25, 0
      %s28 = sadd.s32 %s27, 1
      %s29 = scalar_select %p26, %s27, %s28
      %p32 = pneg %p26
      %p33 = scmp.eq.s32.totalorder %s17, 1
      %p34 = por %p32, %p33
      %p35 = scmp.ne.s32.totalorder %s27, %s30
      %p36 = scmp.eq.s32.totalorder %s17, 0
      %p37 = por %p35, %p36
      %p38 = scmp.ne.s32.totalorder %s27, %s30
      %p39 = scmp.eq.s32.totalorder %s22, 1
      %p40 = por %p38, %p39
      %p41 = scmp.ne.s32.totalorder %s30, %s31
      %p42 = scmp.eq.s32.totalorder %s22, 0
      %p43 = por %p41, %p42
      %p44 = scmp.ne.s32.totalorder %s30, %s31
      %p45 = scmp.eq.s32.totalorder %s23, 1
      %p46 = por %p44, %p45
      %p48 = scmp.ne.s32.totalorder %s31, %s47
      %p49 = scmp.eq.s32.totalorder %s23, 0
      %p50 = por %p48, %p49
      %s51 = ssub.s32 %s17, %s24
      %p52 = scmp.eq.s32.totalorder %s51, 0
      %s54 = sadd.s32 %s53, 1
      %s55 = scalar_select %p52, %s53, %s54
      %p58 = pneg %p52
      %p59 = scmp.eq.s32.totalorder %s17, 1
      %p60 = por %p58, %p59
      %p61 = scmp.ne.s32.totalorder %s53, %s56
      %p62 = scmp.eq.s32.totalorder %s17, 0
      %p63 = por %p61, %p62
      %p64 = scmp.ne.s32.totalorder %s53, %s56
      %p65 = scmp.eq.s32.totalorder %s22, 1
      %p66 = por %p64, %p65
      %p67 = scmp.ne.s32.totalorder %s56, %s57
      %p68 = scmp.eq.s32.totalorder %s22, 0
      %p69 = por %p67, %p68
      %p70 = scmp.ne.s32.totalorder %s56, %s57
      %p71 = scmp.eq.s32.totalorder %s23, 1
      %p72 = por %p70, %p71
      %p74 = scmp.ne.s32.totalorder %s57, %s73
      %p75 = scmp.eq.s32.totalorder %s23, 0
      %p76 = por %p74, %p75
      %s77 = ssub.s32 %s17, %s24
      %p78 = scmp.eq.s32.totalorder %s77, 0
      %s80 = sadd.s32 %s79, 1
      %s81 = scalar_select %p78, %s79, %s80
      %p84 = pneg %p78
      %p85 = scmp.eq.s32.totalorder %s17, 1
      %p86 = por %p84, %p85
      %p87 = scmp.ne.s32.totalorder %s79, %s82
      %p88 = scmp.eq.s32.totalorder %s17, 0
      %p89 = por %p87, %p88
      %p90 = scmp.ne.s32.totalorder %s79, %s82
      %p91 = scmp.eq.s32.totalorder %s22, 1
      %p92 = por %p90, %p91
      %p93 = scmp.ne.s32.totalorder %s82, %s83
      %p94 = scmp.eq.s32.totalorder %s22, 0
      %p95 = por %p93, %p94
      %p96 = scmp.ne.s32.totalorder %s82, %s83
      %p97 = scmp.eq.s32.totalorder %s23, 1
      %p98 = por %p96, %p97
      %p100 = scmp.ne.s32.totalorder %s83, %s99
      %p101 = scmp.eq.s32.totalorder %s23, 0
      %p102 = por %p100, %p101
      %p103 = scmp.le.s32.totalorder 1, %s17
      %p104 = scmp.lt.s32.totalorder %s17, 3
      %p105 = pnand %p103, %p104
      %p106 = pneg %p105
      // Predicated region
      $region9: #{tpu_custom_call.1} parent=5 // pred_check
        _
      $region10: #{tpu_custom_call.1} parent=5 // pred_check_branch
        %108 = sbr.rel (%p105) target = $region12
      $region11: #{tpu_custom_call.1} parent=5 // pred_region
        %s109 = ssub.s32 %s17, 1
      $region12: #{tpu_custom_call.1} parent=5 // pred_fallthru
        _
      %p110 = scmp.lt.s32.totalorder %s17, 2
      // Predicated region
      $region13: #{tpu_custom_call.1} parent=5 // pred_check
        %p111 = pneg %p110
      $region14: #{tpu_custom_call.1} parent=5 // pred_check_branch
        %113 = sbr.rel (%p111) target = $region16
      $region15: #{tpu_custom_call.1} parent=5 // pred_region
        // Predicated region
        $region17: #{tpu_custom_call.1} parent=15 // pred_check
          %p114 = pneg %p37
        $region18: #{tpu_custom_call.1} parent=15 // pred_check_branch
          %116 = sbr.rel (%p114) target = $region20
        $region19: #{tpu_custom_call.1} parent=15 // pred_region
          %s117 = sand.u32 %s27, 1
          %s118 = scalar_lea.sflag [#allocation3], %s117
          %s119 = sand.u32 %s27, 1
          %s120 = smul.addr %s119, 4096
          %s121 = scalar_lea.vmem [#allocation2], %s120
          %s122 = smul.u32 64, %s17
          %124 = vsyncadd %s118, 0
          %s125 = smul.addr %s122, 8
          %s126 = smul.addr %s125, 8
          %s127 = scalar_lea.hbm %s0, %s126
          %s128 = sshll.u32 %s127, 4
          %s129 = int_to_ptr.hbm [resolvable:$true] %s128
          %s130 = sshll.u32 %s121, 4
          %s131 = int_to_ptr.vmem [resolvable:$true] %s130
          %136 = dma.hbm_to_vmem [thread:$0]  %s129, 65536, %s131, %s118, 1024, 1024, 64
        $region20: #{tpu_custom_call.1} parent=15 // pred_fallthru
          _
        // Predicated region
        $region21: #{tpu_custom_call.1} parent=15 // pred_check
          %p137 = pneg %p63
        $region22: #{tpu_custom_call.1} parent=15 // pred_check_branch
          %139 = sbr.rel (%p137) target = $region24
        $region23: #{tpu_custom_call.1} parent=15 // pred_region
          %s140 = sand.u32 %s53, 1
          %s141 = scalar_lea.sflag [#allocation6], %s140
          %s142 = sand.u32 %s53, 1
          %s143 = smul.addr %s142, 4096
          %s144 = scalar_lea.vmem [#allocation5], %s143
          %s145 = smul.u32 64, %s17
          %147 = vsyncadd %s141, 0
          %s148 = smul.addr %s145, 8
          %s149 = smul.addr %s148, 8
          %s150 = scalar_lea.hbm %s1, %s149
          %s151 = sshll.u32 %s150, 4
          %s152 = int_to_ptr.hbm [resolvable:$true] %s151
          %s153 = sshll.u32 %s144, 4
          %s154 = int_to_ptr.vmem [resolvable:$true] %s153
          %159 = dma.hbm_to_vmem [thread:$0]  %s152, 65536, %s154, %s141, 1024, 1024, 64
        $region24: #{tpu_custom_call.1} parent=15 // pred_fallthru
          _
      $region16: #{tpu_custom_call.1} parent=5 // pred_fallthru
        _
      %p160 = scmp.le.s32.totalorder 1, %s17
      %p161 = scmp.lt.s32.totalorder %s17, 3
      %p162 = pnand %p160, %p161
      %p163 = pneg %p162
      // Predicated region
      $region25: #{tpu_custom_call.1} parent=5 // pred_check
        _
      $region26: #{tpu_custom_call.1} parent=5 // pred_check_branch
        %165 = sbr.rel (%p162) target = $region28
      $region27: #{tpu_custom_call.1} parent=5 // pred_region
        %s166 = ssub.s32 %s17, 1
        %s167 = sand.u32 %s30, 1
        %s168 = scalar_lea.sflag [#allocation3], %s167
        %s169 = sand.u32 %s30, 1
        %s170 = smul.addr %s169, 4096
        %s171 = scalar_lea.vmem [#allocation2], %s170
        // Predicated region
        $region29: #{tpu_custom_call.1} parent=27 // pred_check
          %p172 = pneg %p43
        $region30: #{tpu_custom_call.1} parent=27 // pred_check_branch
          %174 = sbr.rel (%p172) target = $region32
        $region31: #{tpu_custom_call.1} parent=27 // pred_region
          %176 = dma.done %s168, 65536
        $region32: #{tpu_custom_call.1} parent=27 // pred_fallthru
          _
        %s177 = sand.u32 %s56, 1
        %s178 = scalar_lea.sflag [#allocation6], %s177
        %s179 = sand.u32 %s56, 1
        %s180 = smul.addr %s179, 4096
        %s181 = scalar_lea.vmem [#allocation5], %s180
        // Predicated region
        $region33: #{tpu_custom_call.1} parent=27 // pred_check
          %p182 = pneg %p69
        $region34: #{tpu_custom_call.1} parent=27 // pred_check_branch
          %184 = sbr.rel (%p182) target = $region36
        $region35: #{tpu_custom_call.1} parent=27 // pred_region
          %186 = dma.done %s178, 65536
        $region36: #{tpu_custom_call.1} parent=27 // pred_fallthru
          _
        %s187 = sand.u32 %s30, 1
        %s188 = scalar_lea.sflag [#allocation3], %s187
        %s189 = sand.u32 %s30, 1
        %s190 = smul.addr %s189, 4096
        %s191 = scalar_lea.vmem [#allocation2], %s190
        %p192 = pneg %p43
        %p193 = pneg %p40
        %s194 = sand.u32 %s56, 1
        %s195 = scalar_lea.sflag [#allocation6], %s194
        %s196 = sand.u32 %s56, 1
        %s197 = smul.addr %s196, 4096
        %s198 = scalar_lea.vmem [#allocation5], %s197
        %p199 = pneg %p69
        %p200 = pneg %p66
        %p201 = pneg %p95
        %p202 = pneg %p92
        %s203 = sand.u32 %s82, 1
        %s204 = scalar_lea.sflag [#allocation4], %s203
        %s205 = sand.u32 %s82, 1
        %s206 = smul.addr %s205, 4096
        %s207 = scalar_lea.vmem [#allocation7], %s206
        %s208 = smul.u32 64, %s22
        %s209 = smul.u32 64, %s22
        %s210 = smul.u32 64, %s22
        %v211 = vld [vmem:[%s171] sm:$0xff]
        %v212 = vld [vmem:[%s171 + $0x8] sm:$0xff]
        %v213 = vld [vmem:[%s171 + $0x10] sm:$0xff]
        %v214 = vld [vmem:[%s171 + $0x18] sm:$0xff]
        %v215 = vld [vmem:[%s171 + $0x20] sm:$0xff]
        %v216 = vld [vmem:[%s171 + $0x28] sm:$0xff]
        %v217 = vld [vmem:[%s171 + $0x30] sm:$0xff]
        %v218 = vld [vmem:[%s171 + $0x38] sm:$0xff]
        %v219 = vld [vmem:[%s171 + $0x40] sm:$0xff]
        %v220 = vld [vmem:[%s171 + $0x48] sm:$0xff]
        %v221 = vld [vmem:[%s171 + $0x50] sm:$0xff]
        %v222 = vld [vmem:[%s171 + $0x58] sm:$0xff]
        %v223 = vld [vmem:[%s171 + $0x60] sm:$0xff]
        %v224 = vld [vmem:[%s171 + $0x68] sm:$0xff]
        %v225 = vld [vmem:[%s171 + $0x70] sm:$0xff]
        %v226 = vld [vmem:[%s171 + $0x78] sm:$0xff]
        %v227 = vld [vmem:[%s171 + $0x80] sm:$0xff]
        %v228 = vld [vmem:[%s171 + $0x88] sm:$0xff]
        %v229 = vld [vmem:[%s171 + $0x90] sm:$0xff]
        %v230 = vld [vmem:[%s171 + $0x98] sm:$0xff]
        %v231 = vld [vmem:[%s171 + $0xa0] sm:$0xff]
        %v232 = vld [vmem:[%s171 + $0xa8] sm:$0xff]
        %v233 = vld [vmem:[%s171 + $0xb0] sm:$0xff]
        %v234 = vld [vmem:[%s171 + $0xb8] sm:$0xff]
        %v235 = vld [vmem:[%s171 + $0xc0] sm:$0xff]
        %v236 = vld [vmem:[%s171 + $0xc8] sm:$0xff]
        %v237 = vld [vmem:[%s171 + $0xd0] sm:$0xff]
        %v238 = vld [vmem:[%s171 + $0xd8] sm:$0xff]
        %v239 = vld [vmem:[%s171 + $0xe0] sm:$0xff]
        %v240 = vld [vmem:[%s171 + $0xe8] sm:$0xff]
        %v241 = vld [vmem:[%s171 + $0xf0] sm:$0xff]
        %v242 = vld [vmem:[%s171 + $0xf8] sm:$0xff]
        %v243 = vld [vmem:[%s171 + $0x100] sm:$0xff]
        %v244 = vld [vmem:[%s171 + $0x108] sm:$0xff]
        %v245 = vld [vmem:[%s171 + $0x110] sm:$0xff]
        %v246 = vld [vmem:[%s171 + $0x118] sm:$0xff]
        %v247 = vld [vmem:[%s171 + $0x120] sm:$0xff]
        %v248 = vld [vmem:[%s171 + $0x128] sm:$0xff]
        %v249 = vld [vmem:[%s171 + $0x130] sm:$0xff]
        %v250 = vld [vmem:[%s171 + $0x138] sm:$0xff]
        %v251 = vld [vmem:[%s171 + $0x140] sm:$0xff]
        %v252 = vld [vmem:[%s171 + $0x148] sm:$0xff]
        %v253 = vld [vmem:[%s171 + $0x150] sm:$0xff]
        %v254 = vld [vmem:[%s171 + $0x158] sm:$0xff]
        %v255 = vld [vmem:[%s171 + $0x160] sm:$0xff]
        %v256 = vld [vmem:[%s171 + $0x168] sm:$0xff]
        %v257 = vld [vmem:[%s171 + $0x170] sm:$0xff]
        %v258 = vld [vmem:[%s171 + $0x178] sm:$0xff]
        %v259 = vld [vmem:[%s171 + $0x180] sm:$0xff]
        %v260 = vld [vmem:[%s171 + $0x188] sm:$0xff]
        %v261 = vld [vmem:[%s171 + $0x190] sm:$0xff]
        %v262 = vld [vmem:[%s171 + $0x198] sm:$0xff]
        %v263 = vld [vmem:[%s171 + $0x1a0] sm:$0xff]
        %v264 = vld [vmem:[%s171 + $0x1a8] sm:$0xff]
        %v265 = vld [vmem:[%s171 + $0x1b0] sm:$0xff]
        %v266 = vld [vmem:[%s171 + $0x1b8] sm:$0xff]
        %v267 = vld [vmem:[%s171 + $0x1c0] sm:$0xff]
        %v268 = vld [vmem:[%s171 + $0x1c8] sm:$0xff]
        %v269 = vld [vmem:[%s171 + $0x1d0] sm:$0xff]
        %v270 = vld [vmem:[%s171 + $0x1d8] sm:$0xff]
        %v271 = vld [vmem:[%s171 + $0x1e0] sm:$0xff]
        %v272 = vld [vmem:[%s171 + $0x1e8] sm:$0xff]
        %v273 = vld [vmem:[%s171 + $0x1f0] sm:$0xff]
        %v274 = vld [vmem:[%s171 + $0x1f8] sm:$0xff]
        %v275 = vld [vmem:[%s171 + $0x200] sm:$0xff]
        %v276 = vld [vmem:[%s171 + $0x208] sm:$0xff]
        %v277 = vld [vmem:[%s171 + $0x210] sm:$0xff]
        %v278 = vld [vmem:[%s171 + $0x218] sm:$0xff]
        %v279 = vld [vmem:[%s171 + $0x220] sm:$0xff]
        %v280 = vld [vmem:[%s171 + $0x228] sm:$0xff]
        %v281 = vld [vmem:[%s171 + $0x230] sm:$0xff]
        %v282 = vld [vmem:[%s171 + $0x238] sm:$0xff]
        %v283 = vld [vmem:[%s171 + $0x240] sm:$0xff]
        %v284 = vld [vmem:[%s171 + $0x248] sm:$0xff]
        %v285 = vld [vmem:[%s171 + $0x250] sm:$0xff]
        %v286 = vld [vmem:[%s171 + $0x258] sm:$0xff]
        %v287 = vld [vmem:[%s171 + $0x260] sm:$0xff]
        %v288 = vld [vmem:[%s171 + $0x268] sm:$0xff]
        %v289 = vld [vmem:[%s171 + $0x270] sm:$0xff]
        %v290 = vld [vmem:[%s171 + $0x278] sm:$0xff]
        %v291 = vld [vmem:[%s171 + $0x280] sm:$0xff]
        %v292 = vld [vmem:[%s171 + $0x288] sm:$0xff]
        %v293 = vld [vmem:[%s171 + $0x290] sm:$0xff]
        %v294 = vld [vmem:[%s171 + $0x298] sm:$0xff]
        %v295 = vld [vmem:[%s171 + $0x2a0] sm:$0xff]
        %v296 = vld [vmem:[%s171 + $0x2a8] sm:$0xff]
        %v297 = vld [vmem:[%s171 + $0x2b0] sm:$0xff]
        %v298 = vld [vmem:[%s171 + $0x2b8] sm:$0xff]
        %v299 = vld [vmem:[%s171 + $0x2c0] sm:$0xff]
        %v300 = vld [vmem:[%s171 + $0x2c8] sm:$0xff]
        %v301 = vld [vmem:[%s171 + $0x2d0] sm:$0xff]
        %v302 = vld [vmem:[%s171 + $0x2d8] sm:$0xff]
        %v303 = vld [vmem:[%s171 + $0x2e0] sm:$0xff]
        %v304 = vld [vmem:[%s171 + $0x2e8] sm:$0xff]
        %v305 = vld [vmem:[%s171 + $0x2f0] sm:$0xff]
        %v306 = vld [vmem:[%s171 + $0x2f8] sm:$0xff]
        %v307 = vld [vmem:[%s171 + $0x300] sm:$0xff]
        %v308 = vld [vmem:[%s171 + $0x308] sm:$0xff]
        %v309 = vld [vmem:[%s171 + $0x310] sm:$0xff]
        %v310 = vld [vmem:[%s171 + $0x318] sm:$0xff]
        %v311 = vld [vmem:[%s171 + $0x320] sm:$0xff]
        %v312 = vld [vmem:[%s171 + $0x328] sm:$0xff]
        %v313 = vld [vmem:[%s171 + $0x330] sm:$0xff]
        %v314 = vld [vmem:[%s171 + $0x338] sm:$0xff]
        %v315 = vld [vmem:[%s171 + $0x340] sm:$0xff]
        %v316 = vld [vmem:[%s171 + $0x348] sm:$0xff]
        %v317 = vld [vmem:[%s171 + $0x350] sm:$0xff]
        %v318 = vld [vmem:[%s171 + $0x358] sm:$0xff]
        %v319 = vld [vmem:[%s171 + $0x360] sm:$0xff]
        %v320 = vld [vmem:[%s171 + $0x368] sm:$0xff]
        %v321 = vld [vmem:[%s171 + $0x370] sm:$0xff]
        %v322 = vld [vmem:[%s171 + $0x378] sm:$0xff]
        %v323 = vld [vmem:[%s171 + $0x380] sm:$0xff]
        %v324 = vld [vmem:[%s171 + $0x388] sm:$0xff]
        %v325 = vld [vmem:[%s171 + $0x390] sm:$0xff]
        %v326 = vld [vmem:[%s171 + $0x398] sm:$0xff]
        %v327 = vld [vmem:[%s171 + $0x3a0] sm:$0xff]
        %v328 = vld [vmem:[%s171 + $0x3a8] sm:$0xff]
        %v329 = vld [vmem:[%s171 + $0x3b0] sm:$0xff]
        %v330 = vld [vmem:[%s171 + $0x3b8] sm:$0xff]
        %v331 = vld [vmem:[%s171 + $0x3c0] sm:$0xff]
        %v332 = vld [vmem:[%s171 + $0x3c8] sm:$0xff]
        %v333 = vld [vmem:[%s171 + $0x3d0] sm:$0xff]
        %v334 = vld [vmem:[%s171 + $0x3d8] sm:$0xff]
        %v335 = vld [vmem:[%s171 + $0x3e0] sm:$0xff]
        %v336 = vld [vmem:[%s171 + $0x3e8] sm:$0xff]
        %v337 = vld [vmem:[%s171 + $0x3f0] sm:$0xff]
        %v338 = vld [vmem:[%s171 + $0x3f8] sm:$0xff]
        %v339 = vld [vmem:[%s171 + $0x400] sm:$0xff]
        %v340 = vld [vmem:[%s171 + $0x408] sm:$0xff]
        %v341 = vld [vmem:[%s171 + $0x410] sm:$0xff]
        %v342 = vld [vmem:[%s171 + $0x418] sm:$0xff]
        %v343 = vld [vmem:[%s171 + $0x420] sm:$0xff]
        %v344 = vld [vmem:[%s171 + $0x428] sm:$0xff]
        %v345 = vld [vmem:[%s171 + $0x430] sm:$0xff]
        %v346 = vld [vmem:[%s171 + $0x438] sm:$0xff]
        %v347 = vld [vmem:[%s171 + $0x440] sm:$0xff]
        %v348 = vld [vmem:[%s171 + $0x448] sm:$0xff]
        %v349 = vld [vmem:[%s171 + $0x450] sm:$0xff]
        %v350 = vld [vmem:[%s171 + $0x458] sm:$0xff]
        %v351 = vld [vmem:[%s171 + $0x460] sm:$0xff]
        %v352 = vld [vmem:[%s171 + $0x468] sm:$0xff]
        %v353 = vld [vmem:[%s171 + $0x470] sm:$0xff]
        %v354 = vld [vmem:[%s171 + $0x478] sm:$0xff]
        %v355 = vld [vmem:[%s171 + $0x480] sm:$0xff]
        %v356 = vld [vmem:[%s171 + $0x488] sm:$0xff]
        %v357 = vld [vmem:[%s171 + $0x490] sm:$0xff]
        %v358 = vld [vmem:[%s171 + $0x498] sm:$0xff]
        %v359 = vld [vmem:[%s171 + $0x4a0] sm:$0xff]
        %v360 = vld [vmem:[%s171 + $0x4a8] sm:$0xff]
        %v361 = vld [vmem:[%s171 + $0x4b0] sm:$0xff]
        %v362 = vld [vmem:[%s171 + $0x4b8] sm:$0xff]
        %v363 = vld [vmem:[%s171 + $0x4c0] sm:$0xff]
        %v364 = vld [vmem:[%s171 + $0x4c8] sm:$0xff]
        %v365 = vld [vmem:[%s171 + $0x4d0] sm:$0xff]
        %v366 = vld [vmem:[%s171 + $0x4d8] sm:$0xff]
        %v367 = vld [vmem:[%s171 + $0x4e0] sm:$0xff]
        %v368 = vld [vmem:[%s171 + $0x4e8] sm:$0xff]
        %v369 = vld [vmem:[%s171 + $0x4f0] sm:$0xff]
        %v370 = vld [vmem:[%s171 + $0x4f8] sm:$0xff]
        %v371 = vld [vmem:[%s171 + $0x500] sm:$0xff]
        %v372 = vld [vmem:[%s171 + $0x508] sm:$0xff]
        %v373 = vld [vmem:[%s171 + $0x510] sm:$0xff]
        %v374 = vld [vmem:[%s171 + $0x518] sm:$0xff]
        %v375 = vld [vmem:[%s171 + $0x520] sm:$0xff]
        %v376 = vld [vmem:[%s171 + $0x528] sm:$0xff]
        %v377 = vld [vmem:[%s171 + $0x530] sm:$0xff]
        %v378 = vld [vmem:[%s171 + $0x538] sm:$0xff]
        %v379 = vld [vmem:[%s171 + $0x540] sm:$0xff]
        %v380 = vld [vmem:[%s171 + $0x548] sm:$0xff]
        %v381 = vld [vmem:[%s171 + $0x550] sm:$0xff]
        %v382 = vld [vmem:[%s171 + $0x558] sm:$0xff]
        %v383 = vld [vmem:[%s171 + $0x560] sm:$0xff]
        %v384 = vld [vmem:[%s171 + $0x568] sm:$0xff]
        %v385 = vld [vmem:[%s171 + $0x570] sm:$0xff]
        %v386 = vld [vmem:[%s171 + $0x578] sm:$0xff]
        %v387 = vld [vmem:[%s171 + $0x580] sm:$0xff]
        %v388 = vld [vmem:[%s171 + $0x588] sm:$0xff]
        %v389 = vld [vmem:[%s171 + $0x590] sm:$0xff]
        %v390 = vld [vmem:[%s171 + $0x598] sm:$0xff]
        %v391 = vld [vmem:[%s171 + $0x5a0] sm:$0xff]
        %v392 = vld [vmem:[%s171 + $0x5a8] sm:$0xff]
        %v393 = vld [vmem:[%s171 + $0x5b0] sm:$0xff]
        %v394 = vld [vmem:[%s171 + $0x5b8] sm:$0xff]
        %v395 = vld [vmem:[%s171 + $0x5c0] sm:$0xff]
        %v396 = vld [vmem:[%s171 + $0x5c8] sm:$0xff]
        %v397 = vld [vmem:[%s171 + $0x5d0] sm:$0xff]
        %v398 = vld [vmem:[%s171 + $0x5d8] sm:$0xff]
        %v399 = vld [vmem:[%s171 + $0x5e0] sm:$0xff]
        %v400 = vld [vmem:[%s171 + $0x5e8] sm:$0xff]
        %v401 = vld [vmem:[%s171 + $0x5f0] sm:$0xff]
        %v402 = vld [vmem:[%s171 + $0x5f8] sm:$0xff]
        %v403 = vld [vmem:[%s171 + $0x600] sm:$0xff]
        %v404 = vld [vmem:[%s171 + $0x608] sm:$0xff]
        %v405 = vld [vmem:[%s171 + $0x610] sm:$0xff]
        %v406 = vld [vmem:[%s171 + $0x618] sm:$0xff]
        %v407 = vld [vmem:[%s171 + $0x620] sm:$0xff]
        %v408 = vld [vmem:[%s171 + $0x628] sm:$0xff]
        %v409 = vld [vmem:[%s171 + $0x630] sm:$0xff]
        %v410 = vld [vmem:[%s171 + $0x638] sm:$0xff]
        %v411 = vld [vmem:[%s171 + $0x640] sm:$0xff]
        %v412 = vld [vmem:[%s171 + $0x648] sm:$0xff]
        %v413 = vld [vmem:[%s171 + $0x650] sm:$0xff]
        %v414 = vld [vmem:[%s171 + $0x658] sm:$0xff]
        %v415 = vld [vmem:[%s171 + $0x660] sm:$0xff]
        %v416 = vld [vmem:[%s171 + $0x668] sm:$0xff]
        %v417 = vld [vmem:[%s171 + $0x670] sm:$0xff]
        %v418 = vld [vmem:[%s171 + $0x678] sm:$0xff]
        %v419 = vld [vmem:[%s171 + $0x680] sm:$0xff]
        %v420 = vld [vmem:[%s171 + $0x688] sm:$0xff]
        %v421 = vld [vmem:[%s171 + $0x690] sm:$0xff]
        %v422 = vld [vmem:[%s171 + $0x698] sm:$0xff]
        %v423 = vld [vmem:[%s171 + $0x6a0] sm:$0xff]
        %v424 = vld [vmem:[%s171 + $0x6a8] sm:$0xff]
        %v425 = vld [vmem:[%s171 + $0x6b0] sm:$0xff]
        %v426 = vld [vmem:[%s171 + $0x6b8] sm:$0xff]
        %v427 = vld [vmem:[%s171 + $0x6c0] sm:$0xff]
        %v428 = vld [vmem:[%s171 + $0x6c8] sm:$0xff]
        %v429 = vld [vmem:[%s171 + $0x6d0] sm:$0xff]
        %v430 = vld [vmem:[%s171 + $0x6d8] sm:$0xff]
        %v431 = vld [vmem:[%s171 + $0x6e0] sm:$0xff]
        %v432 = vld [vmem:[%s171 + $0x6e8] sm:$0xff]
        %v433 = vld [vmem:[%s171 + $0x6f0] sm:$0xff]
        %v434 = vld [vmem:[%s171 + $0x6f8] sm:$0xff]
        %v435 = vld [vmem:[%s171 + $0x700] sm:$0xff]
        %v436 = vld [vmem:[%s171 + $0x708] sm:$0xff]
        %v437 = vld [vmem:[%s171 + $0x710] sm:$0xff]
        %v438 = vld [vmem:[%s171 + $0x718] sm:$0xff]
        %v439 = vld [vmem:[%s171 + $0x720] sm:$0xff]
        %v440 = vld [vmem:[%s171 + $0x728] sm:$0xff]
        %v441 = vld [vmem:[%s171 + $0x730] sm:$0xff]
        %v442 = vld [vmem:[%s171 + $0x738] sm:$0xff]
        %v443 = vld [vmem:[%s171 + $0x740] sm:$0xff]
        %v444 = vld [vmem:[%s171 + $0x748] sm:$0xff]
        %v445 = vld [vmem:[%s171 + $0x750] sm:$0xff]
        %v446 = vld [vmem:[%s171 + $0x758] sm:$0xff]
        %v447 = vld [vmem:[%s171 + $0x760] sm:$0xff]
        %v448 = vld [vmem:[%s171 + $0x768] sm:$0xff]
        %v449 = vld [vmem:[%s171 + $0x770] sm:$0xff]
        %v450 = vld [vmem:[%s171 + $0x778] sm:$0xff]
        %v451 = vld [vmem:[%s171 + $0x780] sm:$0xff]
        %v452 = vld [vmem:[%s171 + $0x788] sm:$0xff]
        %v453 = vld [vmem:[%s171 + $0x790] sm:$0xff]
        %v454 = vld [vmem:[%s171 + $0x798] sm:$0xff]
        %v455 = vld [vmem:[%s171 + $0x7a0] sm:$0xff]
        %v456 = vld [vmem:[%s171 + $0x7a8] sm:$0xff]
        %v457 = vld [vmem:[%s171 + $0x7b0] sm:$0xff]
        %v458 = vld [vmem:[%s171 + $0x7b8] sm:$0xff]
        %v459 = vld [vmem:[%s171 + $0x7c0] sm:$0xff]
        %v460 = vld [vmem:[%s171 + $0x7c8] sm:$0xff]
        %v461 = vld [vmem:[%s171 + $0x7d0] sm:$0xff]
        %v462 = vld [vmem:[%s171 + $0x7d8] sm:$0xff]
        %v463 = vld [vmem:[%s171 + $0x7e0] sm:$0xff]
        %v464 = vld [vmem:[%s171 + $0x7e8] sm:$0xff]
        %v465 = vld [vmem:[%s171 + $0x7f0] sm:$0xff]
        %v466 = vld [vmem:[%s171 + $0x7f8] sm:$0xff]
        %v467 = vld [vmem:[%s171 + $0x800] sm:$0xff]
        %v468 = vld [vmem:[%s171 + $0x808] sm:$0xff]
        %v469 = vld [vmem:[%s171 + $0x810] sm:$0xff]
        %v470 = vld [vmem:[%s171 + $0x818] sm:$0xff]
        %v471 = vld [vmem:[%s171 + $0x820] sm:$0xff]
        %v472 = vld [vmem:[%s171 + $0x828] sm:$0xff]
        %v473 = vld [vmem:[%s171 + $0x830] sm:$0xff]
        %v474 = vld [vmem:[%s171 + $0x838] sm:$0xff]
        %v475 = vld [vmem:[%s171 + $0x840] sm:$0xff]
        %v476 = vld [vmem:[%s171 + $0x848] sm:$0xff]
        %v477 = vld [vmem:[%s171 + $0x850] sm:$0xff]
        %v478 = vld [vmem:[%s171 + $0x858] sm:$0xff]
        %v479 = vld [vmem:[%s171 + $0x860] sm:$0xff]
        %v480 = vld [vmem:[%s171 + $0x868] sm:$0xff]
        %v481 = vld [vmem:[%s171 + $0x870] sm:$0xff]
        %v482 = vld [vmem:[%s171 + $0x878] sm:$0xff]
        %v483 = vld [vmem:[%s171 + $0x880] sm:$0xff]
        %v484 = vld [vmem:[%s171 + $0x888] sm:$0xff]
        %v485 = vld [vmem:[%s171 + $0x890] sm:$0xff]
        %v486 = vld [vmem:[%s171 + $0x898] sm:$0xff]
        %v487 = vld [vmem:[%s171 + $0x8a0] sm:$0xff]
        %v488 = vld [vmem:[%s171 + $0x8a8] sm:$0xff]
        %v489 = vld [vmem:[%s171 + $0x8b0] sm:$0xff]
        %v490 = vld [vmem:[%s171 + $0x8b8] sm:$0xff]
        %v491 = vld [vmem:[%s171 + $0x8c0] sm:$0xff]
        %v492 = vld [vmem:[%s171 + $0x8c8] sm:$0xff]
        %v493 = vld [vmem:[%s171 + $0x8d0] sm:$0xff]
        %v494 = vld [vmem:[%s171 + $0x8d8] sm:$0xff]
        %v495 = vld [vmem:[%s171 + $0x8e0] sm:$0xff]
        %v496 = vld [vmem:[%s171 + $0x8e8] sm:$0xff]
        %v497 = vld [vmem:[%s171 + $0x8f0] sm:$0xff]
        %v498 = vld [vmem:[%s171 + $0x8f8] sm:$0xff]
        %v499 = vld [vmem:[%s171 + $0x900] sm:$0xff]
        %v500 = vld [vmem:[%s171 + $0x908] sm:$0xff]
        %v501 = vld [vmem:[%s171 + $0x910] sm:$0xff]
        %v502 = vld [vmem:[%s171 + $0x918] sm:$0xff]
        %v503 = vld [vmem:[%s171 + $0x920] sm:$0xff]
        %v504 = vld [vmem:[%s171 + $0x928] sm:$0xff]
        %v505 = vld [vmem:[%s171 + $0x930] sm:$0xff]
        %v506 = vld [vmem:[%s171 + $0x938] sm:$0xff]
        %v507 = vld [vmem:[%s171 + $0x940] sm:$0xff]
        %v508 = vld [vmem:[%s171 + $0x948] sm:$0xff]
        %v509 = vld [vmem:[%s171 + $0x950] sm:$0xff]
        %v510 = vld [vmem:[%s171 + $0x958] sm:$0xff]
        %v511 = vld [vmem:[%s171 + $0x960] sm:$0xff]
        %v512 = vld [vmem:[%s171 + $0x968] sm:$0xff]
        %v513 = vld [vmem:[%s171 + $0x970] sm:$0xff]
        %v514 = vld [vmem:[%s171 + $0x978] sm:$0xff]
        %v515 = vld [vmem:[%s171 + $0x980] sm:$0xff]
        %v516 = vld [vmem:[%s171 + $0x988] sm:$0xff]
        %v517 = vld [vmem:[%s171 + $0x990] sm:$0xff]
        %v518 = vld [vmem:[%s171 + $0x998] sm:$0xff]
        %v519 = vld [vmem:[%s171 + $0x9a0] sm:$0xff]
        %v520 = vld [vmem:[%s171 + $0x9a8] sm:$0xff]
        %v521 = vld [vmem:[%s171 + $0x9b0] sm:$0xff]
        %v522 = vld [vmem:[%s171 + $0x9b8] sm:$0xff]
        %v523 = vld [vmem:[%s171 + $0x9c0] sm:$0xff]
        %v524 = vld [vmem:[%s171 + $0x9c8] sm:$0xff]
        %v525 = vld [vmem:[%s171 + $0x9d0] sm:$0xff]
        %v526 = vld [vmem:[%s171 + $0x9d8] sm:$0xff]
        %v527 = vld [vmem:[%s171 + $0x9e0] sm:$0xff]
        %v528 = vld [vmem:[%s171 + $0x9e8] sm:$0xff]
        %v529 = vld [vmem:[%s171 + $0x9f0] sm:$0xff]
        %v530 = vld [vmem:[%s171 + $0x9f8] sm:$0xff]
        %v531 = vld [vmem:[%s171 + $0xa00] sm:$0xff]
        %v532 = vld [vmem:[%s171 + $0xa08] sm:$0xff]
        %v533 = vld [vmem:[%s171 + $0xa10] sm:$0xff]
        %v534 = vld [vmem:[%s171 + $0xa18] sm:$0xff]
        %v535 = vld [vmem:[%s171 + $0xa20] sm:$0xff]
        %v536 = vld [vmem:[%s171 + $0xa28] sm:$0xff]
        %v537 = vld [vmem:[%s171 + $0xa30] sm:$0xff]
        %v538 = vld [vmem:[%s171 + $0xa38] sm:$0xff]
        %v539 = vld [vmem:[%s171 + $0xa40] sm:$0xff]
        %v540 = vld [vmem:[%s171 + $0xa48] sm:$0xff]
        %v541 = vld [vmem:[%s171 + $0xa50] sm:$0xff]
        %v542 = vld [vmem:[%s171 + $0xa58] sm:$0xff]
        %v543 = vld [vmem:[%s171 + $0xa60] sm:$0xff]
        %v544 = vld [vmem:[%s171 + $0xa68] sm:$0xff]
        %v545 = vld [vmem:[%s171 + $0xa70] sm:$0xff]
        %v546 = vld [vmem:[%s171 + $0xa78] sm:$0xff]
        %v547 = vld [vmem:[%s171 + $0xa80] sm:$0xff]
        %v548 = vld [vmem:[%s171 + $0xa88] sm:$0xff]
        %v549 = vld [vmem:[%s171 + $0xa90] sm:$0xff]
        %v550 = vld [vmem:[%s171 + $0xa98] sm:$0xff]
        %v551 = vld [vmem:[%s171 + $0xaa0] sm:$0xff]
        %v552 = vld [vmem:[%s171 + $0xaa8] sm:$0xff]
        %v553 = vld [vmem:[%s171 + $0xab0] sm:$0xff]
        %v554 = vld [vmem:[%s171 + $0xab8] sm:$0xff]
        %v555 = vld [vmem:[%s171 + $0xac0] sm:$0xff]
        %v556 = vld [vmem:[%s171 + $0xac8] sm:$0xff]
        %v557 = vld [vmem:[%s171 + $0xad0] sm:$0xff]
        %v558 = vld [vmem:[%s171 + $0xad8] sm:$0xff]
        %v559 = vld [vmem:[%s171 + $0xae0] sm:$0xff]
        %v560 = vld [vmem:[%s171 + $0xae8] sm:$0xff]
        %v561 = vld [vmem:[%s171 + $0xaf0] sm:$0xff]
        %v562 = vld [vmem:[%s171 + $0xaf8] sm:$0xff]
        %v563 = vld [vmem:[%s171 + $0xb00] sm:$0xff]
        %v564 = vld [vmem:[%s171 + $0xb08] sm:$0xff]
        %v565 = vld [vmem:[%s171 + $0xb10] sm:$0xff]
        %v566 = vld [vmem:[%s171 + $0xb18] sm:$0xff]
        %v567 = vld [vmem:[%s171 + $0xb20] sm:$0xff]
        %v568 = vld [vmem:[%s171 + $0xb28] sm:$0xff]
        %v569 = vld [vmem:[%s171 + $0xb30] sm:$0xff]
        %v570 = vld [vmem:[%s171 + $0xb38] sm:$0xff]
        %v571 = vld [vmem:[%s171 + $0xb40] sm:$0xff]
        %v572 = vld [vmem:[%s171 + $0xb48] sm:$0xff]
        %v573 = vld [vmem:[%s171 + $0xb50] sm:$0xff]
        %v574 = vld [vmem:[%s171 + $0xb58] sm:$0xff]
        %v575 = vld [vmem:[%s171 + $0xb60] sm:$0xff]
        %v576 = vld [vmem:[%s171 + $0xb68] sm:$0xff]
        %v577 = vld [vmem:[%s171 + $0xb70] sm:$0xff]
        %v578 = vld [vmem:[%s171 + $0xb78] sm:$0xff]
        %v579 = vld [vmem:[%s171 + $0xb80] sm:$0xff]
        %v580 = vld [vmem:[%s171 + $0xb88] sm:$0xff]
        %v581 = vld [vmem:[%s171 + $0xb90] sm:$0xff]
        %v582 = vld [vmem:[%s171 + $0xb98] sm:$0xff]
        %v583 = vld [vmem:[%s171 + $0xba0] sm:$0xff]
        %v584 = vld [vmem:[%s171 + $0xba8] sm:$0xff]
        %v585 = vld [vmem:[%s171 + $0xbb0] sm:$0xff]
        %v586 = vld [vmem:[%s171 + $0xbb8] sm:$0xff]
        %v587 = vld [vmem:[%s171 + $0xbc0] sm:$0xff]
        %v588 = vld [vmem:[%s171 + $0xbc8] sm:$0xff]
        %v589 = vld [vmem:[%s171 + $0xbd0] sm:$0xff]
        %v590 = vld [vmem:[%s171 + $0xbd8] sm:$0xff]
        %v591 = vld [vmem:[%s171 + $0xbe0] sm:$0xff]
        %v592 = vld [vmem:[%s171 + $0xbe8] sm:$0xff]
        %v593 = vld [vmem:[%s171 + $0xbf0] sm:$0xff]
        %v594 = vld [vmem:[%s171 + $0xbf8] sm:$0xff]
        %v595 = vld [vmem:[%s171 + $0xc00] sm:$0xff]
        %v596 = vld [vmem:[%s171 + $0xc08] sm:$0xff]
        %v597 = vld [vmem:[%s171 + $0xc10] sm:$0xff]
        %v598 = vld [vmem:[%s171 + $0xc18] sm:$0xff]
        %v599 = vld [vmem:[%s171 + $0xc20] sm:$0xff]
        %v600 = vld [vmem:[%s171 + $0xc28] sm:$0xff]
        %v601 = vld [vmem:[%s171 + $0xc30] sm:$0xff]
        %v602 = vld [vmem:[%s171 + $0xc38] sm:$0xff]
        %v603 = vld [vmem:[%s171 + $0xc40] sm:$0xff]
        %v604 = vld [vmem:[%s171 + $0xc48] sm:$0xff]
        %v605 = vld [vmem:[%s171 + $0xc50] sm:$0xff]
        %v606 = vld [vmem:[%s171 + $0xc58] sm:$0xff]
        %v607 = vld [vmem:[%s171 + $0xc60] sm:$0xff]
        %v608 = vld [vmem:[%s171 + $0xc68] sm:$0xff]
        %v609 = vld [vmem:[%s171 + $0xc70] sm:$0xff]
        %v610 = vld [vmem:[%s171 + $0xc78] sm:$0xff]
        %v611 = vld [vmem:[%s171 + $0xc80] sm:$0xff]
        %v612 = vld [vmem:[%s171 + $0xc88] sm:$0xff]
        %v613 = vld [vmem:[%s171 + $0xc90] sm:$0xff]
        %v614 = vld [vmem:[%s171 + $0xc98] sm:$0xff]
        %v615 = vld [vmem:[%s171 + $0xca0] sm:$0xff]
        %v616 = vld [vmem:[%s171 + $0xca8] sm:$0xff]
        %v617 = vld [vmem:[%s171 + $0xcb0] sm:$0xff]
        %v618 = vld [vmem:[%s171 + $0xcb8] sm:$0xff]
        %v619 = vld [vmem:[%s171 + $0xcc0] sm:$0xff]
        %v620 = vld [vmem:[%s171 + $0xcc8] sm:$0xff]
        %v621 = vld [vmem:[%s171 + $0xcd0] sm:$0xff]
        %v622 = vld [vmem:[%s171 + $0xcd8] sm:$0xff]
        %v623 = vld [vmem:[%s171 + $0xce0] sm:$0xff]
        %v624 = vld [vmem:[%s171 + $0xce8] sm:$0xff]
        %v625 = vld [vmem:[%s171 + $0xcf0] sm:$0xff]
        %v626 = vld [vmem:[%s171 + $0xcf8] sm:$0xff]
        %v627 = vld [vmem:[%s171 + $0xd00] sm:$0xff]
        %v628 = vld [vmem:[%s171 + $0xd08] sm:$0xff]
        %v629 = vld [vmem:[%s171 + $0xd10] sm:$0xff]
        %v630 = vld [vmem:[%s171 + $0xd18] sm:$0xff]
        %v631 = vld [vmem:[%s171 + $0xd20] sm:$0xff]
        %v632 = vld [vmem:[%s171 + $0xd28] sm:$0xff]
        %v633 = vld [vmem:[%s171 + $0xd30] sm:$0xff]
        %v634 = vld [vmem:[%s171 + $0xd38] sm:$0xff]
        %v635 = vld [vmem:[%s171 + $0xd40] sm:$0xff]
        %v636 = vld [vmem:[%s171 + $0xd48] sm:$0xff]
        %v637 = vld [vmem:[%s171 + $0xd50] sm:$0xff]
        %v638 = vld [vmem:[%s171 + $0xd58] sm:$0xff]
        %v639 = vld [vmem:[%s171 + $0xd60] sm:$0xff]
        %v640 = vld [vmem:[%s171 + $0xd68] sm:$0xff]
        %v641 = vld [vmem:[%s171 + $0xd70] sm:$0xff]
        %v642 = vld [vmem:[%s171 + $0xd78] sm:$0xff]
        %v643 = vld [vmem:[%s171 + $0xd80] sm:$0xff]
        %v644 = vld [vmem:[%s171 + $0xd88] sm:$0xff]
        %v645 = vld [vmem:[%s171 + $0xd90] sm:$0xff]
        %v646 = vld [vmem:[%s171 + $0xd98] sm:$0xff]
        %v647 = vld [vmem:[%s171 + $0xda0] sm:$0xff]
        %v648 = vld [vmem:[%s171 + $0xda8] sm:$0xff]
        %v649 = vld [vmem:[%s171 + $0xdb0] sm:$0xff]
        %v650 = vld [vmem:[%s171 + $0xdb8] sm:$0xff]
        %v651 = vld [vmem:[%s171 + $0xdc0] sm:$0xff]
        %v652 = vld [vmem:[%s171 + $0xdc8] sm:$0xff]
        %v653 = vld [vmem:[%s171 + $0xdd0] sm:$0xff]
        %v654 = vld [vmem:[%s171 + $0xdd8] sm:$0xff]
        %v655 = vld [vmem:[%s171 + $0xde0] sm:$0xff]
        %v656 = vld [vmem:[%s171 + $0xde8] sm:$0xff]
        %v657 = vld [vmem:[%s171 + $0xdf0] sm:$0xff]
        %v658 = vld [vmem:[%s171 + $0xdf8] sm:$0xff]
        %v659 = vld [vmem:[%s171 + $0xe00] sm:$0xff]
        %v660 = vld [vmem:[%s171 + $0xe08] sm:$0xff]
        %v661 = vld [vmem:[%s171 + $0xe10] sm:$0xff]
        %v662 = vld [vmem:[%s171 + $0xe18] sm:$0xff]
        %v663 = vld [vmem:[%s171 + $0xe20] sm:$0xff]
        %v664 = vld [vmem:[%s171 + $0xe28] sm:$0xff]
        %v665 = vld [vmem:[%s171 + $0xe30] sm:$0xff]
        %v666 = vld [vmem:[%s171 + $0xe38] sm:$0xff]
        %v667 = vld [vmem:[%s171 + $0xe40] sm:$0xff]
        %v668 = vld [vmem:[%s171 + $0xe48] sm:$0xff]
        %v669 = vld [vmem:[%s171 + $0xe50] sm:$0xff]
        %v670 = vld [vmem:[%s171 + $0xe58] sm:$0xff]
        %v671 = vld [vmem:[%s171 + $0xe60] sm:$0xff]
        %v672 = vld [vmem:[%s171 + $0xe68] sm:$0xff]
        %v673 = vld [vmem:[%s171 + $0xe70] sm:$0xff]
        %v674 = vld [vmem:[%s171 + $0xe78] sm:$0xff]
        %v675 = vld [vmem:[%s171 + $0xe80] sm:$0xff]
        %v676 = vld [vmem:[%s171 + $0xe88] sm:$0xff]
        %v677 = vld [vmem:[%s171 + $0xe90] sm:$0xff]
        %v678 = vld [vmem:[%s171 + $0xe98] sm:$0xff]
        %v679 = vld [vmem:[%s171 + $0xea0] sm:$0xff]
        %v680 = vld [vmem:[%s171 + $0xea8] sm:$0xff]
        %v681 = vld [vmem:[%s171 + $0xeb0] sm:$0xff]
        %v682 = vld [vmem:[%s171 + $0xeb8] sm:$0xff]
        %v683 = vld [vmem:[%s171 + $0xec0] sm:$0xff]
        %v684 = vld [vmem:[%s171 + $0xec8] sm:$0xff]
        %v685 = vld [vmem:[%s171 + $0xed0] sm:$0xff]
        %v686 = vld [vmem:[%s171 + $0xed8] sm:$0xff]
        %v687 = vld [vmem:[%s171 + $0xee0] sm:$0xff]
        %v688 = vld [vmem:[%s171 + $0xee8] sm:$0xff]
        %v689 = vld [vmem:[%s171 + $0xef0] sm:$0xff]
        %v690 = vld [vmem:[%s171 + $0xef8] sm:$0xff]
        %v691 = vld [vmem:[%s171 + $0xf00] sm:$0xff]
        %v692 = vld [vmem:[%s171 + $0xf08] sm:$0xff]
        %v693 = vld [vmem:[%s171 + $0xf10] sm:$0xff]
        %v694 = vld [vmem:[%s171 + $0xf18] sm:$0xff]
        %v695 = vld [vmem:[%s171 + $0xf20] sm:$0xff]
        %v696 = vld [vmem:[%s171 + $0xf28] sm:$0xff]
        %v697 = vld [vmem:[%s171 + $0xf30] sm:$0xff]
        %v698 = vld [vmem:[%s171 + $0xf38] sm:$0xff]
        %v699 = vld [vmem:[%s171 + $0xf40] sm:$0xff]
        %v700 = vld [vmem:[%s171 + $0xf48] sm:$0xff]
        %v701 = vld [vmem:[%s171 + $0xf50] sm:$0xff]
        %v702 = vld [vmem:[%s171 + $0xf58] sm:$0xff]
        %v703 = vld [vmem:[%s171 + $0xf60] sm:$0xff]
        %v704 = vld [vmem:[%s171 + $0xf68] sm:$0xff]
        %v705 = vld [vmem:[%s171 + $0xf70] sm:$0xff]
        %v706 = vld [vmem:[%s171 + $0xf78] sm:$0xff]
        %v707 = vld [vmem:[%s171 + $0xf80] sm:$0xff]
        %v708 = vld [vmem:[%s171 + $0xf88] sm:$0xff]
        %v709 = vld [vmem:[%s171 + $0xf90] sm:$0xff]
        %v710 = vld [vmem:[%s171 + $0xf98] sm:$0xff]
        %v711 = vld [vmem:[%s171 + $0xfa0] sm:$0xff]
        %v712 = vld [vmem:[%s171 + $0xfa8] sm:$0xff]
        %v713 = vld [vmem:[%s171 + $0xfb0] sm:$0xff]
        %v714 = vld [vmem:[%s171 + $0xfb8] sm:$0xff]
        %v715 = vld [vmem:[%s171 + $0xfc0] sm:$0xff]
        %v716 = vld [vmem:[%s171 + $0xfc8] sm:$0xff]
        %v717 = vld [vmem:[%s171 + $0xfd0] sm:$0xff]
        %v718 = vld [vmem:[%s171 + $0xfd8] sm:$0xff]
        %v719 = vld [vmem:[%s171 + $0xfe0] sm:$0xff]
        %v720 = vld [vmem:[%s171 + $0xfe8] sm:$0xff]
        %v721 = vld [vmem:[%s171 + $0xff0] sm:$0xff]
        %v722 = vld [vmem:[%s171 + $0xff8] sm:$0xff]
        %v723 = vld [vmem:[%s181] sm:$0xff]
        %v724 = vld [vmem:[%s181 + $0x8] sm:$0xff]
        %v725 = vld [vmem:[%s181 + $0x10] sm:$0xff]
        %v726 = vld [vmem:[%s181 + $0x18] sm:$0xff]
        %v727 = vld [vmem:[%s181 + $0x20] sm:$0xff]
        %v728 = vld [vmem:[%s181 + $0x28] sm:$0xff]
        %v729 = vld [vmem:[%s181 + $0x30] sm:$0xff]
        %v730 = vld [vmem:[%s181 + $0x38] sm:$0xff]
        %v731 = vld [vmem:[%s181 + $0x40] sm:$0xff]
        %v732 = vld [vmem:[%s181 + $0x48] sm:$0xff]
        %v733 = vld [vmem:[%s181 + $0x50] sm:$0xff]
        %v734 = vld [vmem:[%s181 + $0x58] sm:$0xff]
        %v735 = vld [vmem:[%s181 + $0x60] sm:$0xff]
        %v736 = vld [vmem:[%s181 + $0x68] sm:$0xff]
        %v737 = vld [vmem:[%s181 + $0x70] sm:$0xff]
        %v738 = vld [vmem:[%s181 + $0x78] sm:$0xff]
        %v739 = vld [vmem:[%s181 + $0x80] sm:$0xff]
        %v740 = vld [vmem:[%s181 + $0x88] sm:$0xff]
        %v741 = vld [vmem:[%s181 + $0x90] sm:$0xff]
        %v742 = vld [vmem:[%s181 + $0x98] sm:$0xff]
        %v743 = vld [vmem:[%s181 + $0xa0] sm:$0xff]
        %v744 = vld [vmem:[%s181 + $0xa8] sm:$0xff]
        %v745 = vld [vmem:[%s181 + $0xb0] sm:$0xff]
        %v746 = vld [vmem:[%s181 + $0xb8] sm:$0xff]
        %v747 = vld [vmem:[%s181 + $0xc0] sm:$0xff]
        %v748 = vld [vmem:[%s181 + $0xc8] sm:$0xff]
        %v749 = vld [vmem:[%s181 + $0xd0] sm:$0xff]
        %v750 = vld [vmem:[%s181 + $0xd8] sm:$0xff]
        %v751 = vld [vmem:[%s181 + $0xe0] sm:$0xff]
        %v752 = vld [vmem:[%s181 + $0xe8] sm:$0xff]
        %v753 = vld [vmem:[%s181 + $0xf0] sm:$0xff]
        %v754 = vld [vmem:[%s181 + $0xf8] sm:$0xff]
        %v755 = vld [vmem:[%s181 + $0x100] sm:$0xff]
        %v756 = vld [vmem:[%s181 + $0x108] sm:$0xff]
        %v757 = vld [vmem:[%s181 + $0x110] sm:$0xff]
        %v758 = vld [vmem:[%s181 + $0x118] sm:$0xff]
        %v759 = vld [vmem:[%s181 + $0x120] sm:$0xff]
        %v760 = vld [vmem:[%s181 + $0x128] sm:$0xff]
        %v761 = vld [vmem:[%s181 + $0x130] sm:$0xff]
        %v762 = vld [vmem:[%s181 + $0x138] sm:$0xff]
        %v763 = vld [vmem:[%s181 + $0x140] sm:$0xff]
        %v764 = vld [vmem:[%s181 + $0x148] sm:$0xff]
        %v765 = vld [vmem:[%s181 + $0x150] sm:$0xff]
        %v766 = vld [vmem:[%s181 + $0x158] sm:$0xff]
        %v767 = vld [vmem:[%s181 + $0x160] sm:$0xff]
        %v768 = vld [vmem:[%s181 + $0x168] sm:$0xff]
        %v769 = vld [vmem:[%s181 + $0x170] sm:$0xff]
        %v770 = vld [vmem:[%s181 + $0x178] sm:$0xff]
        %v771 = vld [vmem:[%s181 + $0x180] sm:$0xff]
        %v772 = vld [vmem:[%s181 + $0x188] sm:$0xff]
        %v773 = vld [vmem:[%s181 + $0x190] sm:$0xff]
        %v774 = vld [vmem:[%s181 + $0x198] sm:$0xff]
        %v775 = vld [vmem:[%s181 + $0x1a0] sm:$0xff]
        %v776 = vld [vmem:[%s181 + $0x1a8] sm:$0xff]
        %v777 = vld [vmem:[%s181 + $0x1b0] sm:$0xff]
        %v778 = vld [vmem:[%s181 + $0x1b8] sm:$0xff]
        %v779 = vld [vmem:[%s181 + $0x1c0] sm:$0xff]
        %v780 = vld [vmem:[%s181 + $0x1c8] sm:$0xff]
        %v781 = vld [vmem:[%s181 + $0x1d0] sm:$0xff]
        %v782 = vld [vmem:[%s181 + $0x1d8] sm:$0xff]
        %v783 = vld [vmem:[%s181 + $0x1e0] sm:$0xff]
        %v784 = vld [vmem:[%s181 + $0x1e8] sm:$0xff]
        %v785 = vld [vmem:[%s181 + $0x1f0] sm:$0xff]
        %v786 = vld [vmem:[%s181 + $0x1f8] sm:$0xff]
        %v787 = vld [vmem:[%s181 + $0x200] sm:$0xff]
        %v788 = vld [vmem:[%s181 + $0x208] sm:$0xff]
        %v789 = vld [vmem:[%s181 + $0x210] sm:$0xff]
        %v790 = vld [vmem:[%s181 + $0x218] sm:$0xff]
        %v791 = vld [vmem:[%s181 + $0x220] sm:$0xff]
        %v792 = vld [vmem:[%s181 + $0x228] sm:$0xff]
        %v793 = vld [vmem:[%s181 + $0x230] sm:$0xff]
        %v794 = vld [vmem:[%s181 + $0x238] sm:$0xff]
        %v795 = vld [vmem:[%s181 + $0x240] sm:$0xff]
        %v796 = vld [vmem:[%s181 + $0x248] sm:$0xff]
        %v797 = vld [vmem:[%s181 + $0x250] sm:$0xff]
        %v798 = vld [vmem:[%s181 + $0x258] sm:$0xff]
        %v799 = vld [vmem:[%s181 + $0x260] sm:$0xff]
        %v800 = vld [vmem:[%s181 + $0x268] sm:$0xff]
        %v801 = vld [vmem:[%s181 + $0x270] sm:$0xff]
        %v802 = vld [vmem:[%s181 + $0x278] sm:$0xff]
        %v803 = vld [vmem:[%s181 + $0x280] sm:$0xff]
        %v804 = vld [vmem:[%s181 + $0x288] sm:$0xff]
        %v805 = vld [vmem:[%s181 + $0x290] sm:$0xff]
        %v806 = vld [vmem:[%s181 + $0x298] sm:$0xff]
        %v807 = vld [vmem:[%s181 + $0x2a0] sm:$0xff]
        %v808 = vld [vmem:[%s181 + $0x2a8] sm:$0xff]
        %v809 = vld [vmem:[%s181 + $0x2b0] sm:$0xff]
        %v810 = vld [vmem:[%s181 + $0x2b8] sm:$0xff]
        %v811 = vld [vmem:[%s181 + $0x2c0] sm:$0xff]
        %v812 = vld [vmem:[%s181 + $0x2c8] sm:$0xff]
        %v813 = vld [vmem:[%s181 + $0x2d0] sm:$0xff]
        %v814 = vld [vmem:[%s181 + $0x2d8] sm:$0xff]
        %v815 = vld [vmem:[%s181 + $0x2e0] sm:$0xff]
        %v816 = vld [vmem:[%s181 + $0x2e8] sm:$0xff]
        %v817 = vld [vmem:[%s181 + $0x2f0] sm:$0xff]
        %v818 = vld [vmem:[%s181 + $0x2f8] sm:$0xff]
        %v819 = vld [vmem:[%s181 + $0x300] sm:$0xff]
        %v820 = vld [vmem:[%s181 + $0x308] sm:$0xff]
        %v821 = vld [vmem:[%s181 + $0x310] sm:$0xff]
        %v822 = vld [vmem:[%s181 + $0x318] sm:$0xff]
        %v823 = vld [vmem:[%s181 + $0x320] sm:$0xff]
        %v824 = vld [vmem:[%s181 + $0x328] sm:$0xff]
        %v825 = vld [vmem:[%s181 + $0x330] sm:$0xff]
        %v826 = vld [vmem:[%s181 + $0x338] sm:$0xff]
        %v827 = vld [vmem:[%s181 + $0x340] sm:$0xff]
        %v828 = vld [vmem:[%s181 + $0x348] sm:$0xff]
        %v829 = vld [vmem:[%s181 + $0x350] sm:$0xff]
        %v830 = vld [vmem:[%s181 + $0x358] sm:$0xff]
        %v831 = vld [vmem:[%s181 + $0x360] sm:$0xff]
        %v832 = vld [vmem:[%s181 + $0x368] sm:$0xff]
        %v833 = vld [vmem:[%s181 + $0x370] sm:$0xff]
        %v834 = vld [vmem:[%s181 + $0x378] sm:$0xff]
        %v835 = vld [vmem:[%s181 + $0x380] sm:$0xff]
        %v836 = vld [vmem:[%s181 + $0x388] sm:$0xff]
        %v837 = vld [vmem:[%s181 + $0x390] sm:$0xff]
        %v838 = vld [vmem:[%s181 + $0x398] sm:$0xff]
        %v839 = vld [vmem:[%s181 + $0x3a0] sm:$0xff]
        %v840 = vld [vmem:[%s181 + $0x3a8] sm:$0xff]
        %v841 = vld [vmem:[%s181 + $0x3b0] sm:$0xff]
        %v842 = vld [vmem:[%s181 + $0x3b8] sm:$0xff]
        %v843 = vld [vmem:[%s181 + $0x3c0] sm:$0xff]
        %v844 = vld [vmem:[%s181 + $0x3c8] sm:$0xff]
        %v845 = vld [vmem:[%s181 + $0x3d0] sm:$0xff]
        %v846 = vld [vmem:[%s181 + $0x3d8] sm:$0xff]
        %v847 = vld [vmem:[%s181 + $0x3e0] sm:$0xff]
        %v848 = vld [vmem:[%s181 + $0x3e8] sm:$0xff]
        %v849 = vld [vmem:[%s181 + $0x3f0] sm:$0xff]
        %v850 = vld [vmem:[%s181 + $0x3f8] sm:$0xff]
        %v851 = vld [vmem:[%s181 + $0x400] sm:$0xff]
        %v852 = vld [vmem:[%s181 + $0x408] sm:$0xff]
        %v853 = vld [vmem:[%s181 + $0x410] sm:$0xff]
        %v854 = vld [vmem:[%s181 + $0x418] sm:$0xff]
        %v855 = vld [vmem:[%s181 + $0x420] sm:$0xff]
        %v856 = vld [vmem:[%s181 + $0x428] sm:$0xff]
        %v857 = vld [vmem:[%s181 + $0x430] sm:$0xff]
        %v858 = vld [vmem:[%s181 + $0x438] sm:$0xff]
        %v859 = vld [vmem:[%s181 + $0x440] sm:$0xff]
        %v860 = vld [vmem:[%s181 + $0x448] sm:$0xff]
        %v861 = vld [vmem:[%s181 + $0x450] sm:$0xff]
        %v862 = vld [vmem:[%s181 + $0x458] sm:$0xff]
        %v863 = vld [vmem:[%s181 + $0x460] sm:$0xff]
        %v864 = vld [vmem:[%s181 + $0x468] sm:$0xff]
        %v865 = vld [vmem:[%s181 + $0x470] sm:$0xff]
        %v866 = vld [vmem:[%s181 + $0x478] sm:$0xff]
        %v867 = vld [vmem:[%s181 + $0x480] sm:$0xff]
        %v868 = vld [vmem:[%s181 + $0x488] sm:$0xff]
        %v869 = vld [vmem:[%s181 + $0x490] sm:$0xff]
        %v870 = vld [vmem:[%s181 + $0x498] sm:$0xff]
        %v871 = vld [vmem:[%s181 + $0x4a0] sm:$0xff]
        %v872 = vld [vmem:[%s181 + $0x4a8] sm:$0xff]
        %v873 = vld [vmem:[%s181 + $0x4b0] sm:$0xff]
        %v874 = vld [vmem:[%s181 + $0x4b8] sm:$0xff]
        %v875 = vld [vmem:[%s181 + $0x4c0] sm:$0xff]
        %v876 = vld [vmem:[%s181 + $0x4c8] sm:$0xff]
        %v877 = vld [vmem:[%s181 + $0x4d0] sm:$0xff]
        %v878 = vld [vmem:[%s181 + $0x4d8] sm:$0xff]
        %v879 = vld [vmem:[%s181 + $0x4e0] sm:$0xff]
        %v880 = vld [vmem:[%s181 + $0x4e8] sm:$0xff]
        %v881 = vld [vmem:[%s181 + $0x4f0] sm:$0xff]
        %v882 = vld [vmem:[%s181 + $0x4f8] sm:$0xff]
        %v883 = vld [vmem:[%s181 + $0x500] sm:$0xff]
        %v884 = vld [vmem:[%s181 + $0x508] sm:$0xff]
        %v885 = vld [vmem:[%s181 + $0x510] sm:$0xff]
        %v886 = vld [vmem:[%s181 + $0x518] sm:$0xff]
        %v887 = vld [vmem:[%s181 + $0x520] sm:$0xff]
        %v888 = vld [vmem:[%s181 + $0x528] sm:$0xff]
        %v889 = vld [vmem:[%s181 + $0x530] sm:$0xff]
        %v890 = vld [vmem:[%s181 + $0x538] sm:$0xff]
        %v891 = vld [vmem:[%s181 + $0x540] sm:$0xff]
        %v892 = vld [vmem:[%s181 + $0x548] sm:$0xff]
        %v893 = vld [vmem:[%s181 + $0x550] sm:$0xff]
        %v894 = vld [vmem:[%s181 + $0x558] sm:$0xff]
        %v895 = vld [vmem:[%s181 + $0x560] sm:$0xff]
        %v896 = vld [vmem:[%s181 + $0x568] sm:$0xff]
        %v897 = vld [vmem:[%s181 + $0x570] sm:$0xff]
        %v898 = vld [vmem:[%s181 + $0x578] sm:$0xff]
        %v899 = vld [vmem:[%s181 + $0x580] sm:$0xff]
        %v900 = vld [vmem:[%s181 + $0x588] sm:$0xff]
        %v901 = vld [vmem:[%s181 + $0x590] sm:$0xff]
        %v902 = vld [vmem:[%s181 + $0x598] sm:$0xff]
        %v903 = vld [vmem:[%s181 + $0x5a0] sm:$0xff]
        %v904 = vld [vmem:[%s181 + $0x5a8] sm:$0xff]
        %v905 = vld [vmem:[%s181 + $0x5b0] sm:$0xff]
        %v906 = vld [vmem:[%s181 + $0x5b8] sm:$0xff]
        %v907 = vld [vmem:[%s181 + $0x5c0] sm:$0xff]
        %v908 = vld [vmem:[%s181 + $0x5c8] sm:$0xff]
        %v909 = vld [vmem:[%s181 + $0x5d0] sm:$0xff]
        %v910 = vld [vmem:[%s181 + $0x5d8] sm:$0xff]
        %v911 = vld [vmem:[%s181 + $0x5e0] sm:$0xff]
        %v912 = vld [vmem:[%s181 + $0x5e8] sm:$0xff]
        %v913 = vld [vmem:[%s181 + $0x5f0] sm:$0xff]
        %v914 = vld [vmem:[%s181 + $0x5f8] sm:$0xff]
        %v915 = vld [vmem:[%s181 + $0x600] sm:$0xff]
        %v916 = vld [vmem:[%s181 + $0x608] sm:$0xff]
        %v917 = vld [vmem:[%s181 + $0x610] sm:$0xff]
        %v918 = vld [vmem:[%s181 + $0x618] sm:$0xff]
        %v919 = vld [vmem:[%s181 + $0x620] sm:$0xff]
        %v920 = vld [vmem:[%s181 + $0x628] sm:$0xff]
        %v921 = vld [vmem:[%s181 + $0x630] sm:$0xff]
        %v922 = vld [vmem:[%s181 + $0x638] sm:$0xff]
        %v923 = vld [vmem:[%s181 + $0x640] sm:$0xff]
        %v924 = vld [vmem:[%s181 + $0x648] sm:$0xff]
        %v925 = vld [vmem:[%s181 + $0x650] sm:$0xff]
        %v926 = vld [vmem:[%s181 + $0x658] sm:$0xff]
        %v927 = vld [vmem:[%s181 + $0x660] sm:$0xff]
        %v928 = vld [vmem:[%s181 + $0x668] sm:$0xff]
        %v929 = vld [vmem:[%s181 + $0x670] sm:$0xff]
        %v930 = vld [vmem:[%s181 + $0x678] sm:$0xff]
        %v931 = vld [vmem:[%s181 + $0x680] sm:$0xff]
        %v932 = vld [vmem:[%s181 + $0x688] sm:$0xff]
        %v933 = vld [vmem:[%s181 + $0x690] sm:$0xff]
        %v934 = vld [vmem:[%s181 + $0x698] sm:$0xff]
        %v935 = vld [vmem:[%s181 + $0x6a0] sm:$0xff]
        %v936 = vld [vmem:[%s181 + $0x6a8] sm:$0xff]
        %v937 = vld [vmem:[%s181 + $0x6b0] sm:$0xff]
        %v938 = vld [vmem:[%s181 + $0x6b8] sm:$0xff]
        %v939 = vld [vmem:[%s181 + $0x6c0] sm:$0xff]
        %v940 = vld [vmem:[%s181 + $0x6c8] sm:$0xff]
        %v941 = vld [vmem:[%s181 + $0x6d0] sm:$0xff]
        %v942 = vld [vmem:[%s181 + $0x6d8] sm:$0xff]
        %v943 = vld [vmem:[%s181 + $0x6e0] sm:$0xff]
        %v944 = vld [vmem:[%s181 + $0x6e8] sm:$0xff]
        %v945 = vld [vmem:[%s181 + $0x6f0] sm:$0xff]
        %v946 = vld [vmem:[%s181 + $0x6f8] sm:$0xff]
        %v947 = vld [vmem:[%s181 + $0x700] sm:$0xff]
        %v948 = vld [vmem:[%s181 + $0x708] sm:$0xff]
        %v949 = vld [vmem:[%s181 + $0x710] sm:$0xff]
        %v950 = vld [vmem:[%s181 + $0x718] sm:$0xff]
        %v951 = vld [vmem:[%s181 + $0x720] sm:$0xff]
        %v952 = vld [vmem:[%s181 + $0x728] sm:$0xff]
        %v953 = vld [vmem:[%s181 + $0x730] sm:$0xff]
        %v954 = vld [vmem:[%s181 + $0x738] sm:$0xff]
        %v955 = vld [vmem:[%s181 + $0x740] sm:$0xff]
        %v956 = vld [vmem:[%s181 + $0x748] sm:$0xff]
        %v957 = vld [vmem:[%s181 + $0x750] sm:$0xff]
        %v958 = vld [vmem:[%s181 + $0x758] sm:$0xff]
        %v959 = vld [vmem:[%s181 + $0x760] sm:$0xff]
        %v960 = vld [vmem:[%s181 + $0x768] sm:$0xff]
        %v961 = vld [vmem:[%s181 + $0x770] sm:$0xff]
        %v962 = vld [vmem:[%s181 + $0x778] sm:$0xff]
        %v963 = vld [vmem:[%s181 + $0x780] sm:$0xff]
        %v964 = vld [vmem:[%s181 + $0x788] sm:$0xff]
        %v965 = vld [vmem:[%s181 + $0x790] sm:$0xff]
        %v966 = vld [vmem:[%s181 + $0x798] sm:$0xff]
        %v967 = vld [vmem:[%s181 + $0x7a0] sm:$0xff]
        %v968 = vld [vmem:[%s181 + $0x7a8] sm:$0xff]
        %v969 = vld [vmem:[%s181 + $0x7b0] sm:$0xff]
        %v970 = vld [vmem:[%s181 + $0x7b8] sm:$0xff]
        %v971 = vld [vmem:[%s181 + $0x7c0] sm:$0xff]
        %v972 = vld [vmem:[%s181 + $0x7c8] sm:$0xff]
        %v973 = vld [vmem:[%s181 + $0x7d0] sm:$0xff]
        %v974 = vld [vmem:[%s181 + $0x7d8] sm:$0xff]
        %v975 = vld [vmem:[%s181 + $0x7e0] sm:$0xff]
        %v976 = vld [vmem:[%s181 + $0x7e8] sm:$0xff]
        %v977 = vld [vmem:[%s181 + $0x7f0] sm:$0xff]
        %v978 = vld [vmem:[%s181 + $0x7f8] sm:$0xff]
        %v979 = vld [vmem:[%s181 + $0x800] sm:$0xff]
        %v980 = vld [vmem:[%s181 + $0x808] sm:$0xff]
        %v981 = vld [vmem:[%s181 + $0x810] sm:$0xff]
        %v982 = vld [vmem:[%s181 + $0x818] sm:$0xff]
        %v983 = vld [vmem:[%s181 + $0x820] sm:$0xff]
        %v984 = vld [vmem:[%s181 + $0x828] sm:$0xff]
        %v985 = vld [vmem:[%s181 + $0x830] sm:$0xff]
        %v986 = vld [vmem:[%s181 + $0x838] sm:$0xff]
        %v987 = vld [vmem:[%s181 + $0x840] sm:$0xff]
        %v988 = vld [vmem:[%s181 + $0x848] sm:$0xff]
        %v989 = vld [vmem:[%s181 + $0x850] sm:$0xff]
        %v990 = vld [vmem:[%s181 + $0x858] sm:$0xff]
        %v991 = vld [vmem:[%s181 + $0x860] sm:$0xff]
        %v992 = vld [vmem:[%s181 + $0x868] sm:$0xff]
        %v993 = vld [vmem:[%s181 + $0x870] sm:$0xff]
        %v994 = vld [vmem:[%s181 + $0x878] sm:$0xff]
        %v995 = vld [vmem:[%s181 + $0x880] sm:$0xff]
        %v996 = vld [vmem:[%s181 + $0x888] sm:$0xff]
        %v997 = vld [vmem:[%s181 + $0x890] sm:$0xff]
        %v998 = vld [vmem:[%s181 + $0x898] sm:$0xff]
        %v999 = vld [vmem:[%s181 + $0x8a0] sm:$0xff]
        %v1000 = vld [vmem:[%s181 + $0x8a8] sm:$0xff]
        %v1001 = vld [vmem:[%s181 + $0x8b0] sm:$0xff]
        %v1002 = vld [vmem:[%s181 + $0x8b8] sm:$0xff]
        %v1003 = vld [vmem:[%s181 + $0x8c0] sm:$0xff]
        %v1004 = vld [vmem:[%s181 + $0x8c8] sm:$0xff]
        %v1005 = vld [vmem:[%s181 + $0x8d0] sm:$0xff]
        %v1006 = vld [vmem:[%s181 + $0x8d8] sm:$0xff]
        %v1007 = vld [vmem:[%s181 + $0x8e0] sm:$0xff]
        %v1008 = vld [vmem:[%s181 + $0x8e8] sm:$0xff]
        %v1009 = vld [vmem:[%s181 + $0x8f0] sm:$0xff]
        %v1010 = vld [vmem:[%s181 + $0x8f8] sm:$0xff]
        %v1011 = vld [vmem:[%s181 + $0x900] sm:$0xff]
        %v1012 = vld [vmem:[%s181 + $0x908] sm:$0xff]
        %v1013 = vld [vmem:[%s181 + $0x910] sm:$0xff]
        %v1014 = vld [vmem:[%s181 + $0x918] sm:$0xff]
        %v1015 = vld [vmem:[%s181 + $0x920] sm:$0xff]
        %v1016 = vld [vmem:[%s181 + $0x928] sm:$0xff]
        %v1017 = vld [vmem:[%s181 + $0x930] sm:$0xff]
        %v1018 = vld [vmem:[%s181 + $0x938] sm:$0xff]
        %v1019 = vld [vmem:[%s181 + $0x940] sm:$0xff]
        %v1020 = vld [vmem:[%s181 + $0x948] sm:$0xff]
        %v1021 = vld [vmem:[%s181 + $0x950] sm:$0xff]
        %v1022 = vld [vmem:[%s181 + $0x958] sm:$0xff]
        %v1023 = vld [vmem:[%s181 + $0x960] sm:$0xff]
        %v1024 = vld [vmem:[%s181 + $0x968] sm:$0xff]
        %v1025 = vld [vmem:[%s181 + $0x970] sm:$0xff]
        %v1026 = vld [vmem:[%s181 + $0x978] sm:$0xff]
        %v1027 = vld [vmem:[%s181 + $0x980] sm:$0xff]
        %v1028 = vld [vmem:[%s181 + $0x988] sm:$0xff]
        %v1029 = vld [vmem:[%s181 + $0x990] sm:$0xff]
        %v1030 = vld [vmem:[%s181 + $0x998] sm:$0xff]
        %v1031 = vld [vmem:[%s181 + $0x9a0] sm:$0xff]
        %v1032 = vld [vmem:[%s181 + $0x9a8] sm:$0xff]
        %v1033 = vld [vmem:[%s181 + $0x9b0] sm:$0xff]
        %v1034 = vld [vmem:[%s181 + $0x9b8] sm:$0xff]
        %v1035 = vld [vmem:[%s181 + $0x9c0] sm:$0xff]
        %v1036 = vld [vmem:[%s181 + $0x9c8] sm:$0xff]
        %v1037 = vld [vmem:[%s181 + $0x9d0] sm:$0xff]
        %v1038 = vld [vmem:[%s181 + $0x9d8] sm:$0xff]
        %v1039 = vld [vmem:[%s181 + $0x9e0] sm:$0xff]
        %v1040 = vld [vmem:[%s181 + $0x9e8] sm:$0xff]
        %v1041 = vld [vmem:[%s181 + $0x9f0] sm:$0xff]
        %v1042 = vld [vmem:[%s181 + $0x9f8] sm:$0xff]
        %v1043 = vld [vmem:[%s181 + $0xa00] sm:$0xff]
        %v1044 = vld [vmem:[%s181 + $0xa08] sm:$0xff]
        %v1045 = vld [vmem:[%s181 + $0xa10] sm:$0xff]
        %v1046 = vld [vmem:[%s181 + $0xa18] sm:$0xff]
        %v1047 = vld [vmem:[%s181 + $0xa20] sm:$0xff]
        %v1048 = vld [vmem:[%s181 + $0xa28] sm:$0xff]
        %v1049 = vld [vmem:[%s181 + $0xa30] sm:$0xff]
        %v1050 = vld [vmem:[%s181 + $0xa38] sm:$0xff]
        %v1051 = vld [vmem:[%s181 + $0xa40] sm:$0xff]
        %v1052 = vld [vmem:[%s181 + $0xa48] sm:$0xff]
        %v1053 = vld [vmem:[%s181 + $0xa50] sm:$0xff]
        %v1054 = vld [vmem:[%s181 + $0xa58] sm:$0xff]
        %v1055 = vld [vmem:[%s181 + $0xa60] sm:$0xff]
        %v1056 = vld [vmem:[%s181 + $0xa68] sm:$0xff]
        %v1057 = vld [vmem:[%s181 + $0xa70] sm:$0xff]
        %v1058 = vld [vmem:[%s181 + $0xa78] sm:$0xff]
        %v1059 = vld [vmem:[%s181 + $0xa80] sm:$0xff]
        %v1060 = vld [vmem:[%s181 + $0xa88] sm:$0xff]
        %v1061 = vld [vmem:[%s181 + $0xa90] sm:$0xff]
        %v1062 = vld [vmem:[%s181 + $0xa98] sm:$0xff]
        %v1063 = vld [vmem:[%s181 + $0xaa0] sm:$0xff]
        %v1064 = vld [vmem:[%s181 + $0xaa8] sm:$0xff]
        %v1065 = vld [vmem:[%s181 + $0xab0] sm:$0xff]
        %v1066 = vld [vmem:[%s181 + $0xab8] sm:$0xff]
        %v1067 = vld [vmem:[%s181 + $0xac0] sm:$0xff]
        %v1068 = vld [vmem:[%s181 + $0xac8] sm:$0xff]
        %v1069 = vld [vmem:[%s181 + $0xad0] sm:$0xff]
        %v1070 = vld [vmem:[%s181 + $0xad8] sm:$0xff]
        %v1071 = vld [vmem:[%s181 + $0xae0] sm:$0xff]
        %v1072 = vld [vmem:[%s181 + $0xae8] sm:$0xff]
        %v1073 = vld [vmem:[%s181 + $0xaf0] sm:$0xff]
        %v1074 = vld [vmem:[%s181 + $0xaf8] sm:$0xff]
        %v1075 = vld [vmem:[%s181 + $0xb00] sm:$0xff]
        %v1076 = vld [vmem:[%s181 + $0xb08] sm:$0xff]
        %v1077 = vld [vmem:[%s181 + $0xb10] sm:$0xff]
        %v1078 = vld [vmem:[%s181 + $0xb18] sm:$0xff]
        %v1079 = vld [vmem:[%s181 + $0xb20] sm:$0xff]
        %v1080 = vld [vmem:[%s181 + $0xb28] sm:$0xff]
        %v1081 = vld [vmem:[%s181 + $0xb30] sm:$0xff]
        %v1082 = vld [vmem:[%s181 + $0xb38] sm:$0xff]
        %v1083 = vld [vmem:[%s181 + $0xb40] sm:$0xff]
        %v1084 = vld [vmem:[%s181 + $0xb48] sm:$0xff]
        %v1085 = vld [vmem:[%s181 + $0xb50] sm:$0xff]
        %v1086 = vld [vmem:[%s181 + $0xb58] sm:$0xff]
        %v1087 = vld [vmem:[%s181 + $0xb60] sm:$0xff]
        %v1088 = vld [vmem:[%s181 + $0xb68] sm:$0xff]
        %v1089 = vld [vmem:[%s181 + $0xb70] sm:$0xff]
        %v1090 = vld [vmem:[%s181 + $0xb78] sm:$0xff]
        %v1091 = vld [vmem:[%s181 + $0xb80] sm:$0xff]
        %v1092 = vld [vmem:[%s181 + $0xb88] sm:$0xff]
        %v1093 = vld [vmem:[%s181 + $0xb90] sm:$0xff]
        %v1094 = vld [vmem:[%s181 + $0xb98] sm:$0xff]
        %v1095 = vld [vmem:[%s181 + $0xba0] sm:$0xff]
        %v1096 = vld [vmem:[%s181 + $0xba8] sm:$0xff]
        %v1097 = vld [vmem:[%s181 + $0xbb0] sm:$0xff]
        %v1098 = vld [vmem:[%s181 + $0xbb8] sm:$0xff]
        %v1099 = vld [vmem:[%s181 + $0xbc0] sm:$0xff]
        %v1100 = vld [vmem:[%s181 + $0xbc8] sm:$0xff]
        %v1101 = vld [vmem:[%s181 + $0xbd0] sm:$0xff]
        %v1102 = vld [vmem:[%s181 + $0xbd8] sm:$0xff]
        %v1103 = vld [vmem:[%s181 + $0xbe0] sm:$0xff]
        %v1104 = vld [vmem:[%s181 + $0xbe8] sm:$0xff]
        %v1105 = vld [vmem:[%s181 + $0xbf0] sm:$0xff]
        %v1106 = vld [vmem:[%s181 + $0xbf8] sm:$0xff]
        %v1107 = vld [vmem:[%s181 + $0xc00] sm:$0xff]
        %v1108 = vld [vmem:[%s181 + $0xc08] sm:$0xff]
        %v1109 = vld [vmem:[%s181 + $0xc10] sm:$0xff]
        %v1110 = vld [vmem:[%s181 + $0xc18] sm:$0xff]
        %v1111 = vld [vmem:[%s181 + $0xc20] sm:$0xff]
        %v1112 = vld [vmem:[%s181 + $0xc28] sm:$0xff]
        %v1113 = vld [vmem:[%s181 + $0xc30] sm:$0xff]
        %v1114 = vld [vmem:[%s181 + $0xc38] sm:$0xff]
        %v1115 = vld [vmem:[%s181 + $0xc40] sm:$0xff]
        %v1116 = vld [vmem:[%s181 + $0xc48] sm:$0xff]
        %v1117 = vld [vmem:[%s181 + $0xc50] sm:$0xff]
        %v1118 = vld [vmem:[%s181 + $0xc58] sm:$0xff]
        %v1119 = vld [vmem:[%s181 + $0xc60] sm:$0xff]
        %v1120 = vld [vmem:[%s181 + $0xc68] sm:$0xff]
        %v1121 = vld [vmem:[%s181 + $0xc70] sm:$0xff]
        %v1122 = vld [vmem:[%s181 + $0xc78] sm:$0xff]
        %v1123 = vld [vmem:[%s181 + $0xc80] sm:$0xff]
        %v1124 = vld [vmem:[%s181 + $0xc88] sm:$0xff]
        %v1125 = vld [vmem:[%s181 + $0xc90] sm:$0xff]
        %v1126 = vld [vmem:[%s181 + $0xc98] sm:$0xff]
        %v1127 = vld [vmem:[%s181 + $0xca0] sm:$0xff]
        %v1128 = vld [vmem:[%s181 + $0xca8] sm:$0xff]
        %v1129 = vld [vmem:[%s181 + $0xcb0] sm:$0xff]
        %v1130 = vld [vmem:[%s181 + $0xcb8] sm:$0xff]
        %v1131 = vld [vmem:[%s181 + $0xcc0] sm:$0xff]
        %v1132 = vld [vmem:[%s181 + $0xcc8] sm:$0xff]
        %v1133 = vld [vmem:[%s181 + $0xcd0] sm:$0xff]
        %v1134 = vld [vmem:[%s181 + $0xcd8] sm:$0xff]
        %v1135 = vld [vmem:[%s181 + $0xce0] sm:$0xff]
        %v1136 = vld [vmem:[%s181 + $0xce8] sm:$0xff]
        %v1137 = vld [vmem:[%s181 + $0xcf0] sm:$0xff]
        %v1138 = vld [vmem:[%s181 + $0xcf8] sm:$0xff]
        %v1139 = vld [vmem:[%s181 + $0xd00] sm:$0xff]
        %v1140 = vld [vmem:[%s181 + $0xd08] sm:$0xff]
        %v1141 = vld [vmem:[%s181 + $0xd10] sm:$0xff]
        %v1142 = vld [vmem:[%s181 + $0xd18] sm:$0xff]
        %v1143 = vld [vmem:[%s181 + $0xd20] sm:$0xff]
        %v1144 = vld [vmem:[%s181 + $0xd28] sm:$0xff]
        %v1145 = vld [vmem:[%s181 + $0xd30] sm:$0xff]
        %v1146 = vld [vmem:[%s181 + $0xd38] sm:$0xff]
        %v1147 = vld [vmem:[%s181 + $0xd40] sm:$0xff]
        %v1148 = vld [vmem:[%s181 + $0xd48] sm:$0xff]
        %v1149 = vld [vmem:[%s181 + $0xd50] sm:$0xff]
        %v1150 = vld [vmem:[%s181 + $0xd58] sm:$0xff]
        %v1151 = vld [vmem:[%s181 + $0xd60] sm:$0xff]
        %v1152 = vld [vmem:[%s181 + $0xd68] sm:$0xff]
        %v1153 = vld [vmem:[%s181 + $0xd70] sm:$0xff]
        %v1154 = vld [vmem:[%s181 + $0xd78] sm:$0xff]
        %v1155 = vld [vmem:[%s181 + $0xd80] sm:$0xff]
        %v1156 = vld [vmem:[%s181 + $0xd88] sm:$0xff]
        %v1157 = vld [vmem:[%s181 + $0xd90] sm:$0xff]
        %v1158 = vld [vmem:[%s181 + $0xd98] sm:$0xff]
        %v1159 = vld [vmem:[%s181 + $0xda0] sm:$0xff]
        %v1160 = vld [vmem:[%s181 + $0xda8] sm:$0xff]
        %v1161 = vld [vmem:[%s181 + $0xdb0] sm:$0xff]
        %v1162 = vld [vmem:[%s181 + $0xdb8] sm:$0xff]
        %v1163 = vld [vmem:[%s181 + $0xdc0] sm:$0xff]
        %v1164 = vld [vmem:[%s181 + $0xdc8] sm:$0xff]
        %v1165 = vld [vmem:[%s181 + $0xdd0] sm:$0xff]
        %v1166 = vld [vmem:[%s181 + $0xdd8] sm:$0xff]
        %v1167 = vld [vmem:[%s181 + $0xde0] sm:$0xff]
        %v1168 = vld [vmem:[%s181 + $0xde8] sm:$0xff]
        %v1169 = vld [vmem:[%s181 + $0xdf0] sm:$0xff]
        %v1170 = vld [vmem:[%s181 + $0xdf8] sm:$0xff]
        %v1171 = vld [vmem:[%s181 + $0xe00] sm:$0xff]
        %v1172 = vld [vmem:[%s181 + $0xe08] sm:$0xff]
        %v1173 = vld [vmem:[%s181 + $0xe10] sm:$0xff]
        %v1174 = vld [vmem:[%s181 + $0xe18] sm:$0xff]
        %v1175 = vld [vmem:[%s181 + $0xe20] sm:$0xff]
        %v1176 = vld [vmem:[%s181 + $0xe28] sm:$0xff]
        %v1177 = vld [vmem:[%s181 + $0xe30] sm:$0xff]
        %v1178 = vld [vmem:[%s181 + $0xe38] sm:$0xff]
        %v1179 = vld [vmem:[%s181 + $0xe40] sm:$0xff]
        %v1180 = vld [vmem:[%s181 + $0xe48] sm:$0xff]
        %v1181 = vld [vmem:[%s181 + $0xe50] sm:$0xff]
        %v1182 = vld [vmem:[%s181 + $0xe58] sm:$0xff]
        %v1183 = vld [vmem:[%s181 + $0xe60] sm:$0xff]
        %v1184 = vld [vmem:[%s181 + $0xe68] sm:$0xff]
        %v1185 = vld [vmem:[%s181 + $0xe70] sm:$0xff]
        %v1186 = vld [vmem:[%s181 + $0xe78] sm:$0xff]
        %v1187 = vld [vmem:[%s181 + $0xe80] sm:$0xff]
        %v1188 = vld [vmem:[%s181 + $0xe88] sm:$0xff]
        %v1189 = vld [vmem:[%s181 + $0xe90] sm:$0xff]
        %v1190 = vld [vmem:[%s181 + $0xe98] sm:$0xff]
        %v1191 = vld [vmem:[%s181 + $0xea0] sm:$0xff]
        %v1192 = vld [vmem:[%s181 + $0xea8] sm:$0xff]
        %v1193 = vld [vmem:[%s181 + $0xeb0] sm:$0xff]
        %v1194 = vld [vmem:[%s181 + $0xeb8] sm:$0xff]
        %v1195 = vld [vmem:[%s181 + $0xec0] sm:$0xff]
        %v1196 = vld [vmem:[%s181 + $0xec8] sm:$0xff]
        %v1197 = vld [vmem:[%s181 + $0xed0] sm:$0xff]
        %v1198 = vld [vmem:[%s181 + $0xed8] sm:$0xff]
        %v1199 = vld [vmem:[%s181 + $0xee0] sm:$0xff]
        %v1200 = vld [vmem:[%s181 + $0xee8] sm:$0xff]
        %v1201 = vld [vmem:[%s181 + $0xef0] sm:$0xff]
        %v1202 = vld [vmem:[%s181 + $0xef8] sm:$0xff]
        %v1203 = vld [vmem:[%s181 + $0xf00] sm:$0xff]
        %v1204 = vld [vmem:[%s181 + $0xf08] sm:$0xff]
        %v1205 = vld [vmem:[%s181 + $0xf10] sm:$0xff]
        %v1206 = vld [vmem:[%s181 + $0xf18] sm:$0xff]
        %v1207 = vld [vmem:[%s181 + $0xf20] sm:$0xff]
        %v1208 = vld [vmem:[%s181 + $0xf28] sm:$0xff]
        %v1209 = vld [vmem:[%s181 + $0xf30] sm:$0xff]
        %v1210 = vld [vmem:[%s181 + $0xf38] sm:$0xff]
        %v1211 = vld [vmem:[%s181 + $0xf40] sm:$0xff]
        %v1212 = vld [vmem:[%s181 + $0xf48] sm:$0xff]
        %v1213 = vld [vmem:[%s181 + $0xf50] sm:$0xff]
        %v1214 = vld [vmem:[%s181 + $0xf58] sm:$0xff]
        %v1215 = vld [vmem:[%s181 + $0xf60] sm:$0xff]
        %v1216 = vld [vmem:[%s181 + $0xf68] sm:$0xff]
        %v1217 = vld [vmem:[%s181 + $0xf70] sm:$0xff]
        %v1218 = vld [vmem:[%s181 + $0xf78] sm:$0xff]
        %v1219 = vld [vmem:[%s181 + $0xf80] sm:$0xff]
        %v1220 = vld [vmem:[%s181 + $0xf88] sm:$0xff]
        %v1221 = vld [vmem:[%s181 + $0xf90] sm:$0xff]
        %v1222 = vld [vmem:[%s181 + $0xf98] sm:$0xff]
        %v1223 = vld [vmem:[%s181 + $0xfa0] sm:$0xff]
        %v1224 = vld [vmem:[%s181 + $0xfa8] sm:$0xff]
        %v1225 = vld [vmem:[%s181 + $0xfb0] sm:$0xff]
        %v1226 = vld [vmem:[%s181 + $0xfb8] sm:$0xff]
        %v1227 = vld [vmem:[%s181 + $0xfc0] sm:$0xff]
        %v1228 = vld [vmem:[%s181 + $0xfc8] sm:$0xff]
        %v1229 = vld [vmem:[%s181 + $0xfd0] sm:$0xff]
        %v1230 = vld [vmem:[%s181 + $0xfd8] sm:$0xff]
        %v1231 = vld [vmem:[%s181 + $0xfe0] sm:$0xff]
        %v1232 = vld [vmem:[%s181 + $0xfe8] sm:$0xff]
        %v1233 = vld [vmem:[%s181 + $0xff0] sm:$0xff]
        %v1234 = vld [vmem:[%s181 + $0xff8] sm:$0xff]
        %v1235 = vsub.f32 %v211, %v723
        %v1236 = vsub.f32 %v212, %v724
        %v1237 = vsub.f32 %v213, %v725
        %v1238 = vsub.f32 %v214, %v726
        %v1239 = vsub.f32 %v215, %v727
        %v1240 = vsub.f32 %v216, %v728
        %v1241 = vsub.f32 %v217, %v729
        %v1242 = vsub.f32 %v218, %v730
        %v1243 = vsub.f32 %v219, %v731
        %v1244 = vsub.f32 %v220, %v732
        %v1245 = vsub.f32 %v221, %v733
        %v1246 = vsub.f32 %v222, %v734
        %v1247 = vsub.f32 %v223, %v735
        %v1248 = vsub.f32 %v224, %v736
        %v1249 = vsub.f32 %v225, %v737
        %v1250 = vsub.f32 %v226, %v738
        %v1251 = vsub.f32 %v227, %v739
        %v1252 = vsub.f32 %v228, %v740
        %v1253 = vsub.f32 %v229, %v741
        %v1254 = vsub.f32 %v230, %v742
        %v1255 = vsub.f32 %v231, %v743
        %v1256 = vsub.f32 %v232, %v744
        %v1257 = vsub.f32 %v233, %v745
        %v1258 = vsub.f32 %v234, %v746
        %v1259 = vsub.f32 %v235, %v747
        %v1260 = vsub.f32 %v236, %v748
        %v1261 = vsub.f32 %v237, %v749
        %v1262 = vsub.f32 %v238, %v750
        %v1263 = vsub.f32 %v239, %v751
        %v1264 = vsub.f32 %v240, %v752
        %v1265 = vsub.f32 %v241, %v753
        %v1266 = vsub.f32 %v242, %v754
        %v1267 = vsub.f32 %v243, %v755
        %v1268 = vsub.f32 %v244, %v756
        %v1269 = vsub.f32 %v245, %v757
        %v1270 = vsub.f32 %v246, %v758
        %v1271 = vsub.f32 %v247, %v759
        %v1272 = vsub.f32 %v248, %v760
        %v1273 = vsub.f32 %v249, %v761
        %v1274 = vsub.f32 %v250, %v762
        %v1275 = vsub.f32 %v251, %v763
        %v1276 = vsub.f32 %v252, %v764
        %v1277 = vsub.f32 %v253, %v765
        %v1278 = vsub.f32 %v254, %v766
        %v1279 = vsub.f32 %v255, %v767
        %v1280 = vsub.f32 %v256, %v768
        %v1281 = vsub.f32 %v257, %v769
        %v1282 = vsub.f32 %v258, %v770
        %v1283 = vsub.f32 %v259, %v771
        %v1284 = vsub.f32 %v260, %v772
        %v1285 = vsub.f32 %v261, %v773
        %v1286 = vsub.f32 %v262, %v774
        %v1287 = vsub.f32 %v263, %v775
        %v1288 = vsub.f32 %v264, %v776
        %v1289 = vsub.f32 %v265, %v777
        %v1290 = vsub.f32 %v266, %v778
        %v1291 = vsub.f32 %v267, %v779
        %v1292 = vsub.f32 %v268, %v780
        %v1293 = vsub.f32 %v269, %v781
        %v1294 = vsub.f32 %v270, %v782
        %v1295 = vsub.f32 %v271, %v783
        %v1296 = vsub.f32 %v272, %v784
        %v1297 = vsub.f32 %v273, %v785
        %v1298 = vsub.f32 %v274, %v786
        %v1299 = vsub.f32 %v275, %v787
        %v1300 = vsub.f32 %v276, %v788
        %v1301 = vsub.f32 %v277, %v789
        %v1302 = vsub.f32 %v278, %v790
        %v1303 = vsub.f32 %v279, %v791
        %v1304 = vsub.f32 %v280, %v792
        %v1305 = vsub.f32 %v281, %v793
        %v1306 = vsub.f32 %v282, %v794
        %v1307 = vsub.f32 %v283, %v795
        %v1308 = vsub.f32 %v284, %v796
        %v1309 = vsub.f32 %v285, %v797
        %v1310 = vsub.f32 %v286, %v798
        %v1311 = vsub.f32 %v287, %v799
        %v1312 = vsub.f32 %v288, %v800
        %v1313 = vsub.f32 %v289, %v801
        %v1314 = vsub.f32 %v290, %v802
        %v1315 = vsub.f32 %v291, %v803
        %v1316 = vsub.f32 %v292, %v804
        %v1317 = vsub.f32 %v293, %v805
        %v1318 = vsub.f32 %v294, %v806
        %v1319 = vsub.f32 %v295, %v807
        %v1320 = vsub.f32 %v296, %v808
        %v1321 = vsub.f32 %v297, %v809
        %v1322 = vsub.f32 %v298, %v810
        %v1323 = vsub.f32 %v299, %v811
        %v1324 = vsub.f32 %v300, %v812
        %v1325 = vsub.f32 %v301, %v813
        %v1326 = vsub.f32 %v302, %v814
        %v1327 = vsub.f32 %v303, %v815
        %v1328 = vsub.f32 %v304, %v816
        %v1329 = vsub.f32 %v305, %v817
        %v1330 = vsub.f32 %v306, %v818
        %v1331 = vsub.f32 %v307, %v819
        %v1332 = vsub.f32 %v308, %v820
        %v1333 = vsub.f32 %v309, %v821
        %v1334 = vsub.f32 %v310, %v822
        %v1335 = vsub.f32 %v311, %v823
        %v1336 = vsub.f32 %v312, %v824
        %v1337 = vsub.f32 %v313, %v825
        %v1338 = vsub.f32 %v314, %v826
        %v1339 = vsub.f32 %v315, %v827
        %v1340 = vsub.f32 %v316, %v828
        %v1341 = vsub.f32 %v317, %v829
        %v1342 = vsub.f32 %v318, %v830
        %v1343 = vsub.f32 %v319, %v831
        %v1344 = vsub.f32 %v320, %v832
        %v1345 = vsub.f32 %v321, %v833
        %v1346 = vsub.f32 %v322, %v834
        %v1347 = vsub.f32 %v323, %v835
        %v1348 = vsub.f32 %v324, %v836
        %v1349 = vsub.f32 %v325, %v837
        %v1350 = vsub.f32 %v326, %v838
        %v1351 = vsub.f32 %v327, %v839
        %v1352 = vsub.f32 %v328, %v840
        %v1353 = vsub.f32 %v329, %v841
        %v1354 = vsub.f32 %v330, %v842
        %v1355 = vsub.f32 %v331, %v843
        %v1356 = vsub.f32 %v332, %v844
        %v1357 = vsub.f32 %v333, %v845
        %v1358 = vsub.f32 %v334, %v846
        %v1359 = vsub.f32 %v335, %v847
        %v1360 = vsub.f32 %v336, %v848
        %v1361 = vsub.f32 %v337, %v849
        %v1362 = vsub.f32 %v338, %v850
        %v1363 = vsub.f32 %v339, %v851
        %v1364 = vsub.f32 %v340, %v852
        %v1365 = vsub.f32 %v341, %v853
        %v1366 = vsub.f32 %v342, %v854
        %v1367 = vsub.f32 %v343, %v855
        %v1368 = vsub.f32 %v344, %v856
        %v1369 = vsub.f32 %v345, %v857
        %v1370 = vsub.f32 %v346, %v858
        %v1371 = vsub.f32 %v347, %v859
        %v1372 = vsub.f32 %v348, %v860
        %v1373 = vsub.f32 %v349, %v861
        %v1374 = vsub.f32 %v350, %v862
        %v1375 = vsub.f32 %v351, %v863
        %v1376 = vsub.f32 %v352, %v864
        %v1377 = vsub.f32 %v353, %v865
        %v1378 = vsub.f32 %v354, %v866
        %v1379 = vsub.f32 %v355, %v867
        %v1380 = vsub.f32 %v356, %v868
        %v1381 = vsub.f32 %v357, %v869
        %v1382 = vsub.f32 %v358, %v870
        %v1383 = vsub.f32 %v359, %v871
        %v1384 = vsub.f32 %v360, %v872
        %v1385 = vsub.f32 %v361, %v873
        %v1386 = vsub.f32 %v362, %v874
        %v1387 = vsub.f32 %v363, %v875
        %v1388 = vsub.f32 %v364, %v876
        %v1389 = vsub.f32 %v365, %v877
        %v1390 = vsub.f32 %v366, %v878
        %v1391 = vsub.f32 %v367, %v879
        %v1392 = vsub.f32 %v368, %v880
        %v1393 = vsub.f32 %v369, %v881
        %v1394 = vsub.f32 %v370, %v882
        %v1395 = vsub.f32 %v371, %v883
        %v1396 = vsub.f32 %v372, %v884
        %v1397 = vsub.f32 %v373, %v885
        %v1398 = vsub.f32 %v374, %v886
        %v1399 = vsub.f32 %v375, %v887
        %v1400 = vsub.f32 %v376, %v888
        %v1401 = vsub.f32 %v377, %v889
        %v1402 = vsub.f32 %v378, %v890
        %v1403 = vsub.f32 %v379, %v891
        %v1404 = vsub.f32 %v380, %v892
        %v1405 = vsub.f32 %v381, %v893
        %v1406 = vsub.f32 %v382, %v894
        %v1407 = vsub.f32 %v383, %v895
        %v1408 = vsub.f32 %v384, %v896
        %v1409 = vsub.f32 %v385, %v897
        %v1410 = vsub.f32 %v386, %v898
        %v1411 = vsub.f32 %v387, %v899
        %v1412 = vsub.f32 %v388, %v900
        %v1413 = vsub.f32 %v389, %v901
        %v1414 = vsub.f32 %v390, %v902
        %v1415 = vsub.f32 %v391, %v903
        %v1416 = vsub.f32 %v392, %v904
        %v1417 = vsub.f32 %v393, %v905
        %v1418 = vsub.f32 %v394, %v906
        %v1419 = vsub.f32 %v395, %v907
        %v1420 = vsub.f32 %v396, %v908
        %v1421 = vsub.f32 %v397, %v909
        %v1422 = vsub.f32 %v398, %v910
        %v1423 = vsub.f32 %v399, %v911
        %v1424 = vsub.f32 %v400, %v912
        %v1425 = vsub.f32 %v401, %v913
        %v1426 = vsub.f32 %v402, %v914
        %v1427 = vsub.f32 %v403, %v915
        %v1428 = vsub.f32 %v404, %v916
        %v1429 = vsub.f32 %v405, %v917
        %v1430 = vsub.f32 %v406, %v918
        %v1431 = vsub.f32 %v407, %v919
        %v1432 = vsub.f32 %v408, %v920
        %v1433 = vsub.f32 %v409, %v921
        %v1434 = vsub.f32 %v410, %v922
        %v1435 = vsub.f32 %v411, %v923
        %v1436 = vsub.f32 %v412, %v924
        %v1437 = vsub.f32 %v413, %v925
        %v1438 = vsub.f32 %v414, %v926
        %v1439 = vsub.f32 %v415, %v927
        %v1440 = vsub.f32 %v416, %v928
        %v1441 = vsub.f32 %v417, %v929
        %v1442 = vsub.f32 %v418, %v930
        %v1443 = vsub.f32 %v419, %v931
        %v1444 = vsub.f32 %v420, %v932
        %v1445 = vsub.f32 %v421, %v933
        %v1446 = vsub.f32 %v422, %v934
        %v1447 = vsub.f32 %v423, %v935
        %v1448 = vsub.f32 %v424, %v936
        %v1449 = vsub.f32 %v425, %v937
        %v1450 = vsub.f32 %v426, %v938
        %v1451 = vsub.f32 %v427, %v939
        %v1452 = vsub.f32 %v428, %v940
        %v1453 = vsub.f32 %v429, %v941
        %v1454 = vsub.f32 %v430, %v942
        %v1455 = vsub.f32 %v431, %v943
        %v1456 = vsub.f32 %v432, %v944
        %v1457 = vsub.f32 %v433, %v945
        %v1458 = vsub.f32 %v434, %v946
        %v1459 = vsub.f32 %v435, %v947
        %v1460 = vsub.f32 %v436, %v948
        %v1461 = vsub.f32 %v437, %v949
        %v1462 = vsub.f32 %v438, %v950
        %v1463 = vsub.f32 %v439, %v951
        %v1464 = vsub.f32 %v440, %v952
        %v1465 = vsub.f32 %v441, %v953
        %v1466 = vsub.f32 %v442, %v954
        %v1467 = vsub.f32 %v443, %v955
        %v1468 = vsub.f32 %v444, %v956
        %v1469 = vsub.f32 %v445, %v957
        %v1470 = vsub.f32 %v446, %v958
        %v1471 = vsub.f32 %v447, %v959
        %v1472 = vsub.f32 %v448, %v960
        %v1473 = vsub.f32 %v449, %v961
        %v1474 = vsub.f32 %v450, %v962
        %v1475 = vsub.f32 %v451, %v963
        %v1476 = vsub.f32 %v452, %v964
        %v1477 = vsub.f32 %v453, %v965
        %v1478 = vsub.f32 %v454, %v966
        %v1479 = vsub.f32 %v455, %v967
        %v1480 = vsub.f32 %v456, %v968
        %v1481 = vsub.f32 %v457, %v969
        %v1482 = vsub.f32 %v458, %v970
        %v1483 = vsub.f32 %v459, %v971
        %v1484 = vsub.f32 %v460, %v972
        %v1485 = vsub.f32 %v461, %v973
        %v1486 = vsub.f32 %v462, %v974
        %v1487 = vsub.f32 %v463, %v975
        %v1488 = vsub.f32 %v464, %v976
        %v1489 = vsub.f32 %v465, %v977
        %v1490 = vsub.f32 %v466, %v978
        %v1491 = vsub.f32 %v467, %v979
        %v1492 = vsub.f32 %v468, %v980
        %v1493 = vsub.f32 %v469, %v981
        %v1494 = vsub.f32 %v470, %v982
        %v1495 = vsub.f32 %v471, %v983
        %v1496 = vsub.f32 %v472, %v984
        %v1497 = vsub.f32 %v473, %v985
        %v1498 = vsub.f32 %v474, %v986
        %v1499 = vsub.f32 %v475, %v987
        %v1500 = vsub.f32 %v476, %v988
        %v1501 = vsub.f32 %v477, %v989
        %v1502 = vsub.f32 %v478, %v990
        %v1503 = vsub.f32 %v479, %v991
        %v1504 = vsub.f32 %v480, %v992
        %v1505 = vsub.f32 %v481, %v993
        %v1506 = vsub.f32 %v482, %v994
        %v1507 = vsub.f32 %v483, %v995
        %v1508 = vsub.f32 %v484, %v996
        %v1509 = vsub.f32 %v485, %v997
        %v1510 = vsub.f32 %v486, %v998
        %v1511 = vsub.f32 %v487, %v999
        %v1512 = vsub.f32 %v488, %v1000
        %v1513 = vsub.f32 %v489, %v1001
        %v1514 = vsub.f32 %v490, %v1002
        %v1515 = vsub.f32 %v491, %v1003
        %v1516 = vsub.f32 %v492, %v1004
        %v1517 = vsub.f32 %v493, %v1005
        %v1518 = vsub.f32 %v494, %v1006
        %v1519 = vsub.f32 %v495, %v1007
        %v1520 = vsub.f32 %v496, %v1008
        %v1521 = vsub.f32 %v497, %v1009
        %v1522 = vsub.f32 %v498, %v1010
        %v1523 = vsub.f32 %v499, %v1011
        %v1524 = vsub.f32 %v500, %v1012
        %v1525 = vsub.f32 %v501, %v1013
        %v1526 = vsub.f32 %v502, %v1014
        %v1527 = vsub.f32 %v503, %v1015
        %v1528 = vsub.f32 %v504, %v1016
        %v1529 = vsub.f32 %v505, %v1017
        %v1530 = vsub.f32 %v506, %v1018
        %v1531 = vsub.f32 %v507, %v1019
        %v1532 = vsub.f32 %v508, %v1020
        %v1533 = vsub.f32 %v509, %v1021
        %v1534 = vsub.f32 %v510, %v1022
        %v1535 = vsub.f32 %v511, %v1023
        %v1536 = vsub.f32 %v512, %v1024
        %v1537 = vsub.f32 %v513, %v1025
        %v1538 = vsub.f32 %v514, %v1026
        %v1539 = vsub.f32 %v515, %v1027
        %v1540 = vsub.f32 %v516, %v1028
        %v1541 = vsub.f32 %v517, %v1029
        %v1542 = vsub.f32 %v518, %v1030
        %v1543 = vsub.f32 %v519, %v1031
        %v1544 = vsub.f32 %v520, %v1032
        %v1545 = vsub.f32 %v521, %v1033
        %v1546 = vsub.f32 %v522, %v1034
        %v1547 = vsub.f32 %v523, %v1035
        %v1548 = vsub.f32 %v524, %v1036
        %v1549 = vsub.f32 %v525, %v1037
        %v1550 = vsub.f32 %v526, %v1038
        %v1551 = vsub.f32 %v527, %v1039
        %v1552 = vsub.f32 %v528, %v1040
        %v1553 = vsub.f32 %v529, %v1041
        %v1554 = vsub.f32 %v530, %v1042
        %v1555 = vsub.f32 %v531, %v1043
        %v1556 = vsub.f32 %v532, %v1044
        %v1557 = vsub.f32 %v533, %v1045
        %v1558 = vsub.f32 %v534, %v1046
        %v1559 = vsub.f32 %v535, %v1047
        %v1560 = vsub.f32 %v536, %v1048
        %v1561 = vsub.f32 %v537, %v1049
        %v1562 = vsub.f32 %v538, %v1050
        %v1563 = vsub.f32 %v539, %v1051
        %v1564 = vsub.f32 %v540, %v1052
        %v1565 = vsub.f32 %v541, %v1053
        %v1566 = vsub.f32 %v542, %v1054
        %v1567 = vsub.f32 %v543, %v1055
        %v1568 = vsub.f32 %v544, %v1056
        %v1569 = vsub.f32 %v545, %v1057
        %v1570 = vsub.f32 %v546, %v1058
        %v1571 = vsub.f32 %v547, %v1059
        %v1572 = vsub.f32 %v548, %v1060
        %v1573 = vsub.f32 %v549, %v1061
        %v1574 = vsub.f32 %v550, %v1062
        %v1575 = vsub.f32 %v551, %v1063
        %v1576 = vsub.f32 %v552, %v1064
        %v1577 = vsub.f32 %v553, %v1065
        %v1578 = vsub.f32 %v554, %v1066
        %v1579 = vsub.f32 %v555, %v1067
        %v1580 = vsub.f32 %v556, %v1068
        %v1581 = vsub.f32 %v557, %v1069
        %v1582 = vsub.f32 %v558, %v1070
        %v1583 = vsub.f32 %v559, %v1071
        %v1584 = vsub.f32 %v560, %v1072
        %v1585 = vsub.f32 %v561, %v1073
        %v1586 = vsub.f32 %v562, %v1074
        %v1587 = vsub.f32 %v563, %v1075
        %v1588 = vsub.f32 %v564, %v1076
        %v1589 = vsub.f32 %v565, %v1077
        %v1590 = vsub.f32 %v566, %v1078
        %v1591 = vsub.f32 %v567, %v1079
        %v1592 = vsub.f32 %v568, %v1080
        %v1593 = vsub.f32 %v569, %v1081
        %v1594 = vsub.f32 %v570, %v1082
        %v1595 = vsub.f32 %v571, %v1083
        %v1596 = vsub.f32 %v572, %v1084
        %v1597 = vsub.f32 %v573, %v1085
        %v1598 = vsub.f32 %v574, %v1086
        %v1599 = vsub.f32 %v575, %v1087
        %v1600 = vsub.f32 %v576, %v1088
        %v1601 = vsub.f32 %v577, %v1089
        %v1602 = vsub.f32 %v578, %v1090
        %v1603 = vsub.f32 %v579, %v1091
        %v1604 = vsub.f32 %v580, %v1092
        %v1605 = vsub.f32 %v581, %v1093
        %v1606 = vsub.f32 %v582, %v1094
        %v1607 = vsub.f32 %v583, %v1095
        %v1608 = vsub.f32 %v584, %v1096
        %v1609 = vsub.f32 %v585, %v1097
        %v1610 = vsub.f32 %v586, %v1098
        %v1611 = vsub.f32 %v587, %v1099
        %v1612 = vsub.f32 %v588, %v1100
        %v1613 = vsub.f32 %v589, %v1101
        %v1614 = vsub.f32 %v590, %v1102
        %v1615 = vsub.f32 %v591, %v1103
        %v1616 = vsub.f32 %v592, %v1104
        %v1617 = vsub.f32 %v593, %v1105
        %v1618 = vsub.f32 %v594, %v1106
        %v1619 = vsub.f32 %v595, %v1107
        %v1620 = vsub.f32 %v596, %v1108
        %v1621 = vsub.f32 %v597, %v1109
        %v1622 = vsub.f32 %v598, %v1110
        %v1623 = vsub.f32 %v599, %v1111
        %v1624 = vsub.f32 %v600, %v1112
        %v1625 = vsub.f32 %v601, %v1113
        %v1626 = vsub.f32 %v602, %v1114
        %v1627 = vsub.f32 %v603, %v1115
        %v1628 = vsub.f32 %v604, %v1116
        %v1629 = vsub.f32 %v605, %v1117
        %v1630 = vsub.f32 %v606, %v1118
        %v1631 = vsub.f32 %v607, %v1119
        %v1632 = vsub.f32 %v608, %v1120
        %v1633 = vsub.f32 %v609, %v1121
        %v1634 = vsub.f32 %v610, %v1122
        %v1635 = vsub.f32 %v611, %v1123
        %v1636 = vsub.f32 %v612, %v1124
        %v1637 = vsub.f32 %v613, %v1125
        %v1638 = vsub.f32 %v614, %v1126
        %v1639 = vsub.f32 %v615, %v1127
        %v1640 = vsub.f32 %v616, %v1128
        %v1641 = vsub.f32 %v617, %v1129
        %v1642 = vsub.f32 %v618, %v1130
        %v1643 = vsub.f32 %v619, %v1131
        %v1644 = vsub.f32 %v620, %v1132
        %v1645 = vsub.f32 %v621, %v1133
        %v1646 = vsub.f32 %v622, %v1134
        %v1647 = vsub.f32 %v623, %v1135
        %v1648 = vsub.f32 %v624, %v1136
        %v1649 = vsub.f32 %v625, %v1137
        %v1650 = vsub.f32 %v626, %v1138
        %v1651 = vsub.f32 %v627, %v1139
        %v1652 = vsub.f32 %v628, %v1140
        %v1653 = vsub.f32 %v629, %v1141
        %v1654 = vsub.f32 %v630, %v1142
        %v1655 = vsub.f32 %v631, %v1143
        %v1656 = vsub.f32 %v632, %v1144
        %v1657 = vsub.f32 %v633, %v1145
        %v1658 = vsub.f32 %v634, %v1146
        %v1659 = vsub.f32 %v635, %v1147
        %v1660 = vsub.f32 %v636, %v1148
        %v1661 = vsub.f32 %v637, %v1149
        %v1662 = vsub.f32 %v638, %v1150
        %v1663 = vsub.f32 %v639, %v1151
        %v1664 = vsub.f32 %v640, %v1152
        %v1665 = vsub.f32 %v641, %v1153
        %v1666 = vsub.f32 %v642, %v1154
        %v1667 = vsub.f32 %v643, %v1155
        %v1668 = vsub.f32 %v644, %v1156
        %v1669 = vsub.f32 %v645, %v1157
        %v1670 = vsub.f32 %v646, %v1158
        %v1671 = vsub.f32 %v647, %v1159
        %v1672 = vsub.f32 %v648, %v1160
        %v1673 = vsub.f32 %v649, %v1161
        %v1674 = vsub.f32 %v650, %v1162
        %v1675 = vsub.f32 %v651, %v1163
        %v1676 = vsub.f32 %v652, %v1164
        %v1677 = vsub.f32 %v653, %v1165
        %v1678 = vsub.f32 %v654, %v1166
        %v1679 = vsub.f32 %v655, %v1167
        %v1680 = vsub.f32 %v656, %v1168
        %v1681 = vsub.f32 %v657, %v1169
        %v1682 = vsub.f32 %v658, %v1170
        %v1683 = vsub.f32 %v659, %v1171
        %v1684 = vsub.f32 %v660, %v1172
        %v1685 = vsub.f32 %v661, %v1173
        %v1686 = vsub.f32 %v662, %v1174
        %v1687 = vsub.f32 %v663, %v1175
        %v1688 = vsub.f32 %v664, %v1176
        %v1689 = vsub.f32 %v665, %v1177
        %v1690 = vsub.f32 %v666, %v1178
        %v1691 = vsub.f32 %v667, %v1179
        %v1692 = vsub.f32 %v668, %v1180
        %v1693 = vsub.f32 %v669, %v1181
        %v1694 = vsub.f32 %v670, %v1182
        %v1695 = vsub.f32 %v671, %v1183
        %v1696 = vsub.f32 %v672, %v1184
        %v1697 = vsub.f32 %v673, %v1185
        %v1698 = vsub.f32 %v674, %v1186
        %v1699 = vsub.f32 %v675, %v1187
        %v1700 = vsub.f32 %v676, %v1188
        %v1701 = vsub.f32 %v677, %v1189
        %v1702 = vsub.f32 %v678, %v1190
        %v1703 = vsub.f32 %v679, %v1191
        %v1704 = vsub.f32 %v680, %v1192
        %v1705 = vsub.f32 %v681, %v1193
        %v1706 = vsub.f32 %v682, %v1194
        %v1707 = vsub.f32 %v683, %v1195
        %v1708 = vsub.f32 %v684, %v1196
        %v1709 = vsub.f32 %v685, %v1197
        %v1710 = vsub.f32 %v686, %v1198
        %v1711 = vsub.f32 %v687, %v1199
        %v1712 = vsub.f32 %v688, %v1200
        %v1713 = vsub.f32 %v689, %v1201
        %v1714 = vsub.f32 %v690, %v1202
        %v1715 = vsub.f32 %v691, %v1203
        %v1716 = vsub.f32 %v692, %v1204
        %v1717 = vsub.f32 %v693, %v1205
        %v1718 = vsub.f32 %v694, %v1206
        %v1719 = vsub.f32 %v695, %v1207
        %v1720 = vsub.f32 %v696, %v1208
        %v1721 = vsub.f32 %v697, %v1209
        %v1722 = vsub.f32 %v698, %v1210
        %v1723 = vsub.f32 %v699, %v1211
        %v1724 = vsub.f32 %v700, %v1212
        %v1725 = vsub.f32 %v701, %v1213
        %v1726 = vsub.f32 %v702, %v1214
        %v1727 = vsub.f32 %v703, %v1215
        %v1728 = vsub.f32 %v704, %v1216
        %v1729 = vsub.f32 %v705, %v1217
        %v1730 = vsub.f32 %v706, %v1218
        %v1731 = vsub.f32 %v707, %v1219
        %v1732 = vsub.f32 %v708, %v1220
        %v1733 = vsub.f32 %v709, %v1221
        %v1734 = vsub.f32 %v710, %v1222
        %v1735 = vsub.f32 %v711, %v1223
        %v1736 = vsub.f32 %v712, %v1224
        %v1737 = vsub.f32 %v713, %v1225
        %v1738 = vsub.f32 %v714, %v1226
        %v1739 = vsub.f32 %v715, %v1227
        %v1740 = vsub.f32 %v716, %v1228
        %v1741 = vsub.f32 %v717, %v1229
        %v1742 = vsub.f32 %v718, %v1230
        %v1743 = vsub.f32 %v719, %v1231
        %v1744 = vsub.f32 %v720, %v1232
        %v1745 = vsub.f32 %v721, %v1233
        %v1746 = vsub.f32 %v722, %v1234
        %v1747 = vand.u32 2147483647, %v1235
        %v1748 = vand.u32 2147483647, %v1236
        %v1749 = vand.u32 2147483647, %v1237
        %v1750 = vand.u32 2147483647, %v1238
        %v1751 = vand.u32 2147483647, %v1239
        %v1752 = vand.u32 2147483647, %v1240
        %v1753 = vand.u32 2147483647, %v1241
        %v1754 = vand.u32 2147483647, %v1242
        %v1755 = vand.u32 2147483647, %v1243
        %v1756 = vand.u32 2147483647, %v1244
        %v1757 = vand.u32 2147483647, %v1245
        %v1758 = vand.u32 2147483647, %v1246
        %v1759 = vand.u32 2147483647, %v1247
        %v1760 = vand.u32 2147483647, %v1248
        %v1761 = vand.u32 2147483647, %v1249
        %v1762 = vand.u32 2147483647, %v1250
        %v1763 = vand.u32 2147483647, %v1251
        %v1764 = vand.u32 2147483647, %v1252
        %v1765 = vand.u32 2147483647, %v1253
        %v1766 = vand.u32 2147483647, %v1254
        %v1767 = vand.u32 2147483647, %v1255
        %v1768 = vand.u32 2147483647, %v1256
        %v1769 = vand.u32 2147483647, %v1257
        %v1770 = vand.u32 2147483647, %v1258
        %v1771 = vand.u32 2147483647, %v1259
        %v1772 = vand.u32 2147483647, %v1260
        %v1773 = vand.u32 2147483647, %v1261
        %v1774 = vand.u32 2147483647, %v1262
        %v1775 = vand.u32 2147483647, %v1263
        %v1776 = vand.u32 2147483647, %v1264
        %v1777 = vand.u32 2147483647, %v1265
        %v1778 = vand.u32 2147483647, %v1266
        %v1779 = vand.u32 2147483647, %v1267
        %v1780 = vand.u32 2147483647, %v1268
        %v1781 = vand.u32 2147483647, %v1269
        %v1782 = vand.u32 2147483647, %v1270
        %v1783 = vand.u32 2147483647, %v1271
        %v1784 = vand.u32 2147483647, %v1272
        %v1785 = vand.u32 2147483647, %v1273
        %v1786 = vand.u32 2147483647, %v1274
        %v1787 = vand.u32 2147483647, %v1275
        %v1788 = vand.u32 2147483647, %v1276
        %v1789 = vand.u32 2147483647, %v1277
        %v1790 = vand.u32 2147483647, %v1278
        %v1791 = vand.u32 2147483647, %v1279
        %v1792 = vand.u32 2147483647, %v1280
        %v1793 = vand.u32 2147483647, %v1281
        %v1794 = vand.u32 2147483647, %v1282
        %v1795 = vand.u32 2147483647, %v1283
        %v1796 = vand.u32 2147483647, %v1284
        %v1797 = vand.u32 2147483647, %v1285
        %v1798 = vand.u32 2147483647, %v1286
        %v1799 = vand.u32 2147483647, %v1287
        %v1800 = vand.u32 2147483647, %v1288
        %v1801 = vand.u32 2147483647, %v1289
        %v1802 = vand.u32 2147483647, %v1290
        %v1803 = vand.u32 2147483647, %v1291
        %v1804 = vand.u32 2147483647, %v1292
        %v1805 = vand.u32 2147483647, %v1293
        %v1806 = vand.u32 2147483647, %v1294
        %v1807 = vand.u32 2147483647, %v1295
        %v1808 = vand.u32 2147483647, %v1296
        %v1809 = vand.u32 2147483647, %v1297
        %v1810 = vand.u32 2147483647, %v1298
        %v1811 = vand.u32 2147483647, %v1299
        %v1812 = vand.u32 2147483647, %v1300
        %v1813 = vand.u32 2147483647, %v1301
        %v1814 = vand.u32 2147483647, %v1302
        %v1815 = vand.u32 2147483647, %v1303
        %v1816 = vand.u32 2147483647, %v1304
        %v1817 = vand.u32 2147483647, %v1305
        %v1818 = vand.u32 2147483647, %v1306
        %v1819 = vand.u32 2147483647, %v1307
        %v1820 = vand.u32 2147483647, %v1308
        %v1821 = vand.u32 2147483647, %v1309
        %v1822 = vand.u32 2147483647, %v1310
        %v1823 = vand.u32 2147483647, %v1311
        %v1824 = vand.u32 2147483647, %v1312
        %v1825 = vand.u32 2147483647, %v1313
        %v1826 = vand.u32 2147483647, %v1314
        %v1827 = vand.u32 2147483647, %v1315
        %v1828 = vand.u32 2147483647, %v1316
        %v1829 = vand.u32 2147483647, %v1317
        %v1830 = vand.u32 2147483647, %v1318
        %v1831 = vand.u32 2147483647, %v1319
        %v1832 = vand.u32 2147483647, %v1320
        %v1833 = vand.u32 2147483647, %v1321
        %v1834 = vand.u32 2147483647, %v1322
        %v1835 = vand.u32 2147483647, %v1323
        %v1836 = vand.u32 2147483647, %v1324
        %v1837 = vand.u32 2147483647, %v1325
        %v1838 = vand.u32 2147483647, %v1326
        %v1839 = vand.u32 2147483647, %v1327
        %v1840 = vand.u32 2147483647, %v1328
        %v1841 = vand.u32 2147483647, %v1329
        %v1842 = vand.u32 2147483647, %v1330
        %v1843 = vand.u32 2147483647, %v1331
        %v1844 = vand.u32 2147483647, %v1332
        %v1845 = vand.u32 2147483647, %v1333
        %v1846 = vand.u32 2147483647, %v1334
        %v1847 = vand.u32 2147483647, %v1335
        %v1848 = vand.u32 2147483647, %v1336
        %v1849 = vand.u32 2147483647, %v1337
        %v1850 = vand.u32 2147483647, %v1338
        %v1851 = vand.u32 2147483647, %v1339
        %v1852 = vand.u32 2147483647, %v1340
        %v1853 = vand.u32 2147483647, %v1341
        %v1854 = vand.u32 2147483647, %v1342
        %v1855 = vand.u32 2147483647, %v1343
        %v1856 = vand.u32 2147483647, %v1344
        %v1857 = vand.u32 2147483647, %v1345
        %v1858 = vand.u32 2147483647, %v1346
        %v1859 = vand.u32 2147483647, %v1347
        %v1860 = vand.u32 2147483647, %v1348
        %v1861 = vand.u32 2147483647, %v1349
        %v1862 = vand.u32 2147483647, %v1350
        %v1863 = vand.u32 2147483647, %v1351
        %v1864 = vand.u32 2147483647, %v1352
        %v1865 = vand.u32 2147483647, %v1353
        %v1866 = vand.u32 2147483647, %v1354
        %v1867 = vand.u32 2147483647, %v1355
        %v1868 = vand.u32 2147483647, %v1356
        %v1869 = vand.u32 2147483647, %v1357
        %v1870 = vand.u32 2147483647, %v1358
        %v1871 = vand.u32 2147483647, %v1359
        %v1872 = vand.u32 2147483647, %v1360
        %v1873 = vand.u32 2147483647, %v1361
        %v1874 = vand.u32 2147483647, %v1362
        %v1875 = vand.u32 2147483647, %v1363
        %v1876 = vand.u32 2147483647, %v1364
        %v1877 = vand.u32 2147483647, %v1365
        %v1878 = vand.u32 2147483647, %v1366
        %v1879 = vand.u32 2147483647, %v1367
        %v1880 = vand.u32 2147483647, %v1368
        %v1881 = vand.u32 2147483647, %v1369
        %v1882 = vand.u32 2147483647, %v1370
        %v1883 = vand.u32 2147483647, %v1371
        %v1884 = vand.u32 2147483647, %v1372
        %v1885 = vand.u32 2147483647, %v1373
        %v1886 = vand.u32 2147483647, %v1374
        %v1887 = vand.u32 2147483647, %v1375
        %v1888 = vand.u32 2147483647, %v1376
        %v1889 = vand.u32 2147483647, %v1377
        %v1890 = vand.u32 2147483647, %v1378
        %v1891 = vand.u32 2147483647, %v1379
        %v1892 = vand.u32 2147483647, %v1380
        %v1893 = vand.u32 2147483647, %v1381
        %v1894 = vand.u32 2147483647, %v1382
        %v1895 = vand.u32 2147483647, %v1383
        %v1896 = vand.u32 2147483647, %v1384
        %v1897 = vand.u32 2147483647, %v1385
        %v1898 = vand.u32 2147483647, %v1386
        %v1899 = vand.u32 2147483647, %v1387
        %v1900 = vand.u32 2147483647, %v1388
        %v1901 = vand.u32 2147483647, %v1389
        %v1902 = vand.u32 2147483647, %v1390
        %v1903 = vand.u32 2147483647, %v1391
        %v1904 = vand.u32 2147483647, %v1392
        %v1905 = vand.u32 2147483647, %v1393
        %v1906 = vand.u32 2147483647, %v1394
        %v1907 = vand.u32 2147483647, %v1395
        %v1908 = vand.u32 2147483647, %v1396
        %v1909 = vand.u32 2147483647, %v1397
        %v1910 = vand.u32 2147483647, %v1398
        %v1911 = vand.u32 2147483647, %v1399
        %v1912 = vand.u32 2147483647, %v1400
        %v1913 = vand.u32 2147483647, %v1401
        %v1914 = vand.u32 2147483647, %v1402
        %v1915 = vand.u32 2147483647, %v1403
        %v1916 = vand.u32 2147483647, %v1404
        %v1917 = vand.u32 2147483647, %v1405
        %v1918 = vand.u32 2147483647, %v1406
        %v1919 = vand.u32 2147483647, %v1407
        %v1920 = vand.u32 2147483647, %v1408
        %v1921 = vand.u32 2147483647, %v1409
        %v1922 = vand.u32 2147483647, %v1410
        %v1923 = vand.u32 2147483647, %v1411
        %v1924 = vand.u32 2147483647, %v1412
        %v1925 = vand.u32 2147483647, %v1413
        %v1926 = vand.u32 2147483647, %v1414
        %v1927 = vand.u32 2147483647, %v1415
        %v1928 = vand.u32 2147483647, %v1416
        %v1929 = vand.u32 2147483647, %v1417
        %v1930 = vand.u32 2147483647, %v1418
        %v1931 = vand.u32 2147483647, %v1419
        %v1932 = vand.u32 2147483647, %v1420
        %v1933 = vand.u32 2147483647, %v1421
        %v1934 = vand.u32 2147483647, %v1422
        %v1935 = vand.u32 2147483647, %v1423
        %v1936 = vand.u32 2147483647, %v1424
        %v1937 = vand.u32 2147483647, %v1425
        %v1938 = vand.u32 2147483647, %v1426
        %v1939 = vand.u32 2147483647, %v1427
        %v1940 = vand.u32 2147483647, %v1428
        %v1941 = vand.u32 2147483647, %v1429
        %v1942 = vand.u32 2147483647, %v1430
        %v1943 = vand.u32 2147483647, %v1431
        %v1944 = vand.u32 2147483647, %v1432
        %v1945 = vand.u32 2147483647, %v1433
        %v1946 = vand.u32 2147483647, %v1434
        %v1947 = vand.u32 2147483647, %v1435
        %v1948 = vand.u32 2147483647, %v1436
        %v1949 = vand.u32 2147483647, %v1437
        %v1950 = vand.u32 2147483647, %v1438
        %v1951 = vand.u32 2147483647, %v1439
        %v1952 = vand.u32 2147483647, %v1440
        %v1953 = vand.u32 2147483647, %v1441
        %v1954 = vand.u32 2147483647, %v1442
        %v1955 = vand.u32 2147483647, %v1443
        %v1956 = vand.u32 2147483647, %v1444
        %v1957 = vand.u32 2147483647, %v1445
        %v1958 = vand.u32 2147483647, %v1446
        %v1959 = vand.u32 2147483647, %v1447
        %v1960 = vand.u32 2147483647, %v1448
        %v1961 = vand.u32 2147483647, %v1449
        %v1962 = vand.u32 2147483647, %v1450
        %v1963 = vand.u32 2147483647, %v1451
        %v1964 = vand.u32 2147483647, %v1452
        %v1965 = vand.u32 2147483647, %v1453
        %v1966 = vand.u32 2147483647, %v1454
        %v1967 = vand.u32 2147483647, %v1455
        %v1968 = vand.u32 2147483647, %v1456
        %v1969 = vand.u32 2147483647, %v1457
        %v1970 = vand.u32 2147483647, %v1458
        %v1971 = vand.u32 2147483647, %v1459
        %v1972 = vand.u32 2147483647, %v1460
        %v1973 = vand.u32 2147483647, %v1461
        %v1974 = vand.u32 2147483647, %v1462
        %v1975 = vand.u32 2147483647, %v1463
        %v1976 = vand.u32 2147483647, %v1464
        %v1977 = vand.u32 2147483647, %v1465
        %v1978 = vand.u32 2147483647, %v1466
        %v1979 = vand.u32 2147483647, %v1467
        %v1980 = vand.u32 2147483647, %v1468
        %v1981 = vand.u32 2147483647, %v1469
        %v1982 = vand.u32 2147483647, %v1470
        %v1983 = vand.u32 2147483647, %v1471
        %v1984 = vand.u32 2147483647, %v1472
        %v1985 = vand.u32 2147483647, %v1473
        %v1986 = vand.u32 2147483647, %v1474
        %v1987 = vand.u32 2147483647, %v1475
        %v1988 = vand.u32 2147483647, %v1476
        %v1989 = vand.u32 2147483647, %v1477
        %v1990 = vand.u32 2147483647, %v1478
        %v1991 = vand.u32 2147483647, %v1479
        %v1992 = vand.u32 2147483647, %v1480
        %v1993 = vand.u32 2147483647, %v1481
        %v1994 = vand.u32 2147483647, %v1482
        %v1995 = vand.u32 2147483647, %v1483
        %v1996 = vand.u32 2147483647, %v1484
        %v1997 = vand.u32 2147483647, %v1485
        %v1998 = vand.u32 2147483647, %v1486
        %v1999 = vand.u32 2147483647, %v1487
        %v2000 = vand.u32 2147483647, %v1488
        %v2001 = vand.u32 2147483647, %v1489
        %v2002 = vand.u32 2147483647, %v1490
        %v2003 = vand.u32 2147483647, %v1491
        %v2004 = vand.u32 2147483647, %v1492
        %v2005 = vand.u32 2147483647, %v1493
        %v2006 = vand.u32 2147483647, %v1494
        %v2007 = vand.u32 2147483647, %v1495
        %v2008 = vand.u32 2147483647, %v1496
        %v2009 = vand.u32 2147483647, %v1497
        %v2010 = vand.u32 2147483647, %v1498
        %v2011 = vand.u32 2147483647, %v1499
        %v2012 = vand.u32 2147483647, %v1500
        %v2013 = vand.u32 2147483647, %v1501
        %v2014 = vand.u32 2147483647, %v1502
        %v2015 = vand.u32 2147483647, %v1503
        %v2016 = vand.u32 2147483647, %v1504
        %v2017 = vand.u32 2147483647, %v1505
        %v2018 = vand.u32 2147483647, %v1506
        %v2019 = vand.u32 2147483647, %v1507
        %v2020 = vand.u32 2147483647, %v1508
        %v2021 = vand.u32 2147483647, %v1509
        %v2022 = vand.u32 2147483647, %v1510
        %v2023 = vand.u32 2147483647, %v1511
        %v2024 = vand.u32 2147483647, %v1512
        %v2025 = vand.u32 2147483647, %v1513
        %v2026 = vand.u32 2147483647, %v1514
        %v2027 = vand.u32 2147483647, %v1515
        %v2028 = vand.u32 2147483647, %v1516
        %v2029 = vand.u32 2147483647, %v1517
        %v2030 = vand.u32 2147483647, %v1518
        %v2031 = vand.u32 2147483647, %v1519
        %v2032 = vand.u32 2147483647, %v1520
        %v2033 = vand.u32 2147483647, %v1521
        %v2034 = vand.u32 2147483647, %v1522
        %v2035 = vand.u32 2147483647, %v1523
        %v2036 = vand.u32 2147483647, %v1524
        %v2037 = vand.u32 2147483647, %v1525
        %v2038 = vand.u32 2147483647, %v1526
        %v2039 = vand.u32 2147483647, %v1527
        %v2040 = vand.u32 2147483647, %v1528
        %v2041 = vand.u32 2147483647, %v1529
        %v2042 = vand.u32 2147483647, %v1530
        %v2043 = vand.u32 2147483647, %v1531
        %v2044 = vand.u32 2147483647, %v1532
        %v2045 = vand.u32 2147483647, %v1533
        %v2046 = vand.u32 2147483647, %v1534
        %v2047 = vand.u32 2147483647, %v1535
        %v2048 = vand.u32 2147483647, %v1536
        %v2049 = vand.u32 2147483647, %v1537
        %v2050 = vand.u32 2147483647, %v1538
        %v2051 = vand.u32 2147483647, %v1539
        %v2052 = vand.u32 2147483647, %v1540
        %v2053 = vand.u32 2147483647, %v1541
        %v2054 = vand.u32 2147483647, %v1542
        %v2055 = vand.u32 2147483647, %v1543
        %v2056 = vand.u32 2147483647, %v1544
        %v2057 = vand.u32 2147483647, %v1545
        %v2058 = vand.u32 2147483647, %v1546
        %v2059 = vand.u32 2147483647, %v1547
        %v2060 = vand.u32 2147483647, %v1548
        %v2061 = vand.u32 2147483647, %v1549
        %v2062 = vand.u32 2147483647, %v1550
        %v2063 = vand.u32 2147483647, %v1551
        %v2064 = vand.u32 2147483647, %v1552
        %v2065 = vand.u32 2147483647, %v1553
        %v2066 = vand.u32 2147483647, %v1554
        %v2067 = vand.u32 2147483647, %v1555
        %v2068 = vand.u32 2147483647, %v1556
        %v2069 = vand.u32 2147483647, %v1557
        %v2070 = vand.u32 2147483647, %v1558
        %v2071 = vand.u32 2147483647, %v1559
        %v2072 = vand.u32 2147483647, %v1560
        %v2073 = vand.u32 2147483647, %v1561
        %v2074 = vand.u32 2147483647, %v1562
        %v2075 = vand.u32 2147483647, %v1563
        %v2076 = vand.u32 2147483647, %v1564
        %v2077 = vand.u32 2147483647, %v1565
        %v2078 = vand.u32 2147483647, %v1566
        %v2079 = vand.u32 2147483647, %v1567
        %v2080 = vand.u32 2147483647, %v1568
        %v2081 = vand.u32 2147483647, %v1569
        %v2082 = vand.u32 2147483647, %v1570
        %v2083 = vand.u32 2147483647, %v1571
        %v2084 = vand.u32 2147483647, %v1572
        %v2085 = vand.u32 2147483647, %v1573
        %v2086 = vand.u32 2147483647, %v1574
        %v2087 = vand.u32 2147483647, %v1575
        %v2088 = vand.u32 2147483647, %v1576
        %v2089 = vand.u32 2147483647, %v1577
        %v2090 = vand.u32 2147483647, %v1578
        %v2091 = vand.u32 2147483647, %v1579
        %v2092 = vand.u32 2147483647, %v1580
        %v2093 = vand.u32 2147483647, %v1581
        %v2094 = vand.u32 2147483647, %v1582
        %v2095 = vand.u32 2147483647, %v1583
        %v2096 = vand.u32 2147483647, %v1584
        %v2097 = vand.u32 2147483647, %v1585
        %v2098 = vand.u32 2147483647, %v1586
        %v2099 = vand.u32 2147483647, %v1587
        %v2100 = vand.u32 2147483647, %v1588
        %v2101 = vand.u32 2147483647, %v1589
        %v2102 = vand.u32 2147483647, %v1590
        %v2103 = vand.u32 2147483647, %v1591
        %v2104 = vand.u32 2147483647, %v1592
        %v2105 = vand.u32 2147483647, %v1593
        %v2106 = vand.u32 2147483647, %v1594
        %v2107 = vand.u32 2147483647, %v1595
        %v2108 = vand.u32 2147483647, %v1596
        %v2109 = vand.u32 2147483647, %v1597
        %v2110 = vand.u32 2147483647, %v1598
        %v2111 = vand.u32 2147483647, %v1599
        %v2112 = vand.u32 2147483647, %v1600
        %v2113 = vand.u32 2147483647, %v1601
        %v2114 = vand.u32 2147483647, %v1602
        %v2115 = vand.u32 2147483647, %v1603
        %v2116 = vand.u32 2147483647, %v1604
        %v2117 = vand.u32 2147483647, %v1605
        %v2118 = vand.u32 2147483647, %v1606
        %v2119 = vand.u32 2147483647, %v1607
        %v2120 = vand.u32 2147483647, %v1608
        %v2121 = vand.u32 2147483647, %v1609
        %v2122 = vand.u32 2147483647, %v1610
        %v2123 = vand.u32 2147483647, %v1611
        %v2124 = vand.u32 2147483647, %v1612
        %v2125 = vand.u32 2147483647, %v1613
        %v2126 = vand.u32 2147483647, %v1614
        %v2127 = vand.u32 2147483647, %v1615
        %v2128 = vand.u32 2147483647, %v1616
        %v2129 = vand.u32 2147483647, %v1617
        %v2130 = vand.u32 2147483647, %v1618
        %v2131 = vand.u32 2147483647, %v1619
        %v2132 = vand.u32 2147483647, %v1620
        %v2133 = vand.u32 2147483647, %v1621
        %v2134 = vand.u32 2147483647, %v1622
        %v2135 = vand.u32 2147483647, %v1623
        %v2136 = vand.u32 2147483647, %v1624
        %v2137 = vand.u32 2147483647, %v1625
        %v2138 = vand.u32 2147483647, %v1626
        %v2139 = vand.u32 2147483647, %v1627
        %v2140 = vand.u32 2147483647, %v1628
        %v2141 = vand.u32 2147483647, %v1629
        %v2142 = vand.u32 2147483647, %v1630
        %v2143 = vand.u32 2147483647, %v1631
        %v2144 = vand.u32 2147483647, %v1632
        %v2145 = vand.u32 2147483647, %v1633
        %v2146 = vand.u32 2147483647, %v1634
        %v2147 = vand.u32 2147483647, %v1635
        %v2148 = vand.u32 2147483647, %v1636
        %v2149 = vand.u32 2147483647, %v1637
        %v2150 = vand.u32 2147483647, %v1638
        %v2151 = vand.u32 2147483647, %v1639
        %v2152 = vand.u32 2147483647, %v1640
        %v2153 = vand.u32 2147483647, %v1641
        %v2154 = vand.u32 2147483647, %v1642
        %v2155 = vand.u32 2147483647, %v1643
        %v2156 = vand.u32 2147483647, %v1644
        %v2157 = vand.u32 2147483647, %v1645
        %v2158 = vand.u32 2147483647, %v1646
        %v2159 = vand.u32 2147483647, %v1647
        %v2160 = vand.u32 2147483647, %v1648
        %v2161 = vand.u32 2147483647, %v1649
        %v2162 = vand.u32 2147483647, %v1650
        %v2163 = vand.u32 2147483647, %v1651
        %v2164 = vand.u32 2147483647, %v1652
        %v2165 = vand.u32 2147483647, %v1653
        %v2166 = vand.u32 2147483647, %v1654
        %v2167 = vand.u32 2147483647, %v1655
        %v2168 = vand.u32 2147483647, %v1656
        %v2169 = vand.u32 2147483647, %v1657
        %v2170 = vand.u32 2147483647, %v1658
        %v2171 = vand.u32 2147483647, %v1659
        %v2172 = vand.u32 2147483647, %v1660
        %v2173 = vand.u32 2147483647, %v1661
        %v2174 = vand.u32 2147483647, %v1662
        %v2175 = vand.u32 2147483647, %v1663
        %v2176 = vand.u32 2147483647, %v1664
        %v2177 = vand.u32 2147483647, %v1665
        %v2178 = vand.u32 2147483647, %v1666
        %v2179 = vand.u32 2147483647, %v1667
        %v2180 = vand.u32 2147483647, %v1668
        %v2181 = vand.u32 2147483647, %v1669
        %v2182 = vand.u32 2147483647, %v1670
        %v2183 = vand.u32 2147483647, %v1671
        %v2184 = vand.u32 2147483647, %v1672
        %v2185 = vand.u32 2147483647, %v1673
        %v2186 = vand.u32 2147483647, %v1674
        %v2187 = vand.u32 2147483647, %v1675
        %v2188 = vand.u32 2147483647, %v1676
        %v2189 = vand.u32 2147483647, %v1677
        %v2190 = vand.u32 2147483647, %v1678
        %v2191 = vand.u32 2147483647, %v1679
        %v2192 = vand.u32 2147483647, %v1680
        %v2193 = vand.u32 2147483647, %v1681
        %v2194 = vand.u32 2147483647, %v1682
        %v2195 = vand.u32 2147483647, %v1683
        %v2196 = vand.u32 2147483647, %v1684
        %v2197 = vand.u32 2147483647, %v1685
        %v2198 = vand.u32 2147483647, %v1686
        %v2199 = vand.u32 2147483647, %v1687
        %v2200 = vand.u32 2147483647, %v1688
        %v2201 = vand.u32 2147483647, %v1689
        %v2202 = vand.u32 2147483647, %v1690
        %v2203 = vand.u32 2147483647, %v1691
        %v2204 = vand.u32 2147483647, %v1692
        %v2205 = vand.u32 2147483647, %v1693
        %v2206 = vand.u32 2147483647, %v1694
        %v2207 = vand.u32 2147483647, %v1695
        %v2208 = vand.u32 2147483647, %v1696
        %v2209 = vand.u32 2147483647, %v1697
        %v2210 = vand.u32 2147483647, %v1698
        %v2211 = vand.u32 2147483647, %v1699
        %v2212 = vand.u32 2147483647, %v1700
        %v2213 = vand.u32 2147483647, %v1701
        %v2214 = vand.u32 2147483647, %v1702
        %v2215 = vand.u32 2147483647, %v1703
        %v2216 = vand.u32 2147483647, %v1704
        %v2217 = vand.u32 2147483647, %v1705
        %v2218 = vand.u32 2147483647, %v1706
        %v2219 = vand.u32 2147483647, %v1707
        %v2220 = vand.u32 2147483647, %v1708
        %v2221 = vand.u32 2147483647, %v1709
        %v2222 = vand.u32 2147483647, %v1710
        %v2223 = vand.u32 2147483647, %v1711
        %v2224 = vand.u32 2147483647, %v1712
        %v2225 = vand.u32 2147483647, %v1713
        %v2226 = vand.u32 2147483647, %v1714
        %v2227 = vand.u32 2147483647, %v1715
        %v2228 = vand.u32 2147483647, %v1716
        %v2229 = vand.u32 2147483647, %v1717
        %v2230 = vand.u32 2147483647, %v1718
        %v2231 = vand.u32 2147483647, %v1719
        %v2232 = vand.u32 2147483647, %v1720
        %v2233 = vand.u32 2147483647, %v1721
        %v2234 = vand.u32 2147483647, %v1722
        %v2235 = vand.u32 2147483647, %v1723
        %v2236 = vand.u32 2147483647, %v1724
        %v2237 = vand.u32 2147483647, %v1725
        %v2238 = vand.u32 2147483647, %v1726
        %v2239 = vand.u32 2147483647, %v1727
        %v2240 = vand.u32 2147483647, %v1728
        %v2241 = vand.u32 2147483647, %v1729
        %v2242 = vand.u32 2147483647, %v1730
        %v2243 = vand.u32 2147483647, %v1731
        %v2244 = vand.u32 2147483647, %v1732
        %v2245 = vand.u32 2147483647, %v1733
        %v2246 = vand.u32 2147483647, %v1734
        %v2247 = vand.u32 2147483647, %v1735
        %v2248 = vand.u32 2147483647, %v1736
        %v2249 = vand.u32 2147483647, %v1737
        %v2250 = vand.u32 2147483647, %v1738
        %v2251 = vand.u32 2147483647, %v1739
        %v2252 = vand.u32 2147483647, %v1740
        %v2253 = vand.u32 2147483647, %v1741
        %v2254 = vand.u32 2147483647, %v1742
        %v2255 = vand.u32 2147483647, %v1743
        %v2256 = vand.u32 2147483647, %v1744
        %v2257 = vand.u32 2147483647, %v1745
        %v2258 = vand.u32 2147483647, %v1746
        %2259 = vst [vmem:[%s207] sm:$0xff] %v1747
        %2260 = vst [vmem:[%s207 + $0x8] sm:$0xff] %v1748
        %2261 = vst [vmem:[%s207 + $0x10] sm:$0xff] %v1749
        %2262 = vst [vmem:[%s207 + $0x18] sm:$0xff] %v1750
        %2263 = vst [vmem:[%s207 + $0x20] sm:$0xff] %v1751
        %2264 = vst [vmem:[%s207 + $0x28] sm:$0xff] %v1752
        %2265 = vst [vmem:[%s207 + $0x30] sm:$0xff] %v1753
        %2266 = vst [vmem:[%s207 + $0x38] sm:$0xff] %v1754
        %2267 = vst [vmem:[%s207 + $0x40] sm:$0xff] %v1755
        %2268 = vst [vmem:[%s207 + $0x48] sm:$0xff] %v1756
        %2269 = vst [vmem:[%s207 + $0x50] sm:$0xff] %v1757
        %2270 = vst [vmem:[%s207 + $0x58] sm:$0xff] %v1758
        %2271 = vst [vmem:[%s207 + $0x60] sm:$0xff] %v1759
        %2272 = vst [vmem:[%s207 + $0x68] sm:$0xff] %v1760
        %2273 = vst [vmem:[%s207 + $0x70] sm:$0xff] %v1761
        %2274 = vst [vmem:[%s207 + $0x78] sm:$0xff] %v1762
        %2275 = vst [vmem:[%s207 + $0x80] sm:$0xff] %v1763
        %2276 = vst [vmem:[%s207 + $0x88] sm:$0xff] %v1764
        %2277 = vst [vmem:[%s207 + $0x90] sm:$0xff] %v1765
        %2278 = vst [vmem:[%s207 + $0x98] sm:$0xff] %v1766
        %2279 = vst [vmem:[%s207 + $0xa0] sm:$0xff] %v1767
        %2280 = vst [vmem:[%s207 + $0xa8] sm:$0xff] %v1768
        %2281 = vst [vmem:[%s207 + $0xb0] sm:$0xff] %v1769
        %2282 = vst [vmem:[%s207 + $0xb8] sm:$0xff] %v1770
        %2283 = vst [vmem:[%s207 + $0xc0] sm:$0xff] %v1771
        %2284 = vst [vmem:[%s207 + $0xc8] sm:$0xff] %v1772
        %2285 = vst [vmem:[%s207 + $0xd0] sm:$0xff] %v1773
        %2286 = vst [vmem:[%s207 + $0xd8] sm:$0xff] %v1774
        %2287 = vst [vmem:[%s207 + $0xe0] sm:$0xff] %v1775
        %2288 = vst [vmem:[%s207 + $0xe8] sm:$0xff] %v1776
        %2289 = vst [vmem:[%s207 + $0xf0] sm:$0xff] %v1777
        %2290 = vst [vmem:[%s207 + $0xf8] sm:$0xff] %v1778
        %2291 = vst [vmem:[%s207 + $0x100] sm:$0xff] %v1779
        %2292 = vst [vmem:[%s207 + $0x108] sm:$0xff] %v1780
        %2293 = vst [vmem:[%s207 + $0x110] sm:$0xff] %v1781
        %2294 = vst [vmem:[%s207 + $0x118] sm:$0xff] %v1782
        %2295 = vst [vmem:[%s207 + $0x120] sm:$0xff] %v1783
        %2296 = vst [vmem:[%s207 + $0x128] sm:$0xff] %v1784
        %2297 = vst [vmem:[%s207 + $0x130] sm:$0xff] %v1785
        %2298 = vst [vmem:[%s207 + $0x138] sm:$0xff] %v1786
        %2299 = vst [vmem:[%s207 + $0x140] sm:$0xff] %v1787
        %2300 = vst [vmem:[%s207 + $0x148] sm:$0xff] %v1788
        %2301 = vst [vmem:[%s207 + $0x150] sm:$0xff] %v1789
        %2302 = vst [vmem:[%s207 + $0x158] sm:$0xff] %v1790
        %2303 = vst [vmem:[%s207 + $0x160] sm:$0xff] %v1791
        %2304 = vst [vmem:[%s207 + $0x168] sm:$0xff] %v1792
        %2305 = vst [vmem:[%s207 + $0x170] sm:$0xff] %v1793
        %2306 = vst [vmem:[%s207 + $0x178] sm:$0xff] %v1794
        %2307 = vst [vmem:[%s207 + $0x180] sm:$0xff] %v1795
        %2308 = vst [vmem:[%s207 + $0x188] sm:$0xff] %v1796
        %2309 = vst [vmem:[%s207 + $0x190] sm:$0xff] %v1797
        %2310 = vst [vmem:[%s207 + $0x198] sm:$0xff] %v1798
        %2311 = vst [vmem:[%s207 + $0x1a0] sm:$0xff] %v1799
        %2312 = vst [vmem:[%s207 + $0x1a8] sm:$0xff] %v1800
        %2313 = vst [vmem:[%s207 + $0x1b0] sm:$0xff] %v1801
        %2314 = vst [vmem:[%s207 + $0x1b8] sm:$0xff] %v1802
        %2315 = vst [vmem:[%s207 + $0x1c0] sm:$0xff] %v1803
        %2316 = vst [vmem:[%s207 + $0x1c8] sm:$0xff] %v1804
        %2317 = vst [vmem:[%s207 + $0x1d0] sm:$0xff] %v1805
        %2318 = vst [vmem:[%s207 + $0x1d8] sm:$0xff] %v1806
        %2319 = vst [vmem:[%s207 + $0x1e0] sm:$0xff] %v1807
        %2320 = vst [vmem:[%s207 + $0x1e8] sm:$0xff] %v1808
        %2321 = vst [vmem:[%s207 + $0x1f0] sm:$0xff] %v1809
        %2322 = vst [vmem:[%s207 + $0x1f8] sm:$0xff] %v1810
        %2323 = vst [vmem:[%s207 + $0x200] sm:$0xff] %v1811
        %2324 = vst [vmem:[%s207 + $0x208] sm:$0xff] %v1812
        %2325 = vst [vmem:[%s207 + $0x210] sm:$0xff] %v1813
        %2326 = vst [vmem:[%s207 + $0x218] sm:$0xff] %v1814
        %2327 = vst [vmem:[%s207 + $0x220] sm:$0xff] %v1815
        %2328 = vst [vmem:[%s207 + $0x228] sm:$0xff] %v1816
        %2329 = vst [vmem:[%s207 + $0x230] sm:$0xff] %v1817
        %2330 = vst [vmem:[%s207 + $0x238] sm:$0xff] %v1818
        %2331 = vst [vmem:[%s207 + $0x240] sm:$0xff] %v1819
        %2332 = vst [vmem:[%s207 + $0x248] sm:$0xff] %v1820
        %2333 = vst [vmem:[%s207 + $0x250] sm:$0xff] %v1821
        %2334 = vst [vmem:[%s207 + $0x258] sm:$0xff] %v1822
        %2335 = vst [vmem:[%s207 + $0x260] sm:$0xff] %v1823
        %2336 = vst [vmem:[%s207 + $0x268] sm:$0xff] %v1824
        %2337 = vst [vmem:[%s207 + $0x270] sm:$0xff] %v1825
        %2338 = vst [vmem:[%s207 + $0x278] sm:$0xff] %v1826
        %2339 = vst [vmem:[%s207 + $0x280] sm:$0xff] %v1827
        %2340 = vst [vmem:[%s207 + $0x288] sm:$0xff] %v1828
        %2341 = vst [vmem:[%s207 + $0x290] sm:$0xff] %v1829
        %2342 = vst [vmem:[%s207 + $0x298] sm:$0xff] %v1830
        %2343 = vst [vmem:[%s207 + $0x2a0] sm:$0xff] %v1831
        %2344 = vst [vmem:[%s207 + $0x2a8] sm:$0xff] %v1832
        %2345 = vst [vmem:[%s207 + $0x2b0] sm:$0xff] %v1833
        %2346 = vst [vmem:[%s207 + $0x2b8] sm:$0xff] %v1834
        %2347 = vst [vmem:[%s207 + $0x2c0] sm:$0xff] %v1835
        %2348 = vst [vmem:[%s207 + $0x2c8] sm:$0xff] %v1836
        %2349 = vst [vmem:[%s207 + $0x2d0] sm:$0xff] %v1837
        %2350 = vst [vmem:[%s207 + $0x2d8] sm:$0xff] %v1838
        %2351 = vst [vmem:[%s207 + $0x2e0] sm:$0xff] %v1839
        %2352 = vst [vmem:[%s207 + $0x2e8] sm:$0xff] %v1840
        %2353 = vst [vmem:[%s207 + $0x2f0] sm:$0xff] %v1841
        %2354 = vst [vmem:[%s207 + $0x2f8] sm:$0xff] %v1842
        %2355 = vst [vmem:[%s207 + $0x300] sm:$0xff] %v1843
        %2356 = vst [vmem:[%s207 + $0x308] sm:$0xff] %v1844
        %2357 = vst [vmem:[%s207 + $0x310] sm:$0xff] %v1845
        %2358 = vst [vmem:[%s207 + $0x318] sm:$0xff] %v1846
        %2359 = vst [vmem:[%s207 + $0x320] sm:$0xff] %v1847
        %2360 = vst [vmem:[%s207 + $0x328] sm:$0xff] %v1848
        %2361 = vst [vmem:[%s207 + $0x330] sm:$0xff] %v1849
        %2362 = vst [vmem:[%s207 + $0x338] sm:$0xff] %v1850
        %2363 = vst [vmem:[%s207 + $0x340] sm:$0xff] %v1851
        %2364 = vst [vmem:[%s207 + $0x348] sm:$0xff] %v1852
        %2365 = vst [vmem:[%s207 + $0x350] sm:$0xff] %v1853
        %2366 = vst [vmem:[%s207 + $0x358] sm:$0xff] %v1854
        %2367 = vst [vmem:[%s207 + $0x360] sm:$0xff] %v1855
        %2368 = vst [vmem:[%s207 + $0x368] sm:$0xff] %v1856
        %2369 = vst [vmem:[%s207 + $0x370] sm:$0xff] %v1857
        %2370 = vst [vmem:[%s207 + $0x378] sm:$0xff] %v1858
        %2371 = vst [vmem:[%s207 + $0x380] sm:$0xff] %v1859
        %2372 = vst [vmem:[%s207 + $0x388] sm:$0xff] %v1860
        %2373 = vst [vmem:[%s207 + $0x390] sm:$0xff] %v1861
        %2374 = vst [vmem:[%s207 + $0x398] sm:$0xff] %v1862
        %2375 = vst [vmem:[%s207 + $0x3a0] sm:$0xff] %v1863
        %2376 = vst [vmem:[%s207 + $0x3a8] sm:$0xff] %v1864
        %2377 = vst [vmem:[%s207 + $0x3b0] sm:$0xff] %v1865
        %2378 = vst [vmem:[%s207 + $0x3b8] sm:$0xff] %v1866
        %2379 = vst [vmem:[%s207 + $0x3c0] sm:$0xff] %v1867
        %2380 = vst [vmem:[%s207 + $0x3c8] sm:$0xff] %v1868
        %2381 = vst [vmem:[%s207 + $0x3d0] sm:$0xff] %v1869
        %2382 = vst [vmem:[%s207 + $0x3d8] sm:$0xff] %v1870
        %2383 = vst [vmem:[%s207 + $0x3e0] sm:$0xff] %v1871
        %2384 = vst [vmem:[%s207 + $0x3e8] sm:$0xff] %v1872
        %2385 = vst [vmem:[%s207 + $0x3f0] sm:$0xff] %v1873
        %2386 = vst [vmem:[%s207 + $0x3f8] sm:$0xff] %v1874
        %2387 = vst [vmem:[%s207 + $0x400] sm:$0xff] %v1875
        %2388 = vst [vmem:[%s207 + $0x408] sm:$0xff] %v1876
        %2389 = vst [vmem:[%s207 + $0x410] sm:$0xff] %v1877
        %2390 = vst [vmem:[%s207 + $0x418] sm:$0xff] %v1878
        %2391 = vst [vmem:[%s207 + $0x420] sm:$0xff] %v1879
        %2392 = vst [vmem:[%s207 + $0x428] sm:$0xff] %v1880
        %2393 = vst [vmem:[%s207 + $0x430] sm:$0xff] %v1881
        %2394 = vst [vmem:[%s207 + $0x438] sm:$0xff] %v1882
        %2395 = vst [vmem:[%s207 + $0x440] sm:$0xff] %v1883
        %2396 = vst [vmem:[%s207 + $0x448] sm:$0xff] %v1884
        %2397 = vst [vmem:[%s207 + $0x450] sm:$0xff] %v1885
        %2398 = vst [vmem:[%s207 + $0x458] sm:$0xff] %v1886
        %2399 = vst [vmem:[%s207 + $0x460] sm:$0xff] %v1887
        %2400 = vst [vmem:[%s207 + $0x468] sm:$0xff] %v1888
        %2401 = vst [vmem:[%s207 + $0x470] sm:$0xff] %v1889
        %2402 = vst [vmem:[%s207 + $0x478] sm:$0xff] %v1890
        %2403 = vst [vmem:[%s207 + $0x480] sm:$0xff] %v1891
        %2404 = vst [vmem:[%s207 + $0x488] sm:$0xff] %v1892
        %2405 = vst [vmem:[%s207 + $0x490] sm:$0xff] %v1893
        %2406 = vst [vmem:[%s207 + $0x498] sm:$0xff] %v1894
        %2407 = vst [vmem:[%s207 + $0x4a0] sm:$0xff] %v1895
        %2408 = vst [vmem:[%s207 + $0x4a8] sm:$0xff] %v1896
        %2409 = vst [vmem:[%s207 + $0x4b0] sm:$0xff] %v1897
        %2410 = vst [vmem:[%s207 + $0x4b8] sm:$0xff] %v1898
        %2411 = vst [vmem:[%s207 + $0x4c0] sm:$0xff] %v1899
        %2412 = vst [vmem:[%s207 + $0x4c8] sm:$0xff] %v1900
        %2413 = vst [vmem:[%s207 + $0x4d0] sm:$0xff] %v1901
        %2414 = vst [vmem:[%s207 + $0x4d8] sm:$0xff] %v1902
        %2415 = vst [vmem:[%s207 + $0x4e0] sm:$0xff] %v1903
        %2416 = vst [vmem:[%s207 + $0x4e8] sm:$0xff] %v1904
        %2417 = vst [vmem:[%s207 + $0x4f0] sm:$0xff] %v1905
        %2418 = vst [vmem:[%s207 + $0x4f8] sm:$0xff] %v1906
        %2419 = vst [vmem:[%s207 + $0x500] sm:$0xff] %v1907
        %2420 = vst [vmem:[%s207 + $0x508] sm:$0xff] %v1908
        %2421 = vst [vmem:[%s207 + $0x510] sm:$0xff] %v1909
        %2422 = vst [vmem:[%s207 + $0x518] sm:$0xff] %v1910
        %2423 = vst [vmem:[%s207 + $0x520] sm:$0xff] %v1911
        %2424 = vst [vmem:[%s207 + $0x528] sm:$0xff] %v1912
        %2425 = vst [vmem:[%s207 + $0x530] sm:$0xff] %v1913
        %2426 = vst [vmem:[%s207 + $0x538] sm:$0xff] %v1914
        %2427 = vst [vmem:[%s207 + $0x540] sm:$0xff] %v1915
        %2428 = vst [vmem:[%s207 + $0x548] sm:$0xff] %v1916
        %2429 = vst [vmem:[%s207 + $0x550] sm:$0xff] %v1917
        %2430 = vst [vmem:[%s207 + $0x558] sm:$0xff] %v1918
        %2431 = vst [vmem:[%s207 + $0x560] sm:$0xff] %v1919
        %2432 = vst [vmem:[%s207 + $0x568] sm:$0xff] %v1920
        %2433 = vst [vmem:[%s207 + $0x570] sm:$0xff] %v1921
        %2434 = vst [vmem:[%s207 + $0x578] sm:$0xff] %v1922
        %2435 = vst [vmem:[%s207 + $0x580] sm:$0xff] %v1923
        %2436 = vst [vmem:[%s207 + $0x588] sm:$0xff] %v1924
        %2437 = vst [vmem:[%s207 + $0x590] sm:$0xff] %v1925
        %2438 = vst [vmem:[%s207 + $0x598] sm:$0xff] %v1926
        %2439 = vst [vmem:[%s207 + $0x5a0] sm:$0xff] %v1927
        %2440 = vst [vmem:[%s207 + $0x5a8] sm:$0xff] %v1928
        %2441 = vst [vmem:[%s207 + $0x5b0] sm:$0xff] %v1929
        %2442 = vst [vmem:[%s207 + $0x5b8] sm:$0xff] %v1930
        %2443 = vst [vmem:[%s207 + $0x5c0] sm:$0xff] %v1931
        %2444 = vst [vmem:[%s207 + $0x5c8] sm:$0xff] %v1932
        %2445 = vst [vmem:[%s207 + $0x5d0] sm:$0xff] %v1933
        %2446 = vst [vmem:[%s207 + $0x5d8] sm:$0xff] %v1934
        %2447 = vst [vmem:[%s207 + $0x5e0] sm:$0xff] %v1935
        %2448 = vst [vmem:[%s207 + $0x5e8] sm:$0xff] %v1936
        %2449 = vst [vmem:[%s207 + $0x5f0] sm:$0xff] %v1937
        %2450 = vst [vmem:[%s207 + $0x5f8] sm:$0xff] %v1938
        %2451 = vst [vmem:[%s207 + $0x600] sm:$0xff] %v1939
        %2452 = vst [vmem:[%s207 + $0x608] sm:$0xff] %v1940
        %2453 = vst [vmem:[%s207 + $0x610] sm:$0xff] %v1941
        %2454 = vst [vmem:[%s207 + $0x618] sm:$0xff] %v1942
        %2455 = vst [vmem:[%s207 + $0x620] sm:$0xff] %v1943
        %2456 = vst [vmem:[%s207 + $0x628] sm:$0xff] %v1944
        %2457 = vst [vmem:[%s207 + $0x630] sm:$0xff] %v1945
        %2458 = vst [vmem:[%s207 + $0x638] sm:$0xff] %v1946
        %2459 = vst [vmem:[%s207 + $0x640] sm:$0xff] %v1947
        %2460 = vst [vmem:[%s207 + $0x648] sm:$0xff] %v1948
        %2461 = vst [vmem:[%s207 + $0x650] sm:$0xff] %v1949
        %2462 = vst [vmem:[%s207 + $0x658] sm:$0xff] %v1950
        %2463 = vst [vmem:[%s207 + $0x660] sm:$0xff] %v1951
        %2464 = vst [vmem:[%s207 + $0x668] sm:$0xff] %v1952
        %2465 = vst [vmem:[%s207 + $0x670] sm:$0xff] %v1953
        %2466 = vst [vmem:[%s207 + $0x678] sm:$0xff] %v1954
        %2467 = vst [vmem:[%s207 + $0x680] sm:$0xff] %v1955
        %2468 = vst [vmem:[%s207 + $0x688] sm:$0xff] %v1956
        %2469 = vst [vmem:[%s207 + $0x690] sm:$0xff] %v1957
        %2470 = vst [vmem:[%s207 + $0x698] sm:$0xff] %v1958
        %2471 = vst [vmem:[%s207 + $0x6a0] sm:$0xff] %v1959
        %2472 = vst [vmem:[%s207 + $0x6a8] sm:$0xff] %v1960
        %2473 = vst [vmem:[%s207 + $0x6b0] sm:$0xff] %v1961
        %2474 = vst [vmem:[%s207 + $0x6b8] sm:$0xff] %v1962
        %2475 = vst [vmem:[%s207 + $0x6c0] sm:$0xff] %v1963
        %2476 = vst [vmem:[%s207 + $0x6c8] sm:$0xff] %v1964
        %2477 = vst [vmem:[%s207 + $0x6d0] sm:$0xff] %v1965
        %2478 = vst [vmem:[%s207 + $0x6d8] sm:$0xff] %v1966
        %2479 = vst [vmem:[%s207 + $0x6e0] sm:$0xff] %v1967
        %2480 = vst [vmem:[%s207 + $0x6e8] sm:$0xff] %v1968
        %2481 = vst [vmem:[%s207 + $0x6f0] sm:$0xff] %v1969
        %2482 = vst [vmem:[%s207 + $0x6f8] sm:$0xff] %v1970
        %2483 = vst [vmem:[%s207 + $0x700] sm:$0xff] %v1971
        %2484 = vst [vmem:[%s207 + $0x708] sm:$0xff] %v1972
        %2485 = vst [vmem:[%s207 + $0x710] sm:$0xff] %v1973
        %2486 = vst [vmem:[%s207 + $0x718] sm:$0xff] %v1974
        %2487 = vst [vmem:[%s207 + $0x720] sm:$0xff] %v1975
        %2488 = vst [vmem:[%s207 + $0x728] sm:$0xff] %v1976
        %2489 = vst [vmem:[%s207 + $0x730] sm:$0xff] %v1977
        %2490 = vst [vmem:[%s207 + $0x738] sm:$0xff] %v1978
        %2491 = vst [vmem:[%s207 + $0x740] sm:$0xff] %v1979
        %2492 = vst [vmem:[%s207 + $0x748] sm:$0xff] %v1980
        %2493 = vst [vmem:[%s207 + $0x750] sm:$0xff] %v1981
        %2494 = vst [vmem:[%s207 + $0x758] sm:$0xff] %v1982
        %2495 = vst [vmem:[%s207 + $0x760] sm:$0xff] %v1983
        %2496 = vst [vmem:[%s207 + $0x768] sm:$0xff] %v1984
        %2497 = vst [vmem:[%s207 + $0x770] sm:$0xff] %v1985
        %2498 = vst [vmem:[%s207 + $0x778] sm:$0xff] %v1986
        %2499 = vst [vmem:[%s207 + $0x780] sm:$0xff] %v1987
        %2500 = vst [vmem:[%s207 + $0x788] sm:$0xff] %v1988
        %2501 = vst [vmem:[%s207 + $0x790] sm:$0xff] %v1989
        %2502 = vst [vmem:[%s207 + $0x798] sm:$0xff] %v1990
        %2503 = vst [vmem:[%s207 + $0x7a0] sm:$0xff] %v1991
        %2504 = vst [vmem:[%s207 + $0x7a8] sm:$0xff] %v1992
        %2505 = vst [vmem:[%s207 + $0x7b0] sm:$0xff] %v1993
        %2506 = vst [vmem:[%s207 + $0x7b8] sm:$0xff] %v1994
        %2507 = vst [vmem:[%s207 + $0x7c0] sm:$0xff] %v1995
        %2508 = vst [vmem:[%s207 + $0x7c8] sm:$0xff] %v1996
        %2509 = vst [vmem:[%s207 + $0x7d0] sm:$0xff] %v1997
        %2510 = vst [vmem:[%s207 + $0x7d8] sm:$0xff] %v1998
        %2511 = vst [vmem:[%s207 + $0x7e0] sm:$0xff] %v1999
        %2512 = vst [vmem:[%s207 + $0x7e8] sm:$0xff] %v2000
        %2513 = vst [vmem:[%s207 + $0x7f0] sm:$0xff] %v2001
        %2514 = vst [vmem:[%s207 + $0x7f8] sm:$0xff] %v2002
        %2515 = vst [vmem:[%s207 + $0x800] sm:$0xff] %v2003
        %2516 = vst [vmem:[%s207 + $0x808] sm:$0xff] %v2004
        %2517 = vst [vmem:[%s207 + $0x810] sm:$0xff] %v2005
        %2518 = vst [vmem:[%s207 + $0x818] sm:$0xff] %v2006
        %2519 = vst [vmem:[%s207 + $0x820] sm:$0xff] %v2007
        %2520 = vst [vmem:[%s207 + $0x828] sm:$0xff] %v2008
        %2521 = vst [vmem:[%s207 + $0x830] sm:$0xff] %v2009
        %2522 = vst [vmem:[%s207 + $0x838] sm:$0xff] %v2010
        %2523 = vst [vmem:[%s207 + $0x840] sm:$0xff] %v2011
        %2524 = vst [vmem:[%s207 + $0x848] sm:$0xff] %v2012
        %2525 = vst [vmem:[%s207 + $0x850] sm:$0xff] %v2013
        %2526 = vst [vmem:[%s207 + $0x858] sm:$0xff] %v2014
        %2527 = vst [vmem:[%s207 + $0x860] sm:$0xff] %v2015
        %2528 = vst [vmem:[%s207 + $0x868] sm:$0xff] %v2016
        %2529 = vst [vmem:[%s207 + $0x870] sm:$0xff] %v2017
        %2530 = vst [vmem:[%s207 + $0x878] sm:$0xff] %v2018
        %2531 = vst [vmem:[%s207 + $0x880] sm:$0xff] %v2019
        %2532 = vst [vmem:[%s207 + $0x888] sm:$0xff] %v2020
        %2533 = vst [vmem:[%s207 + $0x890] sm:$0xff] %v2021
        %2534 = vst [vmem:[%s207 + $0x898] sm:$0xff] %v2022
        %2535 = vst [vmem:[%s207 + $0x8a0] sm:$0xff] %v2023
        %2536 = vst [vmem:[%s207 + $0x8a8] sm:$0xff] %v2024
        %2537 = vst [vmem:[%s207 + $0x8b0] sm:$0xff] %v2025
        %2538 = vst [vmem:[%s207 + $0x8b8] sm:$0xff] %v2026
        %2539 = vst [vmem:[%s207 + $0x8c0] sm:$0xff] %v2027
        %2540 = vst [vmem:[%s207 + $0x8c8] sm:$0xff] %v2028
        %2541 = vst [vmem:[%s207 + $0x8d0] sm:$0xff] %v2029
        %2542 = vst [vmem:[%s207 + $0x8d8] sm:$0xff] %v2030
        %2543 = vst [vmem:[%s207 + $0x8e0] sm:$0xff] %v2031
        %2544 = vst [vmem:[%s207 + $0x8e8] sm:$0xff] %v2032
        %2545 = vst [vmem:[%s207 + $0x8f0] sm:$0xff] %v2033
        %2546 = vst [vmem:[%s207 + $0x8f8] sm:$0xff] %v2034
        %2547 = vst [vmem:[%s207 + $0x900] sm:$0xff] %v2035
        %2548 = vst [vmem:[%s207 + $0x908] sm:$0xff] %v2036
        %2549 = vst [vmem:[%s207 + $0x910] sm:$0xff] %v2037
        %2550 = vst [vmem:[%s207 + $0x918] sm:$0xff] %v2038
        %2551 = vst [vmem:[%s207 + $0x920] sm:$0xff] %v2039
        %2552 = vst [vmem:[%s207 + $0x928] sm:$0xff] %v2040
        %2553 = vst [vmem:[%s207 + $0x930] sm:$0xff] %v2041
        %2554 = vst [vmem:[%s207 + $0x938] sm:$0xff] %v2042
        %2555 = vst [vmem:[%s207 + $0x940] sm:$0xff] %v2043
        %2556 = vst [vmem:[%s207 + $0x948] sm:$0xff] %v2044
        %2557 = vst [vmem:[%s207 + $0x950] sm:$0xff] %v2045
        %2558 = vst [vmem:[%s207 + $0x958] sm:$0xff] %v2046
        %2559 = vst [vmem:[%s207 + $0x960] sm:$0xff] %v2047
        %2560 = vst [vmem:[%s207 + $0x968] sm:$0xff] %v2048
        %2561 = vst [vmem:[%s207 + $0x970] sm:$0xff] %v2049
        %2562 = vst [vmem:[%s207 + $0x978] sm:$0xff] %v2050
        %2563 = vst [vmem:[%s207 + $0x980] sm:$0xff] %v2051
        %2564 = vst [vmem:[%s207 + $0x988] sm:$0xff] %v2052
        %2565 = vst [vmem:[%s207 + $0x990] sm:$0xff] %v2053
        %2566 = vst [vmem:[%s207 + $0x998] sm:$0xff] %v2054
        %2567 = vst [vmem:[%s207 + $0x9a0] sm:$0xff] %v2055
        %2568 = vst [vmem:[%s207 + $0x9a8] sm:$0xff] %v2056
        %2569 = vst [vmem:[%s207 + $0x9b0] sm:$0xff] %v2057
        %2570 = vst [vmem:[%s207 + $0x9b8] sm:$0xff] %v2058
        %2571 = vst [vmem:[%s207 + $0x9c0] sm:$0xff] %v2059
        %2572 = vst [vmem:[%s207 + $0x9c8] sm:$0xff] %v2060
        %2573 = vst [vmem:[%s207 + $0x9d0] sm:$0xff] %v2061
        %2574 = vst [vmem:[%s207 + $0x9d8] sm:$0xff] %v2062
        %2575 = vst [vmem:[%s207 + $0x9e0] sm:$0xff] %v2063
        %2576 = vst [vmem:[%s207 + $0x9e8] sm:$0xff] %v2064
        %2577 = vst [vmem:[%s207 + $0x9f0] sm:$0xff] %v2065
        %2578 = vst [vmem:[%s207 + $0x9f8] sm:$0xff] %v2066
        %2579 = vst [vmem:[%s207 + $0xa00] sm:$0xff] %v2067
        %2580 = vst [vmem:[%s207 + $0xa08] sm:$0xff] %v2068
        %2581 = vst [vmem:[%s207 + $0xa10] sm:$0xff] %v2069
        %2582 = vst [vmem:[%s207 + $0xa18] sm:$0xff] %v2070
        %2583 = vst [vmem:[%s207 + $0xa20] sm:$0xff] %v2071
        %2584 = vst [vmem:[%s207 + $0xa28] sm:$0xff] %v2072
        %2585 = vst [vmem:[%s207 + $0xa30] sm:$0xff] %v2073
        %2586 = vst [vmem:[%s207 + $0xa38] sm:$0xff] %v2074
        %2587 = vst [vmem:[%s207 + $0xa40] sm:$0xff] %v2075
        %2588 = vst [vmem:[%s207 + $0xa48] sm:$0xff] %v2076
        %2589 = vst [vmem:[%s207 + $0xa50] sm:$0xff] %v2077
        %2590 = vst [vmem:[%s207 + $0xa58] sm:$0xff] %v2078
        %2591 = vst [vmem:[%s207 + $0xa60] sm:$0xff] %v2079
        %2592 = vst [vmem:[%s207 + $0xa68] sm:$0xff] %v2080
        %2593 = vst [vmem:[%s207 + $0xa70] sm:$0xff] %v2081
        %2594 = vst [vmem:[%s207 + $0xa78] sm:$0xff] %v2082
        %2595 = vst [vmem:[%s207 + $0xa80] sm:$0xff] %v2083
        %2596 = vst [vmem:[%s207 + $0xa88] sm:$0xff] %v2084
        %2597 = vst [vmem:[%s207 + $0xa90] sm:$0xff] %v2085
        %2598 = vst [vmem:[%s207 + $0xa98] sm:$0xff] %v2086
        %2599 = vst [vmem:[%s207 + $0xaa0] sm:$0xff] %v2087
        %2600 = vst [vmem:[%s207 + $0xaa8] sm:$0xff] %v2088
        %2601 = vst [vmem:[%s207 + $0xab0] sm:$0xff] %v2089
        %2602 = vst [vmem:[%s207 + $0xab8] sm:$0xff] %v2090
        %2603 = vst [vmem:[%s207 + $0xac0] sm:$0xff] %v2091
        %2604 = vst [vmem:[%s207 + $0xac8] sm:$0xff] %v2092
        %2605 = vst [vmem:[%s207 + $0xad0] sm:$0xff] %v2093
        %2606 = vst [vmem:[%s207 + $0xad8] sm:$0xff] %v2094
        %2607 = vst [vmem:[%s207 + $0xae0] sm:$0xff] %v2095
        %2608 = vst [vmem:[%s207 + $0xae8] sm:$0xff] %v2096
        %2609 = vst [vmem:[%s207 + $0xaf0] sm:$0xff] %v2097
        %2610 = vst [vmem:[%s207 + $0xaf8] sm:$0xff] %v2098
        %2611 = vst [vmem:[%s207 + $0xb00] sm:$0xff] %v2099
        %2612 = vst [vmem:[%s207 + $0xb08] sm:$0xff] %v2100
        %2613 = vst [vmem:[%s207 + $0xb10] sm:$0xff] %v2101
        %2614 = vst [vmem:[%s207 + $0xb18] sm:$0xff] %v2102
        %2615 = vst [vmem:[%s207 + $0xb20] sm:$0xff] %v2103
        %2616 = vst [vmem:[%s207 + $0xb28] sm:$0xff] %v2104
        %2617 = vst [vmem:[%s207 + $0xb30] sm:$0xff] %v2105
        %2618 = vst [vmem:[%s207 + $0xb38] sm:$0xff] %v2106
        %2619 = vst [vmem:[%s207 + $0xb40] sm:$0xff] %v2107
        %2620 = vst [vmem:[%s207 + $0xb48] sm:$0xff] %v2108
        %2621 = vst [vmem:[%s207 + $0xb50] sm:$0xff] %v2109
        %2622 = vst [vmem:[%s207 + $0xb58] sm:$0xff] %v2110
        %2623 = vst [vmem:[%s207 + $0xb60] sm:$0xff] %v2111
        %2624 = vst [vmem:[%s207 + $0xb68] sm:$0xff] %v2112
        %2625 = vst [vmem:[%s207 + $0xb70] sm:$0xff] %v2113
        %2626 = vst [vmem:[%s207 + $0xb78] sm:$0xff] %v2114
        %2627 = vst [vmem:[%s207 + $0xb80] sm:$0xff] %v2115
        %2628 = vst [vmem:[%s207 + $0xb88] sm:$0xff] %v2116
        %2629 = vst [vmem:[%s207 + $0xb90] sm:$0xff] %v2117
        %2630 = vst [vmem:[%s207 + $0xb98] sm:$0xff] %v2118
        %2631 = vst [vmem:[%s207 + $0xba0] sm:$0xff] %v2119
        %2632 = vst [vmem:[%s207 + $0xba8] sm:$0xff] %v2120
        %2633 = vst [vmem:[%s207 + $0xbb0] sm:$0xff] %v2121
        %2634 = vst [vmem:[%s207 + $0xbb8] sm:$0xff] %v2122
        %2635 = vst [vmem:[%s207 + $0xbc0] sm:$0xff] %v2123
        %2636 = vst [vmem:[%s207 + $0xbc8] sm:$0xff] %v2124
        %2637 = vst [vmem:[%s207 + $0xbd0] sm:$0xff] %v2125
        %2638 = vst [vmem:[%s207 + $0xbd8] sm:$0xff] %v2126
        %2639 = vst [vmem:[%s207 + $0xbe0] sm:$0xff] %v2127
        %2640 = vst [vmem:[%s207 + $0xbe8] sm:$0xff] %v2128
        %2641 = vst [vmem:[%s207 + $0xbf0] sm:$0xff] %v2129
        %2642 = vst [vmem:[%s207 + $0xbf8] sm:$0xff] %v2130
        %2643 = vst [vmem:[%s207 + $0xc00] sm:$0xff] %v2131
        %2644 = vst [vmem:[%s207 + $0xc08] sm:$0xff] %v2132
        %2645 = vst [vmem:[%s207 + $0xc10] sm:$0xff] %v2133
        %2646 = vst [vmem:[%s207 + $0xc18] sm:$0xff] %v2134
        %2647 = vst [vmem:[%s207 + $0xc20] sm:$0xff] %v2135
        %2648 = vst [vmem:[%s207 + $0xc28] sm:$0xff] %v2136
        %2649 = vst [vmem:[%s207 + $0xc30] sm:$0xff] %v2137
        %2650 = vst [vmem:[%s207 + $0xc38] sm:$0xff] %v2138
        %2651 = vst [vmem:[%s207 + $0xc40] sm:$0xff] %v2139
        %2652 = vst [vmem:[%s207 + $0xc48] sm:$0xff] %v2140
        %2653 = vst [vmem:[%s207 + $0xc50] sm:$0xff] %v2141
        %2654 = vst [vmem:[%s207 + $0xc58] sm:$0xff] %v2142
        %2655 = vst [vmem:[%s207 + $0xc60] sm:$0xff] %v2143
        %2656 = vst [vmem:[%s207 + $0xc68] sm:$0xff] %v2144
        %2657 = vst [vmem:[%s207 + $0xc70] sm:$0xff] %v2145
        %2658 = vst [vmem:[%s207 + $0xc78] sm:$0xff] %v2146
        %2659 = vst [vmem:[%s207 + $0xc80] sm:$0xff] %v2147
        %2660 = vst [vmem:[%s207 + $0xc88] sm:$0xff] %v2148
        %2661 = vst [vmem:[%s207 + $0xc90] sm:$0xff] %v2149
        %2662 = vst [vmem:[%s207 + $0xc98] sm:$0xff] %v2150
        %2663 = vst [vmem:[%s207 + $0xca0] sm:$0xff] %v2151
        %2664 = vst [vmem:[%s207 + $0xca8] sm:$0xff] %v2152
        %2665 = vst [vmem:[%s207 + $0xcb0] sm:$0xff] %v2153
        %2666 = vst [vmem:[%s207 + $0xcb8] sm:$0xff] %v2154
        %2667 = vst [vmem:[%s207 + $0xcc0] sm:$0xff] %v2155
        %2668 = vst [vmem:[%s207 + $0xcc8] sm:$0xff] %v2156
        %2669 = vst [vmem:[%s207 + $0xcd0] sm:$0xff] %v2157
        %2670 = vst [vmem:[%s207 + $0xcd8] sm:$0xff] %v2158
        %2671 = vst [vmem:[%s207 + $0xce0] sm:$0xff] %v2159
        %2672 = vst [vmem:[%s207 + $0xce8] sm:$0xff] %v2160
        %2673 = vst [vmem:[%s207 + $0xcf0] sm:$0xff] %v2161
        %2674 = vst [vmem:[%s207 + $0xcf8] sm:$0xff] %v2162
        %2675 = vst [vmem:[%s207 + $0xd00] sm:$0xff] %v2163
        %2676 = vst [vmem:[%s207 + $0xd08] sm:$0xff] %v2164
        %2677 = vst [vmem:[%s207 + $0xd10] sm:$0xff] %v2165
        %2678 = vst [vmem:[%s207 + $0xd18] sm:$0xff] %v2166
        %2679 = vst [vmem:[%s207 + $0xd20] sm:$0xff] %v2167
        %2680 = vst [vmem:[%s207 + $0xd28] sm:$0xff] %v2168
        %2681 = vst [vmem:[%s207 + $0xd30] sm:$0xff] %v2169
        %2682 = vst [vmem:[%s207 + $0xd38] sm:$0xff] %v2170
        %2683 = vst [vmem:[%s207 + $0xd40] sm:$0xff] %v2171
        %2684 = vst [vmem:[%s207 + $0xd48] sm:$0xff] %v2172
        %2685 = vst [vmem:[%s207 + $0xd50] sm:$0xff] %v2173
        %2686 = vst [vmem:[%s207 + $0xd58] sm:$0xff] %v2174
        %2687 = vst [vmem:[%s207 + $0xd60] sm:$0xff] %v2175
        %2688 = vst [vmem:[%s207 + $0xd68] sm:$0xff] %v2176
        %2689 = vst [vmem:[%s207 + $0xd70] sm:$0xff] %v2177
        %2690 = vst [vmem:[%s207 + $0xd78] sm:$0xff] %v2178
        %2691 = vst [vmem:[%s207 + $0xd80] sm:$0xff] %v2179
        %2692 = vst [vmem:[%s207 + $0xd88] sm:$0xff] %v2180
        %2693 = vst [vmem:[%s207 + $0xd90] sm:$0xff] %v2181
        %2694 = vst [vmem:[%s207 + $0xd98] sm:$0xff] %v2182
        %2695 = vst [vmem:[%s207 + $0xda0] sm:$0xff] %v2183
        %2696 = vst [vmem:[%s207 + $0xda8] sm:$0xff] %v2184
        %2697 = vst [vmem:[%s207 + $0xdb0] sm:$0xff] %v2185
        %2698 = vst [vmem:[%s207 + $0xdb8] sm:$0xff] %v2186
        %2699 = vst [vmem:[%s207 + $0xdc0] sm:$0xff] %v2187
        %2700 = vst [vmem:[%s207 + $0xdc8] sm:$0xff] %v2188
        %2701 = vst [vmem:[%s207 + $0xdd0] sm:$0xff] %v2189
        %2702 = vst [vmem:[%s207 + $0xdd8] sm:$0xff] %v2190
        %2703 = vst [vmem:[%s207 + $0xde0] sm:$0xff] %v2191
        %2704 = vst [vmem:[%s207 + $0xde8] sm:$0xff] %v2192
        %2705 = vst [vmem:[%s207 + $0xdf0] sm:$0xff] %v2193
        %2706 = vst [vmem:[%s207 + $0xdf8] sm:$0xff] %v2194
        %2707 = vst [vmem:[%s207 + $0xe00] sm:$0xff] %v2195
        %2708 = vst [vmem:[%s207 + $0xe08] sm:$0xff] %v2196
        %2709 = vst [vmem:[%s207 + $0xe10] sm:$0xff] %v2197
        %2710 = vst [vmem:[%s207 + $0xe18] sm:$0xff] %v2198
        %2711 = vst [vmem:[%s207 + $0xe20] sm:$0xff] %v2199
        %2712 = vst [vmem:[%s207 + $0xe28] sm:$0xff] %v2200
        %2713 = vst [vmem:[%s207 + $0xe30] sm:$0xff] %v2201
        %2714 = vst [vmem:[%s207 + $0xe38] sm:$0xff] %v2202
        %2715 = vst [vmem:[%s207 + $0xe40] sm:$0xff] %v2203
        %2716 = vst [vmem:[%s207 + $0xe48] sm:$0xff] %v2204
        %2717 = vst [vmem:[%s207 + $0xe50] sm:$0xff] %v2205
        %2718 = vst [vmem:[%s207 + $0xe58] sm:$0xff] %v2206
        %2719 = vst [vmem:[%s207 + $0xe60] sm:$0xff] %v2207
        %2720 = vst [vmem:[%s207 + $0xe68] sm:$0xff] %v2208
        %2721 = vst [vmem:[%s207 + $0xe70] sm:$0xff] %v2209
        %2722 = vst [vmem:[%s207 + $0xe78] sm:$0xff] %v2210
        %2723 = vst [vmem:[%s207 + $0xe80] sm:$0xff] %v2211
        %2724 = vst [vmem:[%s207 + $0xe88] sm:$0xff] %v2212
        %2725 = vst [vmem:[%s207 + $0xe90] sm:$0xff] %v2213
        %2726 = vst [vmem:[%s207 + $0xe98] sm:$0xff] %v2214
        %2727 = vst [vmem:[%s207 + $0xea0] sm:$0xff] %v2215
        %2728 = vst [vmem:[%s207 + $0xea8] sm:$0xff] %v2216
        %2729 = vst [vmem:[%s207 + $0xeb0] sm:$0xff] %v2217
        %2730 = vst [vmem:[%s207 + $0xeb8] sm:$0xff] %v2218
        %2731 = vst [vmem:[%s207 + $0xec0] sm:$0xff] %v2219
        %2732 = vst [vmem:[%s207 + $0xec8] sm:$0xff] %v2220
        %2733 = vst [vmem:[%s207 + $0xed0] sm:$0xff] %v2221
        %2734 = vst [vmem:[%s207 + $0xed8] sm:$0xff] %v2222
        %2735 = vst [vmem:[%s207 + $0xee0] sm:$0xff] %v2223
        %2736 = vst [vmem:[%s207 + $0xee8] sm:$0xff] %v2224
        %2737 = vst [vmem:[%s207 + $0xef0] sm:$0xff] %v2225
        %2738 = vst [vmem:[%s207 + $0xef8] sm:$0xff] %v2226
        %2739 = vst [vmem:[%s207 + $0xf00] sm:$0xff] %v2227
        %2740 = vst [vmem:[%s207 + $0xf08] sm:$0xff] %v2228
        %2741 = vst [vmem:[%s207 + $0xf10] sm:$0xff] %v2229
        %2742 = vst [vmem:[%s207 + $0xf18] sm:$0xff] %v2230
        %2743 = vst [vmem:[%s207 + $0xf20] sm:$0xff] %v2231
        %2744 = vst [vmem:[%s207 + $0xf28] sm:$0xff] %v2232
        %2745 = vst [vmem:[%s207 + $0xf30] sm:$0xff] %v2233
        %2746 = vst [vmem:[%s207 + $0xf38] sm:$0xff] %v2234
        %2747 = vst [vmem:[%s207 + $0xf40] sm:$0xff] %v2235
        %2748 = vst [vmem:[%s207 + $0xf48] sm:$0xff] %v2236
        %2749 = vst [vmem:[%s207 + $0xf50] sm:$0xff] %v2237
        %2750 = vst [vmem:[%s207 + $0xf58] sm:$0xff] %v2238
        %2751 = vst [vmem:[%s207 + $0xf60] sm:$0xff] %v2239
        %2752 = vst [vmem:[%s207 + $0xf68] sm:$0xff] %v2240
        %2753 = vst [vmem:[%s207 + $0xf70] sm:$0xff] %v2241
        %2754 = vst [vmem:[%s207 + $0xf78] sm:$0xff] %v2242
        %2755 = vst [vmem:[%s207 + $0xf80] sm:$0xff] %v2243
        %2756 = vst [vmem:[%s207 + $0xf88] sm:$0xff] %v2244
        %2757 = vst [vmem:[%s207 + $0xf90] sm:$0xff] %v2245
        %2758 = vst [vmem:[%s207 + $0xf98] sm:$0xff] %v2246
        %2759 = vst [vmem:[%s207 + $0xfa0] sm:$0xff] %v2247
        %2760 = vst [vmem:[%s207 + $0xfa8] sm:$0xff] %v2248
        %2761 = vst [vmem:[%s207 + $0xfb0] sm:$0xff] %v2249
        %2762 = vst [vmem:[%s207 + $0xfb8] sm:$0xff] %v2250
        %2763 = vst [vmem:[%s207 + $0xfc0] sm:$0xff] %v2251
        %2764 = vst [vmem:[%s207 + $0xfc8] sm:$0xff] %v2252
        %2765 = vst [vmem:[%s207 + $0xfd0] sm:$0xff] %v2253
        %2766 = vst [vmem:[%s207 + $0xfd8] sm:$0xff] %v2254
        %2767 = vst [vmem:[%s207 + $0xfe0] sm:$0xff] %v2255
        %2768 = vst [vmem:[%s207 + $0xfe8] sm:$0xff] %v2256
        %2769 = vst [vmem:[%s207 + $0xff0] sm:$0xff] %v2257
        %2770 = vst [vmem:[%s207 + $0xff8] sm:$0xff] %v2258
        %s2771 = sand.u32 %s82, 1
        %s2772 = scalar_lea.sflag [#allocation4], %s2771
        %s2773 = sand.u32 %s82, 1
        %s2774 = smul.addr %s2773, 4096
        %s2775 = scalar_lea.vmem [#allocation7], %s2774
        // Predicated region
        $region37: #{tpu_custom_call.1} parent=27 // pred_check
          %p2776 = pneg %p92
        $region38: #{tpu_custom_call.1} parent=27 // pred_check_branch
          %2778 = sbr.rel (%p2776) target = $region40
        $region39: #{tpu_custom_call.1} parent=27 // pred_region
          %s2779 = smul.u32 64, %s22
          %2781 = vsyncadd %s2772, 0
          %s2782 = smul.addr %s2779, 8
          %s2783 = smul.addr %s2782, 8
          %s2784 = scalar_lea.hbm %s2, %s2783
          %s2785 = sshll.u32 %s2775, 4
          %s2786 = int_to_ptr.vmem [resolvable:$true] %s2785
          %s2787 = sshll.u32 %s2784, 4
          %s2788 = int_to_ptr.hbm [resolvable:$true] %s2787
          %2793 = dma.vmem_to_hbm [thread:$0]  %s2786, 65536, %s2788, %s2772, 1024, 1024, 64
        $region40: #{tpu_custom_call.1} parent=27 // pred_fallthru
          _
      $region28: #{tpu_custom_call.1} parent=5 // pred_fallthru
        _
      %p2794 = scmp.le.s32.totalorder 2, %s17
      // Predicated region
      $region41: #{tpu_custom_call.1} parent=5 // pred_check
        %p2795 = pneg %p2794
      $region42: #{tpu_custom_call.1} parent=5 // pred_check_branch
        %2797 = sbr.rel (%p2795) target = $region44
      $region43: #{tpu_custom_call.1} parent=5 // pred_region
        %s2798 = ssub.s32 %s17, 2
        // Predicated region
        $region45: #{tpu_custom_call.1} parent=43 // pred_check
          %p2799 = pneg %p98
        $region46: #{tpu_custom_call.1} parent=43 // pred_check_branch
          %2801 = sbr.rel (%p2799) target = $region48
        $region47: #{tpu_custom_call.1} parent=43 // pred_region
          %s2802 = sand.u32 %s83, 1
          %s2803 = scalar_lea.sflag [#allocation4], %s2802
          %s2804 = sand.u32 %s83, 1
          %s2805 = smul.addr %s2804, 4096
          %s2806 = scalar_lea.vmem [#allocation7], %s2805
          %2808 = dma.done %s2803, 65536
        $region48: #{tpu_custom_call.1} parent=43 // pred_fallthru
          _
      $region44: #{tpu_custom_call.1} parent=5 // pred_fallthru
        _
    $region6: #{tpu_custom_call.1} parent=1 // loop_footer
      %s21 = sadd.s32 1, %s17
    $region7: #{tpu_custom_call.1} parent=1 // loop_footer_branch
      %16 = sbr.rel target = $region3
    $region8: #{tpu_custom_call.1} parent=1 // loop_exit
      _
    %2809 = vsyncpa [#allocation3], 1
    %s2810 = scalar_lea.sflag [#allocation3], 1
    %2811 = vsyncpa %s2810, 1
    %2812 = vsyncpa [#allocation6], 1
    %s2813 = scalar_lea.sflag [#allocation6], 1
    %2814 = vsyncpa %s2813, 1
    %2815 = vsyncpa [#allocation4], 1
    %s2816 = scalar_lea.sflag [#allocation4], 1
    %2817 = vsyncpa %s2816, 1

</llo_original>
